<compile_context>
chip_gen: v5e
topology: v5e:2x2
jax: 0.10.0
libtpu: 0.0.40
codegen_flags: <defaults>
</compile_context>

<pallas_src>
import jax
import jax.numpy as jnp
from jax.experimental import pallas as pl
from jax.experimental.pallas import tpu as pltpu

LN_EPS = 1e-5  # PyTorch nn.LayerNorm default

ENC_DIMS = [3, 256, 128, 64, 32, 16, 8]
DEC_DIMS = [8, 16, 32, 64, 128, 256, 3]

TB_MAX = 2048  # max batch tile: ~2 MiB per 256-wide f32 intermediate


def _round_up(x, m):
    return ((x + m - 1) // m) * m


def _default_ln_mxu_reduce():
    """Offload LN row-sums to the MXU only where the MXU has slack (v6e/v7x)."""
    try:
        kind = jax.devices()[0].device_kind.lower()
    except Exception:
        return True
    return ("v6" in kind) or ("v7" in kind)


# ----------------------------------------------------------------------------
# Fused kernel (whole autoencoder, one grid step = one batch tile)
# ----------------------------------------------------------------------------
def _make_fused_kernel(has_ln_flags, ln_reduce_via_mxu):
    """Builds a kernel that chains all layers; has_ln_flags[i] => ReLU+LN."""
    n_param_refs = sum(4 if f else 2 for f in has_ln_flags)

    def kernel(x_ref, *refs):
        assert len(refs) == n_param_refs + 1
        out_ref = refs[-1]
        prefs = refs[:-1]

        h = x_ref[...].astype(jnp.float32)
        idx = 0
        for has_ln in has_ln_flags:
            w_ref, b_ref = prefs[idx], prefs[idx + 1]
            idx += 2
            # MXU matmul in the weight dtype (bf16-native); f32 accumulation.
            y = jnp.dot(h.astype(w_ref.dtype), w_ref[...],
                        preferred_element_type=jnp.float32)
            y = y + b_ref[...].astype(jnp.float32)
            if has_ln:
                g_ref, beta_ref = prefs[idx], prefs[idx + 1]
                idx += 2
                y = jnp.maximum(y, 0.0)  # ReLU
                d = y.shape[-1]
                inv_d = jnp.float32(1.0 / d)
                if ln_reduce_via_mxu:
                    # Row sums as (tb,D)@(D,1) dots: shifts the 128-lane
                    # cross-lane reductions from the XLU onto the MXU.
                    ones_col = jnp.ones((d, 1), jnp.float32)
                    s = jnp.dot(y, ones_col,
                                preferred_element_type=jnp.float32)
                    ss = jnp.dot(y * y, ones_col,
                                 preferred_element_type=jnp.float32)
                else:
                    s = jnp.sum(y, axis=-1, keepdims=True)
                    ss = jnp.sum(y * y, axis=-1, keepdims=True)
                mean = s * inv_d
                # Clamp: single-pass variance can go slightly negative in f32.
                var = jnp.maximum(ss * inv_d - mean * mean, 0.0)
                inv = jax.lax.rsqrt(var + LN_EPS)      # EUP
                y = (y - mean) * (inv * g_ref[...].astype(jnp.float32)) \
                    + beta_ref[...].astype(jnp.float32)
            h = y
        out_ref[...] = h.astype(out_ref.dtype)

    return kernel


# ----------------------------------------------------------------------------
# Wrapper
# ----------------------------------------------------------------------------
def deep_autoencoder_forward(params, x, tb=None, ln_reduce_via_mxu=None):
    if ln_reduce_via_mxu is None:
        ln_reduce_via_mxu = _default_ln_mxu_reduce()

    layers = list(params["encoder"]) + list(params["decoder"])
    has_ln_flags = tuple(g is not None for (_, _, g, _) in layers)

    flat_params = []
    for (w, b, g, beta) in layers:
        flat_params += [w, b]
        if g is not None:
            flat_params += [g, beta]

    B, in_dim = x.shape
    out_dim = layers[-1][0].shape[1]

    # Batch-tile policy:
    #  * small B: one full-batch tile (block == full array dims, no (8,128)
    #    divisibility issue);
    #  * B > 1024 but <= TB_MAX: split into >=2 tiles (multiple of 256) so the
    #    "parallel" grid axis can shard across v7x's two TensorCores;
    #  * very large B: TB_MAX tiles.
    if tb is None:
        if B <= TB_MAX:
            tb = B
            if B > 1024:
                tb = _round_up(pl.cdiv(B, 2), 256)
        else:
            tb = TB_MAX
    tb = max(1, min(tb, B))
    if tb != B and tb % 8 != 0:
        tb = max(8, (tb // 8) * 8)
    grid = (pl.cdiv(B, tb),)

    # Batch-tiled x/out; weights & LN params stay VMEM-resident (constant map).
    in_specs = [pl.BlockSpec((tb, in_dim), lambda i: (i, 0))]
    in_specs += [pl.BlockSpec(p.shape, lambda i: (0, 0)) for p in flat_params]
    out_spec = pl.BlockSpec((tb, out_dim), lambda i: (i, 0))

    kernel = _make_fused_kernel(has_ln_flags, ln_reduce_via_mxu)
    return pl.pallas_call(
        kernel,
        out_shape=jax.ShapeDtypeStruct((B, out_dim), jnp.float32),
        grid=grid,
        in_specs=in_specs,
        out_specs=out_spec,
        compiler_params=pltpu.CompilerParams(
            dimension_semantics=("parallel",),      # megacore / 2-TC sharding
            vmem_limit_bytes=32 * 1024 * 1024,      # safe on v5e/v6e/v7x
        ),
    )(x, *flat_params)


# ----------------------------------------------------------------------------
# Parameters (PyTorch-Linear-style init)
#  * W stored transposed as (in, out), default bf16 (MXU-native).
#  * bias / gamma / beta stored once as (1, out) rows, always f32.
#  * Use weight_dtype=jnp.float32 for bit-faithful PyTorch f32 semantics.
# ----------------------------------------------------------------------------
def init_params(key, input_dim=3, weight_dtype=jnp.bfloat16):
    enc_dims = [input_dim] + ENC_DIMS[1:]
    dec_dims = DEC_DIMS[:-1] + [input_dim]

    def make_stack(dims, key):
        layers = []
        n = len(dims) - 1
        for i in range(n):
            fan_in, fan_out = dims[i], dims[i + 1]
            key, kw, kb = jax.random.split(key, 3)
            bound = 1.0 / (fan_in ** 0.5)
            w = jax.random.uniform(kw, (fan_in, fan_out), jnp.float32,
                                   -bound, bound).astype(weight_dtype)
            b = jax.random.uniform(kb, (1, fan_out), jnp.float32,
                                   -bound, bound)                 # f32
            has_ln = i < n - 1  # last Linear of each stack: no ReLU/LayerNorm
            if has_ln:
                gamma = jnp.ones((1, fan_out), jnp.float32)       # f32
                beta = jnp.zeros((1, fan_out), jnp.float32)       # f32
                layers.append((w, b, gamma, beta))
            else:
                layers.append((w, b, None, None))
        return layers, key

    enc, key = make_stack(enc_dims, key)
    dec, key = make_stack(dec_dims, key)
    return {"encoder": enc, "decoder": dec}


# Pure-JAX reference (PyTorch semantics: biased variance, eps inside rsqrt).
# Mirrors the kernel's bf16 weight/activation cast so it isolates kernel
# correctness; with weight_dtype=f32 it is exactly the PyTorch f32 forward.
def _reference_forward(params, x):
    h = x.astype(jnp.float32)
    for stack in ("encoder", "decoder"):
        for (w, b, g, beta) in params[stack]:
            hw = h.astype(w.dtype).astype(jnp.float32)
            h = hw @ w.astype(jnp.float32) + b.astype(jnp.float32)
            if g is not None:
                h = jnp.maximum(h, 0.0)
                mean = jnp.mean(h, axis=-1, keepdims=True)
                var = jnp.mean((h - mean) ** 2, axis=-1, keepdims=True)
                h = (h - mean) * jax.lax.rsqrt(var + LN_EPS)
                h = h * g.astype(jnp.float32) + beta.astype(jnp.float32)
    return h


if __name__ == "__main__":
    key = jax.random.PRNGKey(0)
    key, kx = jax.random.split(key)

    batch, input_dim = 16, 3
    x = jax.random.normal(kx, (batch, input_dim), jnp.float32)

    params = init_params(key, input_dim=input_dim)   # bf16 W, f32 b/gamma/beta
    ref = _reference_forward(params, x)

    # tb=8 -> grid=(2,): exercises the batch-tiled, parallel grid path.
    # Check both LN-reduction lowerings (MXU ones-dot and XLU cross-lane sum).
    for mxu_reduce in (True, False):
        out = deep_autoencoder_forward(params, x, tb=8,
                                       ln_reduce_via_mxu=mxu_reduce)
        out = jax.block_until_ready(out)
        assert out.shape == (batch, input_dim), out.shape
        assert jnp.allclose(out, ref, atol=5e-3, rtol=5e-3), \
            f"mismatch vs reference (ln_reduce_via_mxu={mxu_reduce})"

    # Default (auto) path: single full-batch tile, grid=(1,).
    out = jax.block_until_ready(deep_autoencoder_forward(params, x))
    assert jnp.allclose(out, ref, atol=5e-3, rtol=5e-3), "mismatch (auto path)"

    print("KERNEL_OK")
</pallas_src>

<mosaic_0001>
module attributes {stable_mosaic.version = 11 : i64} {
  func.func @kernel(%arg0: i32, %arg1: memref<8x3xf32, #tpu.memory_space<vmem>>, %arg2: memref<3x256xbf16, #tpu.memory_space<vmem>>, %arg3: memref<1x256xf32, #tpu.memory_space<vmem>>, %arg4: memref<1x256xf32, #tpu.memory_space<vmem>>, %arg5: memref<1x256xf32, #tpu.memory_space<vmem>>, %arg6: memref<256x128xbf16, #tpu.memory_space<vmem>>, %arg7: memref<1x128xf32, #tpu.memory_space<vmem>>, %arg8: memref<1x128xf32, #tpu.memory_space<vmem>>, %arg9: memref<1x128xf32, #tpu.memory_space<vmem>>, %arg10: memref<128x64xbf16, #tpu.memory_space<vmem>>, %arg11: memref<1x64xf32, #tpu.memory_space<vmem>>, %arg12: memref<1x64xf32, #tpu.memory_space<vmem>>, %arg13: memref<1x64xf32, #tpu.memory_space<vmem>>, %arg14: memref<64x32xbf16, #tpu.memory_space<vmem>>, %arg15: memref<1x32xf32, #tpu.memory_space<vmem>>, %arg16: memref<1x32xf32, #tpu.memory_space<vmem>>, %arg17: memref<1x32xf32, #tpu.memory_space<vmem>>, %arg18: memref<32x16xbf16, #tpu.memory_space<vmem>>, %arg19: memref<1x16xf32, #tpu.memory_space<vmem>>, %arg20: memref<1x16xf32, #tpu.memory_space<vmem>>, %arg21: memref<1x16xf32, #tpu.memory_space<vmem>>, %arg22: memref<16x8xbf16, #tpu.memory_space<vmem>>, %arg23: memref<1x8xf32, #tpu.memory_space<vmem>>, %arg24: memref<8x16xbf16, #tpu.memory_space<vmem>>, %arg25: memref<1x16xf32, #tpu.memory_space<vmem>>, %arg26: memref<1x16xf32, #tpu.memory_space<vmem>>, %arg27: memref<1x16xf32, #tpu.memory_space<vmem>>, %arg28: memref<16x32xbf16, #tpu.memory_space<vmem>>, %arg29: memref<1x32xf32, #tpu.memory_space<vmem>>, %arg30: memref<1x32xf32, #tpu.memory_space<vmem>>, %arg31: memref<1x32xf32, #tpu.memory_space<vmem>>, %arg32: memref<32x64xbf16, #tpu.memory_space<vmem>>, %arg33: memref<1x64xf32, #tpu.memory_space<vmem>>, %arg34: memref<1x64xf32, #tpu.memory_space<vmem>>, %arg35: memref<1x64xf32, #tpu.memory_space<vmem>>, %arg36: memref<64x128xbf16, #tpu.memory_space<vmem>>, %arg37: memref<1x128xf32, #tpu.memory_space<vmem>>, %arg38: memref<1x128xf32, #tpu.memory_space<vmem>>, %arg39: memref<1x128xf32, #tpu.memory_space<vmem>>, %arg40: memref<128x256xbf16, #tpu.memory_space<vmem>>, %arg41: memref<1x256xf32, #tpu.memory_space<vmem>>, %arg42: memref<1x256xf32, #tpu.memory_space<vmem>>, %arg43: memref<1x256xf32, #tpu.memory_space<vmem>>, %arg44: memref<256x3xbf16, #tpu.memory_space<vmem>>, %arg45: memref<1x3xf32, #tpu.memory_space<vmem>>, %arg46: memref<8x3xf32, #tpu.memory_space<vmem>>) attributes {dimension_semantics = [#tpu.dimension_semantics<parallel>], iteration_bounds = array<i64: 2>, scalar_prefetch = 0 : i64, scratch_operands = 0 : i64, tpu.core_type = #tpu.core_type<tc>, window_params = [{transform_indices = @transform_0, window_bounds = array<i64: 8, 3>}, {pipeline_mode = #tpu.pipeline_mode<synchronous>, transform_indices = @transform_1, window_bounds = array<i64: 3, 256>}, {pipeline_mode = #tpu.pipeline_mode<synchronous>, transform_indices = @transform_2, window_bounds = array<i64: 1, 256>}, {pipeline_mode = #tpu.pipeline_mode<synchronous>, transform_indices = @transform_3, window_bounds = array<i64: 1, 256>}, {pipeline_mode = #tpu.pipeline_mode<synchronous>, transform_indices = @transform_4, window_bounds = array<i64: 1, 256>}, {pipeline_mode = #tpu.pipeline_mode<synchronous>, transform_indices = @transform_5, window_bounds = array<i64: 256, 128>}, {pipeline_mode = #tpu.pipeline_mode<synchronous>, transform_indices = @transform_6, window_bounds = array<i64: 1, 128>}, {pipeline_mode = #tpu.pipeline_mode<synchronous>, transform_indices = @transform_7, window_bounds = array<i64: 1, 128>}, {pipeline_mode = #tpu.pipeline_mode<synchronous>, transform_indices = @transform_8, window_bounds = array<i64: 1, 128>}, {pipeline_mode = #tpu.pipeline_mode<synchronous>, transform_indices = @transform_9, window_bounds = array<i64: 128, 64>}, {pipeline_mode = #tpu.pipeline_mode<synchronous>, transform_indices = @transform_10, window_bounds = array<i64: 1, 64>}, {pipeline_mode = #tpu.pipeline_mode<synchronous>, transform_indices = @transform_11, window_bounds = array<i64: 1, 64>}, {pipeline_mode = #tpu.pipeline_mode<synchronous>, transform_indices = @transform_12, window_bounds = array<i64: 1, 64>}, {pipeline_mode = #tpu.pipeline_mode<synchronous>, transform_indices = @transform_13, window_bounds = array<i64: 64, 32>}, {pipeline_mode = #tpu.pipeline_mode<synchronous>, transform_indices = @transform_14, window_bounds = array<i64: 1, 32>}, {pipeline_mode = #tpu.pipeline_mode<synchronous>, transform_indices = @transform_15, window_bounds = array<i64: 1, 32>}, {pipeline_mode = #tpu.pipeline_mode<synchronous>, transform_indices = @transform_16, window_bounds = array<i64: 1, 32>}, {pipeline_mode = #tpu.pipeline_mode<synchronous>, transform_indices = @transform_17, window_bounds = array<i64: 32, 16>}, {pipeline_mode = #tpu.pipeline_mode<synchronous>, transform_indices = @transform_18, window_bounds = array<i64: 1, 16>}, {pipeline_mode = #tpu.pipeline_mode<synchronous>, transform_indices = @transform_19, window_bounds = array<i64: 1, 16>}, {pipeline_mode = #tpu.pipeline_mode<synchronous>, transform_indices = @transform_20, window_bounds = array<i64: 1, 16>}, {pipeline_mode = #tpu.pipeline_mode<synchronous>, transform_indices = @transform_21, window_bounds = array<i64: 16, 8>}, {pipeline_mode = #tpu.pipeline_mode<synchronous>, transform_indices = @transform_22, window_bounds = array<i64: 1, 8>}, {pipeline_mode = #tpu.pipeline_mode<synchronous>, transform_indices = @transform_23, window_bounds = array<i64: 8, 16>}, {pipeline_mode = #tpu.pipeline_mode<synchronous>, transform_indices = @transform_24, window_bounds = array<i64: 1, 16>}, {pipeline_mode = #tpu.pipeline_mode<synchronous>, transform_indices = @transform_25, window_bounds = array<i64: 1, 16>}, {pipeline_mode = #tpu.pipeline_mode<synchronous>, transform_indices = @transform_26, window_bounds = array<i64: 1, 16>}, {pipeline_mode = #tpu.pipeline_mode<synchronous>, transform_indices = @transform_27, window_bounds = array<i64: 16, 32>}, {pipeline_mode = #tpu.pipeline_mode<synchronous>, transform_indices = @transform_28, window_bounds = array<i64: 1, 32>}, {pipeline_mode = #tpu.pipeline_mode<synchronous>, transform_indices = @transform_29, window_bounds = array<i64: 1, 32>}, {pipeline_mode = #tpu.pipeline_mode<synchronous>, transform_indices = @transform_30, window_bounds = array<i64: 1, 32>}, {pipeline_mode = #tpu.pipeline_mode<synchronous>, transform_indices = @transform_31, window_bounds = array<i64: 32, 64>}, {pipeline_mode = #tpu.pipeline_mode<synchronous>, transform_indices = @transform_32, window_bounds = array<i64: 1, 64>}, {pipeline_mode = #tpu.pipeline_mode<synchronous>, transform_indices = @transform_33, window_bounds = array<i64: 1, 64>}, {pipeline_mode = #tpu.pipeline_mode<synchronous>, transform_indices = @transform_34, window_bounds = array<i64: 1, 64>}, {pipeline_mode = #tpu.pipeline_mode<synchronous>, transform_indices = @transform_35, window_bounds = array<i64: 64, 128>}, {pipeline_mode = #tpu.pipeline_mode<synchronous>, transform_indices = @transform_36, window_bounds = array<i64: 1, 128>}, {pipeline_mode = #tpu.pipeline_mode<synchronous>, transform_indices = @transform_37, window_bounds = array<i64: 1, 128>}, {pipeline_mode = #tpu.pipeline_mode<synchronous>, transform_indices = @transform_38, window_bounds = array<i64: 1, 128>}, {pipeline_mode = #tpu.pipeline_mode<synchronous>, transform_indices = @transform_39, window_bounds = array<i64: 128, 256>}, {pipeline_mode = #tpu.pipeline_mode<synchronous>, transform_indices = @transform_40, window_bounds = array<i64: 1, 256>}, {pipeline_mode = #tpu.pipeline_mode<synchronous>, transform_indices = @transform_41, window_bounds = array<i64: 1, 256>}, {pipeline_mode = #tpu.pipeline_mode<synchronous>, transform_indices = @transform_42, window_bounds = array<i64: 1, 256>}, {pipeline_mode = #tpu.pipeline_mode<synchronous>, transform_indices = @transform_43, window_bounds = array<i64: 256, 3>}, {pipeline_mode = #tpu.pipeline_mode<synchronous>, transform_indices = @transform_44, window_bounds = array<i64: 1, 3>}, {transform_indices = @transform_45, window_bounds = array<i64: 8, 3>}]} {
    %c0 = arith.constant 0 : index
    %c0_0 = arith.constant 0 : index
    %0 = vector.load %arg1[%c0, %c0_0] : memref<8x3xf32, #tpu.memory_space<vmem>>, vector<8x3xf32>
    %1 = arith.truncf %0 : vector<8x3xf32> to vector<8x3xbf16>
    %c0_1 = arith.constant 0 : index
    %c0_2 = arith.constant 0 : index
    %2 = vector.load %arg2[%c0_1, %c0_2] : memref<3x256xbf16, #tpu.memory_space<vmem>>, vector<3x256xbf16>
    %cst = arith.constant dense<0.000000e+00> : vector<8x256xf32>
    %3 = tpu.matmul %1, %2, %cst {dimension_numbers = #tpu.dot_dimension_numbers<[1], [0], [0], [1], [0, 0, 1, 1], [], []>} : vector<8x3xbf16>, vector<3x256xbf16>, vector<8x256xf32> -> vector<8x256xf32>
    %c0_3 = arith.constant 0 : index
    %c0_4 = arith.constant 0 : index
    %4 = vector.load %arg3[%c0_3, %c0_4] : memref<1x256xf32, #tpu.memory_space<vmem>>, vector<1x256xf32>
    %5 = vector.broadcast %4 : vector<1x256xf32> to vector<8x256xf32>
    %6 = arith.addf %3, %5 : vector<8x256xf32>
    %cst_5 = arith.constant 0.000000e+00 : f32
    %7 = vector.broadcast %cst_5 : f32 to vector<8x256xf32>
    %8 = arith.maximumf %6, %7 : vector<8x256xf32>
    %cst_6 = arith.constant 1.000000e+00 : f32
    %9 = vector.broadcast %cst_6 : f32 to vector<256x1xf32>
    %cst_7 = arith.constant dense<0.000000e+00> : vector<8x1xf32>
    %10 = tpu.matmul %8, %9, %cst_7 {dimension_numbers = #tpu.dot_dimension_numbers<[1], [0], [0], [1], [0, 0, 1, 1], [], []>} : vector<8x256xf32>, vector<256x1xf32>, vector<8x1xf32> -> vector<8x1xf32>
    %11 = arith.mulf %8, %8 : vector<8x256xf32>
    %cst_8 = arith.constant dense<0.000000e+00> : vector<8x1xf32>
    %12 = tpu.matmul %11, %9, %cst_8 {dimension_numbers = #tpu.dot_dimension_numbers<[1], [0], [0], [1], [0, 0, 1, 1], [], []>} : vector<8x256xf32>, vector<256x1xf32>, vector<8x1xf32> -> vector<8x1xf32>
    %cst_9 = arith.constant 3.906250e-03 : f32
    %13 = vector.broadcast %cst_9 : f32 to vector<8x1xf32>
    %14 = arith.mulf %10, %13 : vector<8x1xf32>
    %cst_10 = arith.constant 3.906250e-03 : f32
    %15 = vector.broadcast %cst_10 : f32 to vector<8x1xf32>
    %16 = arith.mulf %12, %15 : vector<8x1xf32>
    %17 = arith.mulf %14, %14 : vector<8x1xf32>
    %18 = arith.subf %16, %17 : vector<8x1xf32>
    %cst_11 = arith.constant 0.000000e+00 : f32
    %19 = vector.broadcast %cst_11 : f32 to vector<8x1xf32>
    %20 = arith.maximumf %18, %19 : vector<8x1xf32>
    %cst_12 = arith.constant 9.99999974E-6 : f32
    %21 = vector.broadcast %cst_12 : f32 to vector<8x1xf32>
    %22 = arith.addf %20, %21 : vector<8x1xf32>
    %23 = math.rsqrt %22 : vector<8x1xf32>
    %24 = vector.broadcast %14 : vector<8x1xf32> to vector<8x256xf32>
    %25 = arith.subf %8, %24 : vector<8x256xf32>
    %c0_13 = arith.constant 0 : index
    %c0_14 = arith.constant 0 : index
    %26 = vector.load %arg4[%c0_13, %c0_14] : memref<1x256xf32, #tpu.memory_space<vmem>>, vector<1x256xf32>
    %27 = vector.broadcast %23 : vector<8x1xf32> to vector<8x256xf32>
    %28 = vector.broadcast %26 : vector<1x256xf32> to vector<8x256xf32>
    %29 = arith.mulf %27, %28 : vector<8x256xf32>
    %30 = arith.mulf %25, %29 : vector<8x256xf32>
    %c0_15 = arith.constant 0 : index
    %c0_16 = arith.constant 0 : index
    %31 = vector.load %arg5[%c0_15, %c0_16] : memref<1x256xf32, #tpu.memory_space<vmem>>, vector<1x256xf32>
    %32 = vector.broadcast %31 : vector<1x256xf32> to vector<8x256xf32>
    %33 = arith.addf %30, %32 : vector<8x256xf32>
    %34 = arith.truncf %33 : vector<8x256xf32> to vector<8x256xbf16>
    %c0_17 = arith.constant 0 : index
    %c0_18 = arith.constant 0 : index
    %35 = vector.load %arg6[%c0_17, %c0_18] : memref<256x128xbf16, #tpu.memory_space<vmem>>, vector<256x128xbf16>
    %cst_19 = arith.constant dense<0.000000e+00> : vector<8x128xf32>
    %36 = tpu.matmul %34, %35, %cst_19 {dimension_numbers = #tpu.dot_dimension_numbers<[1], [0], [0], [1], [0, 0, 1, 1], [], []>} : vector<8x256xbf16>, vector<256x128xbf16>, vector<8x128xf32> -> vector<8x128xf32>
    %c0_20 = arith.constant 0 : index
    %c0_21 = arith.constant 0 : index
    %37 = vector.load %arg7[%c0_20, %c0_21] : memref<1x128xf32, #tpu.memory_space<vmem>>, vector<1x128xf32>
    %38 = vector.broadcast %37 : vector<1x128xf32> to vector<8x128xf32>
    %39 = arith.addf %36, %38 : vector<8x128xf32>
    %cst_22 = arith.constant 0.000000e+00 : f32
    %40 = vector.broadcast %cst_22 : f32 to vector<8x128xf32>
    %41 = arith.maximumf %39, %40 : vector<8x128xf32>
    %cst_23 = arith.constant 1.000000e+00 : f32
    %42 = vector.broadcast %cst_23 : f32 to vector<128x1xf32>
    %cst_24 = arith.constant dense<0.000000e+00> : vector<8x1xf32>
    %43 = tpu.matmul %41, %42, %cst_24 {dimension_numbers = #tpu.dot_dimension_numbers<[1], [0], [0], [1], [0, 0, 1, 1], [], []>} : vector<8x128xf32>, vector<128x1xf32>, vector<8x1xf32> -> vector<8x1xf32>
    %44 = arith.mulf %41, %41 : vector<8x128xf32>
    %cst_25 = arith.constant dense<0.000000e+00> : vector<8x1xf32>
    %45 = tpu.matmul %44, %42, %cst_25 {dimension_numbers = #tpu.dot_dimension_numbers<[1], [0], [0], [1], [0, 0, 1, 1], [], []>} : vector<8x128xf32>, vector<128x1xf32>, vector<8x1xf32> -> vector<8x1xf32>
    %cst_26 = arith.constant 7.812500e-03 : f32
    %46 = vector.broadcast %cst_26 : f32 to vector<8x1xf32>
    %47 = arith.mulf %43, %46 : vector<8x1xf32>
    %cst_27 = arith.constant 7.812500e-03 : f32
    %48 = vector.broadcast %cst_27 : f32 to vector<8x1xf32>
    %49 = arith.mulf %45, %48 : vector<8x1xf32>
    %50 = arith.mulf %47, %47 : vector<8x1xf32>
    %51 = arith.subf %49, %50 : vector<8x1xf32>
    %cst_28 = arith.constant 0.000000e+00 : f32
    %52 = vector.broadcast %cst_28 : f32 to vector<8x1xf32>
    %53 = arith.maximumf %51, %52 : vector<8x1xf32>
    %cst_29 = arith.constant 9.99999974E-6 : f32
    %54 = vector.broadcast %cst_29 : f32 to vector<8x1xf32>
    %55 = arith.addf %53, %54 : vector<8x1xf32>
    %56 = math.rsqrt %55 : vector<8x1xf32>
    %57 = vector.broadcast %47 : vector<8x1xf32> to vector<8x128xf32>
    %58 = arith.subf %41, %57 : vector<8x128xf32>
    %c0_30 = arith.constant 0 : index
    %c0_31 = arith.constant 0 : index
    %59 = vector.load %arg8[%c0_30, %c0_31] : memref<1x128xf32, #tpu.memory_space<vmem>>, vector<1x128xf32>
    %60 = vector.broadcast %56 : vector<8x1xf32> to vector<8x128xf32>
    %61 = vector.broadcast %59 : vector<1x128xf32> to vector<8x128xf32>
    %62 = arith.mulf %60, %61 : vector<8x128xf32>
    %63 = arith.mulf %58, %62 : vector<8x128xf32>
    %c0_32 = arith.constant 0 : index
    %c0_33 = arith.constant 0 : index
    %64 = vector.load %arg9[%c0_32, %c0_33] : memref<1x128xf32, #tpu.memory_space<vmem>>, vector<1x128xf32>
    %65 = vector.broadcast %64 : vector<1x128xf32> to vector<8x128xf32>
    %66 = arith.addf %63, %65 : vector<8x128xf32>
    %67 = arith.truncf %66 : vector<8x128xf32> to vector<8x128xbf16>
    %c0_34 = arith.constant 0 : index
    %c0_35 = arith.constant 0 : index
    %68 = vector.load %arg10[%c0_34, %c0_35] : memref<128x64xbf16, #tpu.memory_space<vmem>>, vector<128x64xbf16>
    %cst_36 = arith.constant dense<0.000000e+00> : vector<8x64xf32>
    %69 = tpu.matmul %67, %68, %cst_36 {dimension_numbers = #tpu.dot_dimension_numbers<[1], [0], [0], [1], [0, 0, 1, 1], [], []>} : vector<8x128xbf16>, vector<128x64xbf16>, vector<8x64xf32> -> vector<8x64xf32>
    %c0_37 = arith.constant 0 : index
    %c0_38 = arith.constant 0 : index
    %70 = vector.load %arg11[%c0_37, %c0_38] : memref<1x64xf32, #tpu.memory_space<vmem>>, vector<1x64xf32>
    %71 = vector.broadcast %70 : vector<1x64xf32> to vector<8x64xf32>
    %72 = arith.addf %69, %71 : vector<8x64xf32>
    %cst_39 = arith.constant 0.000000e+00 : f32
    %73 = vector.broadcast %cst_39 : f32 to vector<8x64xf32>
    %74 = arith.maximumf %72, %73 : vector<8x64xf32>
    %cst_40 = arith.constant 1.000000e+00 : f32
    %75 = vector.broadcast %cst_40 : f32 to vector<64x1xf32>
    %cst_41 = arith.constant dense<0.000000e+00> : vector<8x1xf32>
    %76 = tpu.matmul %74, %75, %cst_41 {dimension_numbers = #tpu.dot_dimension_numbers<[1], [0], [0], [1], [0, 0, 1, 1], [], []>} : vector<8x64xf32>, vector<64x1xf32>, vector<8x1xf32> -> vector<8x1xf32>
    %77 = arith.mulf %74, %74 : vector<8x64xf32>
    %cst_42 = arith.constant dense<0.000000e+00> : vector<8x1xf32>
    %78 = tpu.matmul %77, %75, %cst_42 {dimension_numbers = #tpu.dot_dimension_numbers<[1], [0], [0], [1], [0, 0, 1, 1], [], []>} : vector<8x64xf32>, vector<64x1xf32>, vector<8x1xf32> -> vector<8x1xf32>
    %cst_43 = arith.constant 1.562500e-02 : f32
    %79 = vector.broadcast %cst_43 : f32 to vector<8x1xf32>
    %80 = arith.mulf %76, %79 : vector<8x1xf32>
    %cst_44 = arith.constant 1.562500e-02 : f32
    %81 = vector.broadcast %cst_44 : f32 to vector<8x1xf32>
    %82 = arith.mulf %78, %81 : vector<8x1xf32>
    %83 = arith.mulf %80, %80 : vector<8x1xf32>
    %84 = arith.subf %82, %83 : vector<8x1xf32>
    %cst_45 = arith.constant 0.000000e+00 : f32
    %85 = vector.broadcast %cst_45 : f32 to vector<8x1xf32>
    %86 = arith.maximumf %84, %85 : vector<8x1xf32>
    %cst_46 = arith.constant 9.99999974E-6 : f32
    %87 = vector.broadcast %cst_46 : f32 to vector<8x1xf32>
    %88 = arith.addf %86, %87 : vector<8x1xf32>
    %89 = math.rsqrt %88 : vector<8x1xf32>
    %90 = vector.broadcast %80 : vector<8x1xf32> to vector<8x64xf32>
    %91 = arith.subf %74, %90 : vector<8x64xf32>
    %c0_47 = arith.constant 0 : index
    %c0_48 = arith.constant 0 : index
    %92 = vector.load %arg12[%c0_47, %c0_48] : memref<1x64xf32, #tpu.memory_space<vmem>>, vector<1x64xf32>
    %93 = vector.broadcast %89 : vector<8x1xf32> to vector<8x64xf32>
    %94 = vector.broadcast %92 : vector<1x64xf32> to vector<8x64xf32>
    %95 = arith.mulf %93, %94 : vector<8x64xf32>
    %96 = arith.mulf %91, %95 : vector<8x64xf32>
    %c0_49 = arith.constant 0 : index
    %c0_50 = arith.constant 0 : index
    %97 = vector.load %arg13[%c0_49, %c0_50] : memref<1x64xf32, #tpu.memory_space<vmem>>, vector<1x64xf32>
    %98 = vector.broadcast %97 : vector<1x64xf32> to vector<8x64xf32>
    %99 = arith.addf %96, %98 : vector<8x64xf32>
    %100 = arith.truncf %99 : vector<8x64xf32> to vector<8x64xbf16>
    %c0_51 = arith.constant 0 : index
    %c0_52 = arith.constant 0 : index
    %101 = vector.load %arg14[%c0_51, %c0_52] : memref<64x32xbf16, #tpu.memory_space<vmem>>, vector<64x32xbf16>
    %cst_53 = arith.constant dense<0.000000e+00> : vector<8x32xf32>
    %102 = tpu.matmul %100, %101, %cst_53 {dimension_numbers = #tpu.dot_dimension_numbers<[1], [0], [0], [1], [0, 0, 1, 1], [], []>} : vector<8x64xbf16>, vector<64x32xbf16>, vector<8x32xf32> -> vector<8x32xf32>
    %c0_54 = arith.constant 0 : index
    %c0_55 = arith.constant 0 : index
    %103 = vector.load %arg15[%c0_54, %c0_55] : memref<1x32xf32, #tpu.memory_space<vmem>>, vector<1x32xf32>
    %104 = vector.broadcast %103 : vector<1x32xf32> to vector<8x32xf32>
    %105 = arith.addf %102, %104 : vector<8x32xf32>
    %cst_56 = arith.constant 0.000000e+00 : f32
    %106 = vector.broadcast %cst_56 : f32 to vector<8x32xf32>
    %107 = arith.maximumf %105, %106 : vector<8x32xf32>
    %cst_57 = arith.constant 1.000000e+00 : f32
    %108 = vector.broadcast %cst_57 : f32 to vector<32x1xf32>
    %cst_58 = arith.constant dense<0.000000e+00> : vector<8x1xf32>
    %109 = tpu.matmul %107, %108, %cst_58 {dimension_numbers = #tpu.dot_dimension_numbers<[1], [0], [0], [1], [0, 0, 1, 1], [], []>} : vector<8x32xf32>, vector<32x1xf32>, vector<8x1xf32> -> vector<8x1xf32>
    %110 = arith.mulf %107, %107 : vector<8x32xf32>
    %cst_59 = arith.constant dense<0.000000e+00> : vector<8x1xf32>
    %111 = tpu.matmul %110, %108, %cst_59 {dimension_numbers = #tpu.dot_dimension_numbers<[1], [0], [0], [1], [0, 0, 1, 1], [], []>} : vector<8x32xf32>, vector<32x1xf32>, vector<8x1xf32> -> vector<8x1xf32>
    %cst_60 = arith.constant 3.125000e-02 : f32
    %112 = vector.broadcast %cst_60 : f32 to vector<8x1xf32>
    %113 = arith.mulf %109, %112 : vector<8x1xf32>
    %cst_61 = arith.constant 3.125000e-02 : f32
    %114 = vector.broadcast %cst_61 : f32 to vector<8x1xf32>
    %115 = arith.mulf %111, %114 : vector<8x1xf32>
    %116 = arith.mulf %113, %113 : vector<8x1xf32>
    %117 = arith.subf %115, %116 : vector<8x1xf32>
    %cst_62 = arith.constant 0.000000e+00 : f32
    %118 = vector.broadcast %cst_62 : f32 to vector<8x1xf32>
    %119 = arith.maximumf %117, %118 : vector<8x1xf32>
    %cst_63 = arith.constant 9.99999974E-6 : f32
    %120 = vector.broadcast %cst_63 : f32 to vector<8x1xf32>
    %121 = arith.addf %119, %120 : vector<8x1xf32>
    %122 = math.rsqrt %121 : vector<8x1xf32>
    %123 = vector.broadcast %113 : vector<8x1xf32> to vector<8x32xf32>
    %124 = arith.subf %107, %123 : vector<8x32xf32>
    %c0_64 = arith.constant 0 : index
    %c0_65 = arith.constant 0 : index
    %125 = vector.load %arg16[%c0_64, %c0_65] : memref<1x32xf32, #tpu.memory_space<vmem>>, vector<1x32xf32>
    %126 = vector.broadcast %122 : vector<8x1xf32> to vector<8x32xf32>
    %127 = vector.broadcast %125 : vector<1x32xf32> to vector<8x32xf32>
    %128 = arith.mulf %126, %127 : vector<8x32xf32>
    %129 = arith.mulf %124, %128 : vector<8x32xf32>
    %c0_66 = arith.constant 0 : index
    %c0_67 = arith.constant 0 : index
    %130 = vector.load %arg17[%c0_66, %c0_67] : memref<1x32xf32, #tpu.memory_space<vmem>>, vector<1x32xf32>
    %131 = vector.broadcast %130 : vector<1x32xf32> to vector<8x32xf32>
    %132 = arith.addf %129, %131 : vector<8x32xf32>
    %133 = arith.truncf %132 : vector<8x32xf32> to vector<8x32xbf16>
    %c0_68 = arith.constant 0 : index
    %c0_69 = arith.constant 0 : index
    %134 = vector.load %arg18[%c0_68, %c0_69] : memref<32x16xbf16, #tpu.memory_space<vmem>>, vector<32x16xbf16>
    %cst_70 = arith.constant dense<0.000000e+00> : vector<8x16xf32>
    %135 = tpu.matmul %133, %134, %cst_70 {dimension_numbers = #tpu.dot_dimension_numbers<[1], [0], [0], [1], [0, 0, 1, 1], [], []>} : vector<8x32xbf16>, vector<32x16xbf16>, vector<8x16xf32> -> vector<8x16xf32>
    %c0_71 = arith.constant 0 : index
    %c0_72 = arith.constant 0 : index
    %136 = vector.load %arg19[%c0_71, %c0_72] : memref<1x16xf32, #tpu.memory_space<vmem>>, vector<1x16xf32>
    %137 = vector.broadcast %136 : vector<1x16xf32> to vector<8x16xf32>
    %138 = arith.addf %135, %137 : vector<8x16xf32>
    %cst_73 = arith.constant 0.000000e+00 : f32
    %139 = vector.broadcast %cst_73 : f32 to vector<8x16xf32>
    %140 = arith.maximumf %138, %139 : vector<8x16xf32>
    %cst_74 = arith.constant 1.000000e+00 : f32
    %141 = vector.broadcast %cst_74 : f32 to vector<16x1xf32>
    %cst_75 = arith.constant dense<0.000000e+00> : vector<8x1xf32>
    %142 = tpu.matmul %140, %141, %cst_75 {dimension_numbers = #tpu.dot_dimension_numbers<[1], [0], [0], [1], [0, 0, 1, 1], [], []>} : vector<8x16xf32>, vector<16x1xf32>, vector<8x1xf32> -> vector<8x1xf32>
    %143 = arith.mulf %140, %140 : vector<8x16xf32>
    %cst_76 = arith.constant dense<0.000000e+00> : vector<8x1xf32>
    %144 = tpu.matmul %143, %141, %cst_76 {dimension_numbers = #tpu.dot_dimension_numbers<[1], [0], [0], [1], [0, 0, 1, 1], [], []>} : vector<8x16xf32>, vector<16x1xf32>, vector<8x1xf32> -> vector<8x1xf32>
    %cst_77 = arith.constant 6.250000e-02 : f32
    %145 = vector.broadcast %cst_77 : f32 to vector<8x1xf32>
    %146 = arith.mulf %142, %145 : vector<8x1xf32>
    %cst_78 = arith.constant 6.250000e-02 : f32
    %147 = vector.broadcast %cst_78 : f32 to vector<8x1xf32>
    %148 = arith.mulf %144, %147 : vector<8x1xf32>
    %149 = arith.mulf %146, %146 : vector<8x1xf32>
    %150 = arith.subf %148, %149 : vector<8x1xf32>
    %cst_79 = arith.constant 0.000000e+00 : f32
    %151 = vector.broadcast %cst_79 : f32 to vector<8x1xf32>
    %152 = arith.maximumf %150, %151 : vector<8x1xf32>
    %cst_80 = arith.constant 9.99999974E-6 : f32
    %153 = vector.broadcast %cst_80 : f32 to vector<8x1xf32>
    %154 = arith.addf %152, %153 : vector<8x1xf32>
    %155 = math.rsqrt %154 : vector<8x1xf32>
    %156 = vector.broadcast %146 : vector<8x1xf32> to vector<8x16xf32>
    %157 = arith.subf %140, %156 : vector<8x16xf32>
    %c0_81 = arith.constant 0 : index
    %c0_82 = arith.constant 0 : index
    %158 = vector.load %arg20[%c0_81, %c0_82] : memref<1x16xf32, #tpu.memory_space<vmem>>, vector<1x16xf32>
    %159 = vector.broadcast %155 : vector<8x1xf32> to vector<8x16xf32>
    %160 = vector.broadcast %158 : vector<1x16xf32> to vector<8x16xf32>
    %161 = arith.mulf %159, %160 : vector<8x16xf32>
    %162 = arith.mulf %157, %161 : vector<8x16xf32>
    %c0_83 = arith.constant 0 : index
    %c0_84 = arith.constant 0 : index
    %163 = vector.load %arg21[%c0_83, %c0_84] : memref<1x16xf32, #tpu.memory_space<vmem>>, vector<1x16xf32>
    %164 = vector.broadcast %163 : vector<1x16xf32> to vector<8x16xf32>
    %165 = arith.addf %162, %164 : vector<8x16xf32>
    %166 = arith.truncf %165 : vector<8x16xf32> to vector<8x16xbf16>
    %c0_85 = arith.constant 0 : index
    %c0_86 = arith.constant 0 : index
    %167 = vector.load %arg22[%c0_85, %c0_86] : memref<16x8xbf16, #tpu.memory_space<vmem>>, vector<16x8xbf16>
    %cst_87 = arith.constant dense<0.000000e+00> : vector<8x8xf32>
    %168 = tpu.matmul %166, %167, %cst_87 {dimension_numbers = #tpu.dot_dimension_numbers<[1], [0], [0], [1], [0, 0, 1, 1], [], []>} : vector<8x16xbf16>, vector<16x8xbf16>, vector<8x8xf32> -> vector<8x8xf32>
    %c0_88 = arith.constant 0 : index
    %c0_89 = arith.constant 0 : index
    %169 = vector.load %arg23[%c0_88, %c0_89] : memref<1x8xf32, #tpu.memory_space<vmem>>, vector<1x8xf32>
    %170 = vector.broadcast %169 : vector<1x8xf32> to vector<8x8xf32>
    %171 = arith.addf %168, %170 : vector<8x8xf32>
    %172 = arith.truncf %171 : vector<8x8xf32> to vector<8x8xbf16>
    %c0_90 = arith.constant 0 : index
    %c0_91 = arith.constant 0 : index
    %173 = vector.load %arg24[%c0_90, %c0_91] : memref<8x16xbf16, #tpu.memory_space<vmem>>, vector<8x16xbf16>
    %cst_92 = arith.constant dense<0.000000e+00> : vector<8x16xf32>
    %174 = tpu.matmul %172, %173, %cst_92 {dimension_numbers = #tpu.dot_dimension_numbers<[1], [0], [0], [1], [0, 0, 1, 1], [], []>} : vector<8x8xbf16>, vector<8x16xbf16>, vector<8x16xf32> -> vector<8x16xf32>
    %c0_93 = arith.constant 0 : index
    %c0_94 = arith.constant 0 : index
    %175 = vector.load %arg25[%c0_93, %c0_94] : memref<1x16xf32, #tpu.memory_space<vmem>>, vector<1x16xf32>
    %176 = vector.broadcast %175 : vector<1x16xf32> to vector<8x16xf32>
    %177 = arith.addf %174, %176 : vector<8x16xf32>
    %cst_95 = arith.constant 0.000000e+00 : f32
    %178 = vector.broadcast %cst_95 : f32 to vector<8x16xf32>
    %179 = arith.maximumf %177, %178 : vector<8x16xf32>
    %cst_96 = arith.constant 1.000000e+00 : f32
    %180 = vector.broadcast %cst_96 : f32 to vector<16x1xf32>
    %cst_97 = arith.constant dense<0.000000e+00> : vector<8x1xf32>
    %181 = tpu.matmul %179, %180, %cst_97 {dimension_numbers = #tpu.dot_dimension_numbers<[1], [0], [0], [1], [0, 0, 1, 1], [], []>} : vector<8x16xf32>, vector<16x1xf32>, vector<8x1xf32> -> vector<8x1xf32>
    %182 = arith.mulf %179, %179 : vector<8x16xf32>
    %cst_98 = arith.constant dense<0.000000e+00> : vector<8x1xf32>
    %183 = tpu.matmul %182, %180, %cst_98 {dimension_numbers = #tpu.dot_dimension_numbers<[1], [0], [0], [1], [0, 0, 1, 1], [], []>} : vector<8x16xf32>, vector<16x1xf32>, vector<8x1xf32> -> vector<8x1xf32>
    %cst_99 = arith.constant 6.250000e-02 : f32
    %184 = vector.broadcast %cst_99 : f32 to vector<8x1xf32>
    %185 = arith.mulf %181, %184 : vector<8x1xf32>
    %cst_100 = arith.constant 6.250000e-02 : f32
    %186 = vector.broadcast %cst_100 : f32 to vector<8x1xf32>
    %187 = arith.mulf %183, %186 : vector<8x1xf32>
    %188 = arith.mulf %185, %185 : vector<8x1xf32>
    %189 = arith.subf %187, %188 : vector<8x1xf32>
    %cst_101 = arith.constant 0.000000e+00 : f32
    %190 = vector.broadcast %cst_101 : f32 to vector<8x1xf32>
    %191 = arith.maximumf %189, %190 : vector<8x1xf32>
    %cst_102 = arith.constant 9.99999974E-6 : f32
    %192 = vector.broadcast %cst_102 : f32 to vector<8x1xf32>
    %193 = arith.addf %191, %192 : vector<8x1xf32>
    %194 = math.rsqrt %193 : vector<8x1xf32>
    %195 = vector.broadcast %185 : vector<8x1xf32> to vector<8x16xf32>
    %196 = arith.subf %179, %195 : vector<8x16xf32>
    %c0_103 = arith.constant 0 : index
    %c0_104 = arith.constant 0 : index
    %197 = vector.load %arg26[%c0_103, %c0_104] : memref<1x16xf32, #tpu.memory_space<vmem>>, vector<1x16xf32>
    %198 = vector.broadcast %194 : vector<8x1xf32> to vector<8x16xf32>
    %199 = vector.broadcast %197 : vector<1x16xf32> to vector<8x16xf32>
    %200 = arith.mulf %198, %199 : vector<8x16xf32>
    %201 = arith.mulf %196, %200 : vector<8x16xf32>
    %c0_105 = arith.constant 0 : index
    %c0_106 = arith.constant 0 : index
    %202 = vector.load %arg27[%c0_105, %c0_106] : memref<1x16xf32, #tpu.memory_space<vmem>>, vector<1x16xf32>
    %203 = vector.broadcast %202 : vector<1x16xf32> to vector<8x16xf32>
    %204 = arith.addf %201, %203 : vector<8x16xf32>
    %205 = arith.truncf %204 : vector<8x16xf32> to vector<8x16xbf16>
    %c0_107 = arith.constant 0 : index
    %c0_108 = arith.constant 0 : index
    %206 = vector.load %arg28[%c0_107, %c0_108] : memref<16x32xbf16, #tpu.memory_space<vmem>>, vector<16x32xbf16>
    %cst_109 = arith.constant dense<0.000000e+00> : vector<8x32xf32>
    %207 = tpu.matmul %205, %206, %cst_109 {dimension_numbers = #tpu.dot_dimension_numbers<[1], [0], [0], [1], [0, 0, 1, 1], [], []>} : vector<8x16xbf16>, vector<16x32xbf16>, vector<8x32xf32> -> vector<8x32xf32>
    %c0_110 = arith.constant 0 : index
    %c0_111 = arith.constant 0 : index
    %208 = vector.load %arg29[%c0_110, %c0_111] : memref<1x32xf32, #tpu.memory_space<vmem>>, vector<1x32xf32>
    %209 = vector.broadcast %208 : vector<1x32xf32> to vector<8x32xf32>
    %210 = arith.addf %207, %209 : vector<8x32xf32>
    %cst_112 = arith.constant 0.000000e+00 : f32
    %211 = vector.broadcast %cst_112 : f32 to vector<8x32xf32>
    %212 = arith.maximumf %210, %211 : vector<8x32xf32>
    %cst_113 = arith.constant 1.000000e+00 : f32
    %213 = vector.broadcast %cst_113 : f32 to vector<32x1xf32>
    %cst_114 = arith.constant dense<0.000000e+00> : vector<8x1xf32>
    %214 = tpu.matmul %212, %213, %cst_114 {dimension_numbers = #tpu.dot_dimension_numbers<[1], [0], [0], [1], [0, 0, 1, 1], [], []>} : vector<8x32xf32>, vector<32x1xf32>, vector<8x1xf32> -> vector<8x1xf32>
    %215 = arith.mulf %212, %212 : vector<8x32xf32>
    %cst_115 = arith.constant dense<0.000000e+00> : vector<8x1xf32>
    %216 = tpu.matmul %215, %213, %cst_115 {dimension_numbers = #tpu.dot_dimension_numbers<[1], [0], [0], [1], [0, 0, 1, 1], [], []>} : vector<8x32xf32>, vector<32x1xf32>, vector<8x1xf32> -> vector<8x1xf32>
    %cst_116 = arith.constant 3.125000e-02 : f32
    %217 = vector.broadcast %cst_116 : f32 to vector<8x1xf32>
    %218 = arith.mulf %214, %217 : vector<8x1xf32>
    %cst_117 = arith.constant 3.125000e-02 : f32
    %219 = vector.broadcast %cst_117 : f32 to vector<8x1xf32>
    %220 = arith.mulf %216, %219 : vector<8x1xf32>
    %221 = arith.mulf %218, %218 : vector<8x1xf32>
    %222 = arith.subf %220, %221 : vector<8x1xf32>
    %cst_118 = arith.constant 0.000000e+00 : f32
    %223 = vector.broadcast %cst_118 : f32 to vector<8x1xf32>
    %224 = arith.maximumf %222, %223 : vector<8x1xf32>
    %cst_119 = arith.constant 9.99999974E-6 : f32
    %225 = vector.broadcast %cst_119 : f32 to vector<8x1xf32>
    %226 = arith.addf %224, %225 : vector<8x1xf32>
    %227 = math.rsqrt %226 : vector<8x1xf32>
    %228 = vector.broadcast %218 : vector<8x1xf32> to vector<8x32xf32>
    %229 = arith.subf %212, %228 : vector<8x32xf32>
    %c0_120 = arith.constant 0 : index
    %c0_121 = arith.constant 0 : index
    %230 = vector.load %arg30[%c0_120, %c0_121] : memref<1x32xf32, #tpu.memory_space<vmem>>, vector<1x32xf32>
    %231 = vector.broadcast %227 : vector<8x1xf32> to vector<8x32xf32>
    %232 = vector.broadcast %230 : vector<1x32xf32> to vector<8x32xf32>
    %233 = arith.mulf %231, %232 : vector<8x32xf32>
    %234 = arith.mulf %229, %233 : vector<8x32xf32>
    %c0_122 = arith.constant 0 : index
    %c0_123 = arith.constant 0 : index
    %235 = vector.load %arg31[%c0_122, %c0_123] : memref<1x32xf32, #tpu.memory_space<vmem>>, vector<1x32xf32>
    %236 = vector.broadcast %235 : vector<1x32xf32> to vector<8x32xf32>
    %237 = arith.addf %234, %236 : vector<8x32xf32>
    %238 = arith.truncf %237 : vector<8x32xf32> to vector<8x32xbf16>
    %c0_124 = arith.constant 0 : index
    %c0_125 = arith.constant 0 : index
    %239 = vector.load %arg32[%c0_124, %c0_125] : memref<32x64xbf16, #tpu.memory_space<vmem>>, vector<32x64xbf16>
    %cst_126 = arith.constant dense<0.000000e+00> : vector<8x64xf32>
    %240 = tpu.matmul %238, %239, %cst_126 {dimension_numbers = #tpu.dot_dimension_numbers<[1], [0], [0], [1], [0, 0, 1, 1], [], []>} : vector<8x32xbf16>, vector<32x64xbf16>, vector<8x64xf32> -> vector<8x64xf32>
    %c0_127 = arith.constant 0 : index
    %c0_128 = arith.constant 0 : index
    %241 = vector.load %arg33[%c0_127, %c0_128] : memref<1x64xf32, #tpu.memory_space<vmem>>, vector<1x64xf32>
    %242 = vector.broadcast %241 : vector<1x64xf32> to vector<8x64xf32>
    %243 = arith.addf %240, %242 : vector<8x64xf32>
    %cst_129 = arith.constant 0.000000e+00 : f32
    %244 = vector.broadcast %cst_129 : f32 to vector<8x64xf32>
    %245 = arith.maximumf %243, %244 : vector<8x64xf32>
    %cst_130 = arith.constant 1.000000e+00 : f32
    %246 = vector.broadcast %cst_130 : f32 to vector<64x1xf32>
    %cst_131 = arith.constant dense<0.000000e+00> : vector<8x1xf32>
    %247 = tpu.matmul %245, %246, %cst_131 {dimension_numbers = #tpu.dot_dimension_numbers<[1], [0], [0], [1], [0, 0, 1, 1], [], []>} : vector<8x64xf32>, vector<64x1xf32>, vector<8x1xf32> -> vector<8x1xf32>
    %248 = arith.mulf %245, %245 : vector<8x64xf32>
    %cst_132 = arith.constant dense<0.000000e+00> : vector<8x1xf32>
    %249 = tpu.matmul %248, %246, %cst_132 {dimension_numbers = #tpu.dot_dimension_numbers<[1], [0], [0], [1], [0, 0, 1, 1], [], []>} : vector<8x64xf32>, vector<64x1xf32>, vector<8x1xf32> -> vector<8x1xf32>
    %cst_133 = arith.constant 1.562500e-02 : f32
    %250 = vector.broadcast %cst_133 : f32 to vector<8x1xf32>
    %251 = arith.mulf %247, %250 : vector<8x1xf32>
    %cst_134 = arith.constant 1.562500e-02 : f32
    %252 = vector.broadcast %cst_134 : f32 to vector<8x1xf32>
    %253 = arith.mulf %249, %252 : vector<8x1xf32>
    %254 = arith.mulf %251, %251 : vector<8x1xf32>
    %255 = arith.subf %253, %254 : vector<8x1xf32>
    %cst_135 = arith.constant 0.000000e+00 : f32
    %256 = vector.broadcast %cst_135 : f32 to vector<8x1xf32>
    %257 = arith.maximumf %255, %256 : vector<8x1xf32>
    %cst_136 = arith.constant 9.99999974E-6 : f32
    %258 = vector.broadcast %cst_136 : f32 to vector<8x1xf32>
    %259 = arith.addf %257, %258 : vector<8x1xf32>
    %260 = math.rsqrt %259 : vector<8x1xf32>
    %261 = vector.broadcast %251 : vector<8x1xf32> to vector<8x64xf32>
    %262 = arith.subf %245, %261 : vector<8x64xf32>
    %c0_137 = arith.constant 0 : index
    %c0_138 = arith.constant 0 : index
    %263 = vector.load %arg34[%c0_137, %c0_138] : memref<1x64xf32, #tpu.memory_space<vmem>>, vector<1x64xf32>
    %264 = vector.broadcast %260 : vector<8x1xf32> to vector<8x64xf32>
    %265 = vector.broadcast %263 : vector<1x64xf32> to vector<8x64xf32>
    %266 = arith.mulf %264, %265 : vector<8x64xf32>
    %267 = arith.mulf %262, %266 : vector<8x64xf32>
    %c0_139 = arith.constant 0 : index
    %c0_140 = arith.constant 0 : index
    %268 = vector.load %arg35[%c0_139, %c0_140] : memref<1x64xf32, #tpu.memory_space<vmem>>, vector<1x64xf32>
    %269 = vector.broadcast %268 : vector<1x64xf32> to vector<8x64xf32>
    %270 = arith.addf %267, %269 : vector<8x64xf32>
    %271 = arith.truncf %270 : vector<8x64xf32> to vector<8x64xbf16>
    %c0_141 = arith.constant 0 : index
    %c0_142 = arith.constant 0 : index
    %272 = vector.load %arg36[%c0_141, %c0_142] : memref<64x128xbf16, #tpu.memory_space<vmem>>, vector<64x128xbf16>
    %cst_143 = arith.constant dense<0.000000e+00> : vector<8x128xf32>
    %273 = tpu.matmul %271, %272, %cst_143 {dimension_numbers = #tpu.dot_dimension_numbers<[1], [0], [0], [1], [0, 0, 1, 1], [], []>} : vector<8x64xbf16>, vector<64x128xbf16>, vector<8x128xf32> -> vector<8x128xf32>
    %c0_144 = arith.constant 0 : index
    %c0_145 = arith.constant 0 : index
    %274 = vector.load %arg37[%c0_144, %c0_145] : memref<1x128xf32, #tpu.memory_space<vmem>>, vector<1x128xf32>
    %275 = vector.broadcast %274 : vector<1x128xf32> to vector<8x128xf32>
    %276 = arith.addf %273, %275 : vector<8x128xf32>
    %cst_146 = arith.constant 0.000000e+00 : f32
    %277 = vector.broadcast %cst_146 : f32 to vector<8x128xf32>
    %278 = arith.maximumf %276, %277 : vector<8x128xf32>
    %cst_147 = arith.constant 1.000000e+00 : f32
    %279 = vector.broadcast %cst_147 : f32 to vector<128x1xf32>
    %cst_148 = arith.constant dense<0.000000e+00> : vector<8x1xf32>
    %280 = tpu.matmul %278, %279, %cst_148 {dimension_numbers = #tpu.dot_dimension_numbers<[1], [0], [0], [1], [0, 0, 1, 1], [], []>} : vector<8x128xf32>, vector<128x1xf32>, vector<8x1xf32> -> vector<8x1xf32>
    %281 = arith.mulf %278, %278 : vector<8x128xf32>
    %cst_149 = arith.constant dense<0.000000e+00> : vector<8x1xf32>
    %282 = tpu.matmul %281, %279, %cst_149 {dimension_numbers = #tpu.dot_dimension_numbers<[1], [0], [0], [1], [0, 0, 1, 1], [], []>} : vector<8x128xf32>, vector<128x1xf32>, vector<8x1xf32> -> vector<8x1xf32>
    %cst_150 = arith.constant 7.812500e-03 : f32
    %283 = vector.broadcast %cst_150 : f32 to vector<8x1xf32>
    %284 = arith.mulf %280, %283 : vector<8x1xf32>
    %cst_151 = arith.constant 7.812500e-03 : f32
    %285 = vector.broadcast %cst_151 : f32 to vector<8x1xf32>
    %286 = arith.mulf %282, %285 : vector<8x1xf32>
    %287 = arith.mulf %284, %284 : vector<8x1xf32>
    %288 = arith.subf %286, %287 : vector<8x1xf32>
    %cst_152 = arith.constant 0.000000e+00 : f32
    %289 = vector.broadcast %cst_152 : f32 to vector<8x1xf32>
    %290 = arith.maximumf %288, %289 : vector<8x1xf32>
    %cst_153 = arith.constant 9.99999974E-6 : f32
    %291 = vector.broadcast %cst_153 : f32 to vector<8x1xf32>
    %292 = arith.addf %290, %291 : vector<8x1xf32>
    %293 = math.rsqrt %292 : vector<8x1xf32>
    %294 = vector.broadcast %284 : vector<8x1xf32> to vector<8x128xf32>
    %295 = arith.subf %278, %294 : vector<8x128xf32>
    %c0_154 = arith.constant 0 : index
    %c0_155 = arith.constant 0 : index
    %296 = vector.load %arg38[%c0_154, %c0_155] : memref<1x128xf32, #tpu.memory_space<vmem>>, vector<1x128xf32>
    %297 = vector.broadcast %293 : vector<8x1xf32> to vector<8x128xf32>
    %298 = vector.broadcast %296 : vector<1x128xf32> to vector<8x128xf32>
    %299 = arith.mulf %297, %298 : vector<8x128xf32>
    %300 = arith.mulf %295, %299 : vector<8x128xf32>
    %c0_156 = arith.constant 0 : index
    %c0_157 = arith.constant 0 : index
    %301 = vector.load %arg39[%c0_156, %c0_157] : memref<1x128xf32, #tpu.memory_space<vmem>>, vector<1x128xf32>
    %302 = vector.broadcast %301 : vector<1x128xf32> to vector<8x128xf32>
    %303 = arith.addf %300, %302 : vector<8x128xf32>
    %304 = arith.truncf %303 : vector<8x128xf32> to vector<8x128xbf16>
    %c0_158 = arith.constant 0 : index
    %c0_159 = arith.constant 0 : index
    %305 = vector.load %arg40[%c0_158, %c0_159] : memref<128x256xbf16, #tpu.memory_space<vmem>>, vector<128x256xbf16>
    %cst_160 = arith.constant dense<0.000000e+00> : vector<8x256xf32>
    %306 = tpu.matmul %304, %305, %cst_160 {dimension_numbers = #tpu.dot_dimension_numbers<[1], [0], [0], [1], [0, 0, 1, 1], [], []>} : vector<8x128xbf16>, vector<128x256xbf16>, vector<8x256xf32> -> vector<8x256xf32>
    %c0_161 = arith.constant 0 : index
    %c0_162 = arith.constant 0 : index
    %307 = vector.load %arg41[%c0_161, %c0_162] : memref<1x256xf32, #tpu.memory_space<vmem>>, vector<1x256xf32>
    %308 = vector.broadcast %307 : vector<1x256xf32> to vector<8x256xf32>
    %309 = arith.addf %306, %308 : vector<8x256xf32>
    %cst_163 = arith.constant 0.000000e+00 : f32
    %310 = vector.broadcast %cst_163 : f32 to vector<8x256xf32>
    %311 = arith.maximumf %309, %310 : vector<8x256xf32>
    %cst_164 = arith.constant 1.000000e+00 : f32
    %312 = vector.broadcast %cst_164 : f32 to vector<256x1xf32>
    %cst_165 = arith.constant dense<0.000000e+00> : vector<8x1xf32>
    %313 = tpu.matmul %311, %312, %cst_165 {dimension_numbers = #tpu.dot_dimension_numbers<[1], [0], [0], [1], [0, 0, 1, 1], [], []>} : vector<8x256xf32>, vector<256x1xf32>, vector<8x1xf32> -> vector<8x1xf32>
    %314 = arith.mulf %311, %311 : vector<8x256xf32>
    %cst_166 = arith.constant dense<0.000000e+00> : vector<8x1xf32>
    %315 = tpu.matmul %314, %312, %cst_166 {dimension_numbers = #tpu.dot_dimension_numbers<[1], [0], [0], [1], [0, 0, 1, 1], [], []>} : vector<8x256xf32>, vector<256x1xf32>, vector<8x1xf32> -> vector<8x1xf32>
    %cst_167 = arith.constant 3.906250e-03 : f32
    %316 = vector.broadcast %cst_167 : f32 to vector<8x1xf32>
    %317 = arith.mulf %313, %316 : vector<8x1xf32>
    %cst_168 = arith.constant 3.906250e-03 : f32
    %318 = vector.broadcast %cst_168 : f32 to vector<8x1xf32>
    %319 = arith.mulf %315, %318 : vector<8x1xf32>
    %320 = arith.mulf %317, %317 : vector<8x1xf32>
    %321 = arith.subf %319, %320 : vector<8x1xf32>
    %cst_169 = arith.constant 0.000000e+00 : f32
    %322 = vector.broadcast %cst_169 : f32 to vector<8x1xf32>
    %323 = arith.maximumf %321, %322 : vector<8x1xf32>
    %cst_170 = arith.constant 9.99999974E-6 : f32
    %324 = vector.broadcast %cst_170 : f32 to vector<8x1xf32>
    %325 = arith.addf %323, %324 : vector<8x1xf32>
    %326 = math.rsqrt %325 : vector<8x1xf32>
    %327 = vector.broadcast %317 : vector<8x1xf32> to vector<8x256xf32>
    %328 = arith.subf %311, %327 : vector<8x256xf32>
    %c0_171 = arith.constant 0 : index
    %c0_172 = arith.constant 0 : index
    %329 = vector.load %arg42[%c0_171, %c0_172] : memref<1x256xf32, #tpu.memory_space<vmem>>, vector<1x256xf32>
    %330 = vector.broadcast %326 : vector<8x1xf32> to vector<8x256xf32>
    %331 = vector.broadcast %329 : vector<1x256xf32> to vector<8x256xf32>
    %332 = arith.mulf %330, %331 : vector<8x256xf32>
    %333 = arith.mulf %328, %332 : vector<8x256xf32>
    %c0_173 = arith.constant 0 : index
    %c0_174 = arith.constant 0 : index
    %334 = vector.load %arg43[%c0_173, %c0_174] : memref<1x256xf32, #tpu.memory_space<vmem>>, vector<1x256xf32>
    %335 = vector.broadcast %334 : vector<1x256xf32> to vector<8x256xf32>
    %336 = arith.addf %333, %335 : vector<8x256xf32>
    %337 = arith.truncf %336 : vector<8x256xf32> to vector<8x256xbf16>
    %c0_175 = arith.constant 0 : index
    %c0_176 = arith.constant 0 : index
    %338 = vector.load %arg44[%c0_175, %c0_176] : memref<256x3xbf16, #tpu.memory_space<vmem>>, vector<256x3xbf16>
    %cst_177 = arith.constant dense<0.000000e+00> : vector<8x3xf32>
    %339 = tpu.matmul %337, %338, %cst_177 {dimension_numbers = #tpu.dot_dimension_numbers<[1], [0], [0], [1], [0, 0, 1, 1], [], []>} : vector<8x256xbf16>, vector<256x3xbf16>, vector<8x3xf32> -> vector<8x3xf32>
    %c0_178 = arith.constant 0 : index
    %c0_179 = arith.constant 0 : index
    %340 = vector.load %arg45[%c0_178, %c0_179] : memref<1x3xf32, #tpu.memory_space<vmem>>, vector<1x3xf32>
    %341 = vector.broadcast %340 : vector<1x3xf32> to vector<8x3xf32>
    %342 = arith.addf %339, %341 : vector<8x3xf32>
    %c0_180 = arith.constant 0 : index
    %c0_181 = arith.constant 0 : index
    %343 = vector.load %arg46[%c0_180, %c0_181] : memref<8x3xf32, #tpu.memory_space<vmem>>, vector<8x3xf32>
    tpu.vector_store %arg46[%c0_180, %c0_181], %342 {strides = array<i32>} : memref<8x3xf32, #tpu.memory_space<vmem>>, vector<8x3xf32>,
    return
  }
  func.func @transform_0(%arg0: i32) -> (i32, i32) {
    %c0_i32 = arith.constant 0 : i32
    %c0_i32_0 = arith.constant 0 : i32
    return %arg0, %c0_i32 : i32, i32
  }
  func.func @transform_1(%arg0: i32) -> (i32, i32) {
    %c0_i32 = arith.constant 0 : i32
    %c0_i32_0 = arith.constant 0 : i32
    %c0_i32_1 = arith.constant 0 : i32
    return %c0_i32, %c0_i32_0 : i32, i32
  }
  func.func @transform_2(%arg0: i32) -> (i32, i32) {
    %c0_i32 = arith.constant 0 : i32
    %c0_i32_0 = arith.constant 0 : i32
    %c0_i32_1 = arith.constant 0 : i32
    return %c0_i32, %c0_i32_0 : i32, i32
  }
  func.func @transform_3(%arg0: i32) -> (i32, i32) {
    %c0_i32 = arith.constant 0 : i32
    %c0_i32_0 = arith.constant 0 : i32
    %c0_i32_1 = arith.constant 0 : i32
    return %c0_i32, %c0_i32_0 : i32, i32
  }
  func.func @transform_4(%arg0: i32) -> (i32, i32) {
    %c0_i32 = arith.constant 0 : i32
    %c0_i32_0 = arith.constant 0 : i32
    %c0_i32_1 = arith.constant 0 : i32
    return %c0_i32, %c0_i32_0 : i32, i32
  }
  func.func @transform_5(%arg0: i32) -> (i32, i32) {
    %c0_i32 = arith.constant 0 : i32
    %c0_i32_0 = arith.constant 0 : i32
    %c0_i32_1 = arith.constant 0 : i32
    return %c0_i32, %c0_i32_0 : i32, i32
  }
  func.func @transform_6(%arg0: i32) -> (i32, i32) {
    %c0_i32 = arith.constant 0 : i32
    %c0_i32_0 = arith.constant 0 : i32
    %c0_i32_1 = arith.constant 0 : i32
    return %c0_i32, %c0_i32_0 : i32, i32
  }
  func.func @transform_7(%arg0: i32) -> (i32, i32) {
    %c0_i32 = arith.constant 0 : i32
    %c0_i32_0 = arith.constant 0 : i32
    %c0_i32_1 = arith.constant 0 : i32
    return %c0_i32, %c0_i32_0 : i32, i32
  }
  func.func @transform_8(%arg0: i32) -> (i32, i32) {
    %c0_i32 = arith.constant 0 : i32
    %c0_i32_0 = arith.constant 0 : i32
    %c0_i32_1 = arith.constant 0 : i32
    return %c0_i32, %c0_i32_0 : i32, i32
  }
  func.func @transform_9(%arg0: i32) -> (i32, i32) {
    %c0_i32 = arith.constant 0 : i32
    %c0_i32_0 = arith.constant 0 : i32
    %c0_i32_1 = arith.constant 0 : i32
    return %c0_i32, %c0_i32_0 : i32, i32
  }
  func.func @transform_10(%arg0: i32) -> (i32, i32) {
    %c0_i32 = arith.constant 0 : i32
    %c0_i32_0 = arith.constant 0 : i32
    %c0_i32_1 = arith.constant 0 : i32
    return %c0_i32, %c0_i32_0 : i32, i32
  }
  func.func @transform_11(%arg0: i32) -> (i32, i32) {
    %c0_i32 = arith.constant 0 : i32
    %c0_i32_0 = arith.constant 0 : i32
    %c0_i32_1 = arith.constant 0 : i32
    return %c0_i32, %c0_i32_0 : i32, i32
  }
  func.func @transform_12(%arg0: i32) -> (i32, i32) {
    %c0_i32 = arith.constant 0 : i32
    %c0_i32_0 = arith.constant 0 : i32
    %c0_i32_1 = arith.constant 0 : i32
    return %c0_i32, %c0_i32_0 : i32, i32
  }
  func.func @transform_13(%arg0: i32) -> (i32, i32) {
    %c0_i32 = arith.constant 0 : i32
    %c0_i32_0 = arith.constant 0 : i32
    %c0_i32_1 = arith.constant 0 : i32
    return %c0_i32, %c0_i32_0 : i32, i32
  }
  func.func @transform_14(%arg0: i32) -> (i32, i32) {
    %c0_i32 = arith.constant 0 : i32
    %c0_i32_0 = arith.constant 0 : i32
    %c0_i32_1 = arith.constant 0 : i32
    return %c0_i32, %c0_i32_0 : i32, i32
  }
  func.func @transform_15(%arg0: i32) -> (i32, i32) {
    %c0_i32 = arith.constant 0 : i32
    %c0_i32_0 = arith.constant 0 : i32
    %c0_i32_1 = arith.constant 0 : i32
    return %c0_i32, %c0_i32_0 : i32, i32
  }
  func.func @transform_16(%arg0: i32) -> (i32, i32) {
    %c0_i32 = arith.constant 0 : i32
    %c0_i32_0 = arith.constant 0 : i32
    %c0_i32_1 = arith.constant 0 : i32
    return %c0_i32, %c0_i32_0 : i32, i32
  }
  func.func @transform_17(%arg0: i32) -> (i32, i32) {
    %c0_i32 = arith.constant 0 : i32
    %c0_i32_0 = arith.constant 0 : i32
    %c0_i32_1 = arith.constant 0 : i32
    return %c0_i32, %c0_i32_0 : i32, i32
  }
  func.func @transform_18(%arg0: i32) -> (i32, i32) {
    %c0_i32 = arith.constant 0 : i32
    %c0_i32_0 = arith.constant 0 : i32
    %c0_i32_1 = arith.constant 0 : i32
    return %c0_i32, %c0_i32_0 : i32, i32
  }
  func.func @transform_19(%arg0: i32) -> (i32, i32) {
    %c0_i32 = arith.constant 0 : i32
    %c0_i32_0 = arith.constant 0 : i32
    %c0_i32_1 = arith.constant 0 : i32
    return %c0_i32, %c0_i32_0 : i32, i32
  }
  func.func @transform_20(%arg0: i32) -> (i32, i32) {
    %c0_i32 = arith.constant 0 : i32
    %c0_i32_0 = arith.constant 0 : i32
    %c0_i32_1 = arith.constant 0 : i32
    return %c0_i32, %c0_i32_0 : i32, i32
  }
  func.func @transform_21(%arg0: i32) -> (i32, i32) {
    %c0_i32 = arith.constant 0 : i32
    %c0_i32_0 = arith.constant 0 : i32
    %c0_i32_1 = arith.constant 0 : i32
    return %c0_i32, %c0_i32_0 : i32, i32
  }
  func.func @transform_22(%arg0: i32) -> (i32, i32) {
    %c0_i32 = arith.constant 0 : i32
    %c0_i32_0 = arith.constant 0 : i32
    %c0_i32_1 = arith.constant 0 : i32
    return %c0_i32, %c0_i32_0 : i32, i32
  }
  func.func @transform_23(%arg0: i32) -> (i32, i32) {
    %c0_i32 = arith.constant 0 : i32
    %c0_i32_0 = arith.constant 0 : i32
    %c0_i32_1 = arith.constant 0 : i32
    return %c0_i32, %c0_i32_0 : i32, i32
  }
  func.func @transform_24(%arg0: i32) -> (i32, i32) {
    %c0_i32 = arith.constant 0 : i32
    %c0_i32_0 = arith.constant 0 : i32
    %c0_i32_1 = arith.constant 0 : i32
    return %c0_i32, %c0_i32_0 : i32, i32
  }
  func.func @transform_25(%arg0: i32) -> (i32, i32) {
    %c0_i32 = arith.constant 0 : i32
    %c0_i32_0 = arith.constant 0 : i32
    %c0_i32_1 = arith.constant 0 : i32
    return %c0_i32, %c0_i32_0 : i32, i32
  }
  func.func @transform_26(%arg0: i32) -> (i32, i32) {
    %c0_i32 = arith.constant 0 : i32
    %c0_i32_0 = arith.constant 0 : i32
    %c0_i32_1 = arith.constant 0 : i32
    return %c0_i32, %c0_i32_0 : i32, i32
  }
  func.func @transform_27(%arg0: i32) -> (i32, i32) {
    %c0_i32 = arith.constant 0 : i32
    %c0_i32_0 = arith.constant 0 : i32
    %c0_i32_1 = arith.constant 0 : i32
    return %c0_i32, %c0_i32_0 : i32, i32
  }
  func.func @transform_28(%arg0: i32) -> (i32, i32) {
    %c0_i32 = arith.constant 0 : i32
    %c0_i32_0 = arith.constant 0 : i32
    %c0_i32_1 = arith.constant 0 : i32
    return %c0_i32, %c0_i32_0 : i32, i32
  }
  func.func @transform_29(%arg0: i32) -> (i32, i32) {
    %c0_i32 = arith.constant 0 : i32
    %c0_i32_0 = arith.constant 0 : i32
    %c0_i32_1 = arith.constant 0 : i32
    return %c0_i32, %c0_i32_0 : i32, i32
  }
  func.func @transform_30(%arg0: i32) -> (i32, i32) {
    %c0_i32 = arith.constant 0 : i32
    %c0_i32_0 = arith.constant 0 : i32
    %c0_i32_1 = arith.constant 0 : i32
    return %c0_i32, %c0_i32_0 : i32, i32
  }
  func.func @transform_31(%arg0: i32) -> (i32, i32) {
    %c0_i32 = arith.constant 0 : i32
    %c0_i32_0 = arith.constant 0 : i32
    %c0_i32_1 = arith.constant 0 : i32
    return %c0_i32, %c0_i32_0 : i32, i32
  }
  func.func @transform_32(%arg0: i32) -> (i32, i32) {
    %c0_i32 = arith.constant 0 : i32
    %c0_i32_0 = arith.constant 0 : i32
    %c0_i32_1 = arith.constant 0 : i32
    return %c0_i32, %c0_i32_0 : i32, i32
  }
  func.func @transform_33(%arg0: i32) -> (i32, i32) {
    %c0_i32 = arith.constant 0 : i32
    %c0_i32_0 = arith.constant 0 : i32
    %c0_i32_1 = arith.constant 0 : i32
    return %c0_i32, %c0_i32_0 : i32, i32
  }
  func.func @transform_34(%arg0: i32) -> (i32, i32) {
    %c0_i32 = arith.constant 0 : i32
    %c0_i32_0 = arith.constant 0 : i32
    %c0_i32_1 = arith.constant 0 : i32
    return %c0_i32, %c0_i32_0 : i32, i32
  }
  func.func @transform_35(%arg0: i32) -> (i32, i32) {
    %c0_i32 = arith.constant 0 : i32
    %c0_i32_0 = arith.constant 0 : i32
    %c0_i32_1 = arith.constant 0 : i32
    return %c0_i32, %c0_i32_0 : i32, i32
  }
  func.func @transform_36(%arg0: i32) -> (i32, i32) {
    %c0_i32 = arith.constant 0 : i32
    %c0_i32_0 = arith.constant 0 : i32
    %c0_i32_1 = arith.constant 0 : i32
    return %c0_i32, %c0_i32_0 : i32, i32
  }
  func.func @transform_37(%arg0: i32) -> (i32, i32) {
    %c0_i32 = arith.constant 0 : i32
    %c0_i32_0 = arith.constant 0 : i32
    %c0_i32_1 = arith.constant 0 : i32
    return %c0_i32, %c0_i32_0 : i32, i32
  }
  func.func @transform_38(%arg0: i32) -> (i32, i32) {
    %c0_i32 = arith.constant 0 : i32
    %c0_i32_0 = arith.constant 0 : i32
    %c0_i32_1 = arith.constant 0 : i32
    return %c0_i32, %c0_i32_0 : i32, i32
  }
  func.func @transform_39(%arg0: i32) -> (i32, i32) {
    %c0_i32 = arith.constant 0 : i32
    %c0_i32_0 = arith.constant 0 : i32
    %c0_i32_1 = arith.constant 0 : i32
    return %c0_i32, %c0_i32_0 : i32, i32
  }
  func.func @transform_40(%arg0: i32) -> (i32, i32) {
    %c0_i32 = arith.constant 0 : i32
    %c0_i32_0 = arith.constant 0 : i32
    %c0_i32_1 = arith.constant 0 : i32
    return %c0_i32, %c0_i32_0 : i32, i32
  }
  func.func @transform_41(%arg0: i32) -> (i32, i32) {
    %c0_i32 = arith.constant 0 : i32
    %c0_i32_0 = arith.constant 0 : i32
    %c0_i32_1 = arith.constant 0 : i32
    return %c0_i32, %c0_i32_0 : i32, i32
  }
  func.func @transform_42(%arg0: i32) -> (i32, i32) {
    %c0_i32 = arith.constant 0 : i32
    %c0_i32_0 = arith.constant 0 : i32
    %c0_i32_1 = arith.constant 0 : i32
    return %c0_i32, %c0_i32_0 : i32, i32
  }
  func.func @transform_43(%arg0: i32) -> (i32, i32) {
    %c0_i32 = arith.constant 0 : i32
    %c0_i32_0 = arith.constant 0 : i32
    %c0_i32_1 = arith.constant 0 : i32
    return %c0_i32, %c0_i32_0 : i32, i32
  }
  func.func @transform_44(%arg0: i32) -> (i32, i32) {
    %c0_i32 = arith.constant 0 : i32
    %c0_i32_0 = arith.constant 0 : i32
    %c0_i32_1 = arith.constant 0 : i32
    return %c0_i32, %c0_i32_0 : i32, i32
  }
  func.func @transform_45(%arg0: i32) -> (i32, i32) {
    %c0_i32 = arith.constant 0 : i32
    %c0_i32_0 = arith.constant 0 : i32
    return %arg0, %c0_i32 : i32, i32
  }
}

</mosaic_0001>

<llo_original>
// kernel: tpu_custom_call.1
$region0: #{tpu_custom_call.1}
  #allocation0 [shape = 'u32[]', space=smem, size = 0x4, offset = 0x4, fixed_abs, tag = 'smem constant byte address 0x4 - core index']
  #allocation1 [shape = 'u32[72,128]{1,0:T(1,128)}', space=vmem, size = 0x9000, scoped, tag = 'internal scratch']
  %s0 = inlined_call_operand.smem [shape: u32[46], index: -1, kind: input, shape index: {}]
  %s1 = sld [smem:[%s0]]
  %s2 = scalar_lea.smem %s0, 1
  %s3 = sld [smem:[%s2]]
  %s4 = scalar_lea.smem %s0, 2
  %s5 = sld [smem:[%s4]]
  %s6 = scalar_lea.smem %s0, 3
  %s7 = sld [smem:[%s6]]
  %s8 = scalar_lea.smem %s0, 4
  %s9 = sld [smem:[%s8]]
  %s10 = scalar_lea.smem %s0, 5
  %s11 = sld [smem:[%s10]]
  %s12 = scalar_lea.smem %s0, 6
  %s13 = sld [smem:[%s12]]
  %s14 = scalar_lea.smem %s0, 7
  %s15 = sld [smem:[%s14]]
  %s16 = scalar_lea.smem %s0, 8
  %s17 = sld [smem:[%s16]]
  %s18 = scalar_lea.smem %s0, 9
  %s19 = sld [smem:[%s18]]
  %s20 = scalar_lea.smem %s0, 10
  %s21 = sld [smem:[%s20]]
  %s22 = scalar_lea.smem %s0, 11
  %s23 = sld [smem:[%s22]]
  %s24 = scalar_lea.smem %s0, 12
  %s25 = sld [smem:[%s24]]
  %s26 = scalar_lea.smem %s0, 13
  %s27 = sld [smem:[%s26]]
  %s28 = scalar_lea.smem %s0, 14
  %s29 = sld [smem:[%s28]]
  %s30 = scalar_lea.smem %s0, 15
  %s31 = sld [smem:[%s30]]
  %s32 = scalar_lea.smem %s0, 16
  %s33 = sld [smem:[%s32]]
  %s34 = scalar_lea.smem %s0, 17
  %s35 = sld [smem:[%s34]]
  %s36 = scalar_lea.smem %s0, 18
  %s37 = sld [smem:[%s36]]
  %s38 = scalar_lea.smem %s0, 19
  %s39 = sld [smem:[%s38]]
  %s40 = scalar_lea.smem %s0, 20
  %s41 = sld [smem:[%s40]]
  %s42 = scalar_lea.smem %s0, 21
  %s43 = sld [smem:[%s42]]
  %s44 = scalar_lea.smem %s0, 22
  %s45 = sld [smem:[%s44]]
  %s46 = scalar_lea.smem %s0, 23
  %s47 = sld [smem:[%s46]]
  %s48 = scalar_lea.smem %s0, 24
  %s49 = sld [smem:[%s48]]
  %s50 = scalar_lea.smem %s0, 25
  %s51 = sld [smem:[%s50]]
  %s52 = scalar_lea.smem %s0, 26
  %s53 = sld [smem:[%s52]]
  %s54 = scalar_lea.smem %s0, 27
  %s55 = sld [smem:[%s54]]
  %s56 = scalar_lea.smem %s0, 28
  %s57 = sld [smem:[%s56]]
  %s58 = scalar_lea.smem %s0, 29
  %s59 = sld [smem:[%s58]]
  %s60 = scalar_lea.smem %s0, 30
  %s61 = sld [smem:[%s60]]
  %s62 = scalar_lea.smem %s0, 31
  %s63 = sld [smem:[%s62]]
  %s64 = scalar_lea.smem %s0, 32
  %s65 = sld [smem:[%s64]]
  %s66 = scalar_lea.smem %s0, 33
  %s67 = sld [smem:[%s66]]
  %s68 = scalar_lea.smem %s0, 34
  %s69 = sld [smem:[%s68]]
  %s70 = scalar_lea.smem %s0, 35
  %s71 = sld [smem:[%s70]]
  %s72 = scalar_lea.smem %s0, 36
  %s73 = sld [smem:[%s72]]
  %s74 = scalar_lea.smem %s0, 37
  %s75 = sld [smem:[%s74]]
  %s76 = scalar_lea.smem %s0, 38
  %s77 = sld [smem:[%s76]]
  %s78 = scalar_lea.smem %s0, 39
  %s79 = sld [smem:[%s78]]
  %s80 = scalar_lea.smem %s0, 40
  %s81 = sld [smem:[%s80]]
  %s82 = scalar_lea.smem %s0, 41
  %s83 = sld [smem:[%s82]]
  %s84 = scalar_lea.smem %s0, 42
  %s85 = sld [smem:[%s84]]
  %s86 = scalar_lea.smem %s0, 43
  %s87 = sld [smem:[%s86]]
  %s88 = scalar_lea.smem %s0, 44
  %s89 = sld [smem:[%s88]]
  %s90 = scalar_lea.smem %s0, 45
  %s91 = sld [smem:[%s90]]
  %s92 = sld [smem:[#allocation0]]
  $region309: #{tpu_custom_call.1} parent=0
    _
  %s94 = ssub.s32 1, %s92
  %s95 = scalar_select 0, %s94, %s92
  $region1: #{tpu_custom_call.1} parent=0
    #allocation2 [shape = 'u8[1024]{0}', space=vmem, size = 0x400, scoped, tag = 'input window, operand 2, single buffered']
    #allocation3 [shape = 's32[2]{0}', space=sflag, size = 0x8, scoped, tag = 'scoped memory for tpu_custom_call.1']
    #allocation4 [shape = 'u8[1024]{0}', space=vmem, size = 0x400, scoped, tag = 'input window, operand 3, single buffered']
    #allocation5 [shape = 's32[1]{0}', space=sflag, size = 0x4, scoped, tag = 'scoped memory for tpu_custom_call.1']
    #allocation6 [shape = 'u8[512]{0}', space=vmem, size = 0x400, scoped, tag = 'input window, operand 6, single buffered']
    #allocation7 [shape = 'u8[512]{0}', space=vmem, size = 0x400, scoped, tag = 'input window, operand 7, single buffered']
    #allocation8 [shape = 's32[1]{0}', space=sflag, size = 0x4, scoped, tag = 'scoped memory for tpu_custom_call.1']
    #allocation9 [shape = 'u8[512]{0}', space=vmem, size = 0x400, scoped, tag = 'input window, operand 8, single buffered']
    #allocation10 [shape = 'u8[512]{0}', space=vmem, size = 0x400, scoped, tag = 'input window, operand 10, single buffered']
    #allocation11 [shape = 's32[1]{0}', space=sflag, size = 0x4, scoped, tag = 'scoped memory for tpu_custom_call.1']
    #allocation12 [shape = 'u8[512]{0}', space=vmem, size = 0x400, scoped, tag = 'input window, operand 11, single buffered']
    #allocation13 [shape = 'u8[512]{0}', space=vmem, size = 0x400, scoped, tag = 'input window, operand 12, single buffered']
    #allocation14 [shape = 's32[1]{0}', space=sflag, size = 0x4, scoped, tag = 'scoped memory for tpu_custom_call.1']
    #allocation15 [shape = 'u8[512]{0}', space=vmem, size = 0x400, scoped, tag = 'input window, operand 14, single buffered']
    #allocation16 [shape = 'u8[512]{0}', space=vmem, size = 0x400, scoped, tag = 'input window, operand 15, single buffered']
    #allocation17 [shape = 's32[1]{0}', space=sflag, size = 0x4, scoped, tag = 'scoped memory for tpu_custom_call.1']
    #allocation18 [shape = 'u8[512]{0}', space=vmem, size = 0x400, scoped, tag = 'input window, operand 16, single buffered']
    #allocation19 [shape = 'u8[512]{0}', space=vmem, size = 0x400, scoped, tag = 'input window, operand 18, single buffered']
    #allocation20 [shape = 's32[1]{0}', space=sflag, size = 0x4, scoped, tag = 'scoped memory for tpu_custom_call.1']
    #allocation21 [shape = 'u8[512]{0}', space=vmem, size = 0x400, scoped, tag = 'input window, operand 19, single buffered']
    #allocation22 [shape = 'u8[512]{0}', space=vmem, size = 0x400, scoped, tag = 'input window, operand 20, single buffered']
    #allocation23 [shape = 's32[1]{0}', space=sflag, size = 0x4, scoped, tag = 'scoped memory for tpu_custom_call.1']
    #allocation24 [shape = 'u8[512]{0}', space=vmem, size = 0x400, scoped, tag = 'input window, operand 22, single buffered']
    #allocation25 [shape = 'u8[2048]{0}', space=vmem, size = 0x800, scoped, tag = 'input window, operand 23, single buffered']
    #allocation26 [shape = 's32[1]{0}', space=sflag, size = 0x4, scoped, tag = 'scoped memory for tpu_custom_call.1']
    #allocation27 [shape = 'u8[512]{0}', space=vmem, size = 0x400, scoped, tag = 'input window, operand 24, single buffered']
    #allocation28 [shape = 'u8[512]{0}', space=vmem, size = 0x400, scoped, tag = 'input window, operand 25, single buffered']
    #allocation29 [shape = 's32[1]{0}', space=sflag, size = 0x4, scoped, tag = 'scoped memory for tpu_custom_call.1']
    #allocation30 [shape = 'u8[512]{0}', space=vmem, size = 0x400, scoped, tag = 'input window, operand 26, single buffered']
    #allocation31 [shape = 'u8[512]{0}', space=vmem, size = 0x400, scoped, tag = 'input window, operand 28, single buffered']
    #allocation32 [shape = 's32[1]{0}', space=sflag, size = 0x4, scoped, tag = 'scoped memory for tpu_custom_call.1']
    #allocation33 [shape = 'u8[512]{0}', space=vmem, size = 0x400, scoped, tag = 'input window, operand 29, single buffered']
    #allocation34 [shape = 'u8[512]{0}', space=vmem, size = 0x400, scoped, tag = 'input window, operand 30, single buffered']
    #allocation35 [shape = 's32[1]{0}', space=sflag, size = 0x4, scoped, tag = 'scoped memory for tpu_custom_call.1']
    #allocation36 [shape = 'u8[512]{0}', space=vmem, size = 0x400, scoped, tag = 'input window, operand 34, single buffered']
    #allocation37 [shape = 'u8[16384]{0}', space=vmem, size = 0x4000, scoped, tag = 'input window, operand 35, single buffered']
    #allocation38 [shape = 's32[1]{0}', space=sflag, size = 0x4, scoped, tag = 'scoped memory for tpu_custom_call.1']
    %96 = vsyncpa [#allocation3], 0
    %97 = vsyncpa [#allocation5], 0
    %98 = vsyncpa [#allocation8], 0
    %99 = vsyncpa [#allocation11], 0
    %100 = vsyncpa [#allocation14], 0
    %101 = vsyncpa [#allocation17], 0
    %102 = vsyncpa [#allocation20], 0
    %103 = vsyncpa [#allocation23], 0
    %104 = vsyncpa [#allocation26], 0
    %105 = vsyncpa [#allocation29], 0
    %106 = vsyncpa [#allocation32], 0
    %107 = vsyncpa [#allocation35], 0
    %108 = vsyncpa [#allocation38], 0
    loop: start=0, step=1, limit=4
    $region2: #{tpu_custom_call.1} parent=1 // loop_pre_header
      _
    $region3: #{tpu_custom_call.1} parent=1 // loop_header
      %s110 = sphi 0, %s114
      %p111 = scmp.ge.s32.totalorder %s110, 4
      %s120 = sphi 0, %s122
      %s123 = sphi 0, %s120
      %s124 = sphi 0, %s123
      %s140 = sphi 0, %s124
      %s144 = sphi 0, %s144
      %s146 = sphi 0, %s144
      %s147 = sphi 0, %s146
      %s161 = sphi 0, %s147
      %s165 = sphi 0, %s165
      %s167 = sphi 0, %s165
      %s168 = sphi 0, %s167
      %s182 = sphi 0, %s168
      %s186 = sphi 0, %s186
      %s188 = sphi 0, %s186
      %s189 = sphi 0, %s188
      %s203 = sphi 0, %s189
      %s207 = sphi 0, %s207
      %s209 = sphi 0, %s207
      %s210 = sphi 0, %s209
      %s224 = sphi 0, %s210
      %s228 = sphi 0, %s228
      %s230 = sphi 0, %s228
      %s231 = sphi 0, %s230
      %s245 = sphi 0, %s231
      %s249 = sphi 0, %s249
      %s251 = sphi 0, %s249
      %s252 = sphi 0, %s251
      %s266 = sphi 0, %s252
      %s270 = sphi 0, %s270
      %s272 = sphi 0, %s270
      %s273 = sphi 0, %s272
      %s287 = sphi 0, %s273
      %s291 = sphi 0, %s291
      %s293 = sphi 0, %s291
      %s294 = sphi 0, %s293
      %s308 = sphi 0, %s294
      %s312 = sphi 0, %s312
      %s314 = sphi 0, %s312
      %s315 = sphi 0, %s314
      %s329 = sphi 0, %s315
      %s333 = sphi 0, %s333
      %s335 = sphi 0, %s333
      %s336 = sphi 0, %s335
      %s350 = sphi 0, %s336
      %s354 = sphi 0, %s354
      %s356 = sphi 0, %s354
      %s357 = sphi 0, %s356
      %s371 = sphi 0, %s357
      %s375 = sphi 0, %s375
      %s377 = sphi 0, %s375
      %s378 = sphi 0, %s377
      %s392 = sphi 0, %s378
      %s396 = sphi 0, %s396
      %s398 = sphi 0, %s396
      %s399 = sphi 0, %s398
      %s413 = sphi 0, %s399
      %s417 = sphi 0, %s417
      %s419 = sphi 0, %s417
      %s420 = sphi 0, %s419
      %s434 = sphi 0, %s420
      %s438 = sphi 0, %s438
      %s440 = sphi 0, %s438
      %s441 = sphi 0, %s440
      %s455 = sphi 0, %s441
      %s459 = sphi 0, %s459
      %s461 = sphi 0, %s459
      %s462 = sphi 0, %s461
      %s476 = sphi 0, %s462
      %s480 = sphi 0, %s480
      %s482 = sphi 0, %s480
      %s483 = sphi 0, %s482
      %s497 = sphi 0, %s483
      %s501 = sphi 0, %s501
      %s503 = sphi 0, %s501
      %s504 = sphi 0, %s503
      %s518 = sphi 0, %s504
      %s522 = sphi 0, %s522
      %s524 = sphi 0, %s522
      %s525 = sphi 0, %s524
      %s539 = sphi 0, %s525
      %s543 = sphi 0, %s543
      %s545 = sphi 0, %s543
      %s546 = sphi 0, %s545
      %s560 = sphi 0, %s546
      %s564 = sphi 0, %s564
      %s566 = sphi 0, %s564
      %s567 = sphi 0, %s566
      %s581 = sphi 0, %s567
      %s585 = sphi 0, %s585
      %s587 = sphi 0, %s585
      %s588 = sphi 0, %s587
      %s602 = sphi 0, %s588
      %s606 = sphi 0, %s606
      %s608 = sphi 0, %s606
      %s609 = sphi 0, %s608
      %s623 = sphi 0, %s609
      %s627 = sphi 0, %s627
      %s629 = sphi 0, %s627
      %s630 = sphi 0, %s629
      %s644 = sphi 0, %s630
      %s648 = sphi 0, %s648
      %s650 = sphi 0, %s648
      %s651 = sphi 0, %s650
      %s665 = sphi 0, %s651
      %s669 = sphi 0, %s669
      %s671 = sphi 0, %s669
      %s672 = sphi 0, %s671
      %s686 = sphi 0, %s672
      %s690 = sphi 0, %s690
      %s692 = sphi 0, %s690
      %s693 = sphi 0, %s692
      %s707 = sphi 0, %s693
      %s711 = sphi 0, %s711
      %s713 = sphi 0, %s711
      %s714 = sphi 0, %s713
      %s728 = sphi 0, %s714
      %s732 = sphi 0, %s732
      %s734 = sphi 0, %s732
      %s735 = sphi 0, %s734
      %s749 = sphi 0, %s735
      %s753 = sphi 0, %s753
      %s755 = sphi 0, %s753
      %s756 = sphi 0, %s755
      %s770 = sphi 0, %s756
      %s774 = sphi 0, %s774
      %s776 = sphi 0, %s774
      %s777 = sphi 0, %s776
      %s791 = sphi 0, %s777
      %s795 = sphi 0, %s795
      %s797 = sphi 0, %s795
      %s798 = sphi 0, %s797
      %s812 = sphi 0, %s798
      %s816 = sphi 0, %s816
      %s818 = sphi 0, %s816
      %s819 = sphi 0, %s818
      %s833 = sphi 0, %s819
      %s837 = sphi 0, %s837
      %s839 = sphi 0, %s837
      %s840 = sphi 0, %s839
      %s854 = sphi 0, %s840
      %s858 = sphi 0, %s858
      %s860 = sphi 0, %s858
      %s861 = sphi 0, %s860
      %s875 = sphi 0, %s861
      %s879 = sphi 0, %s879
      %s881 = sphi 0, %s879
      %s882 = sphi 0, %s881
      %s896 = sphi 0, %s882
      %s900 = sphi 0, %s900
      %s902 = sphi 0, %s900
      %s903 = sphi 0, %s902
      %s917 = sphi 0, %s903
      %s921 = sphi 0, %s921
      %s923 = sphi 0, %s921
      %s924 = sphi 0, %s923
      %s938 = sphi 0, %s924
      %s942 = sphi 0, %s942
      %s944 = sphi 0, %s942
      %s945 = sphi 0, %s944
      %s959 = sphi 0, %s945
      %s963 = sphi 0, %s963
      %s965 = sphi 0, %s963
      %s966 = sphi 0, %s965
      %s980 = sphi 0, %s966
      %s984 = sphi 0, %s984
      %s986 = sphi 0, %s984
      %s987 = sphi 0, %s986
      %s1001 = sphi 0, %s987
      %s1005 = sphi 0, %s1005
      %s1007 = sphi 0, %s1005
      %s1008 = sphi 0, %s1007
      %s1022 = sphi 0, %s1008
      %s1026 = sphi 0, %s1026
      %s1028 = sphi 0, %s1026
      %s1029 = sphi 0, %s1028
      %s1043 = sphi 0, %s1029
      %s1047 = sphi 0, %s1047
      %s1049 = sphi 0, %s1047
      %s1050 = sphi 0, %s1049
      %s1064 = sphi 0, %s1050
      %s1070 = sphi 0, %s1072
      %s1073 = sphi 0, %s1070
      %s1074 = sphi 0, %s1073
      %s1090 = sphi 0, %s1074
    $region4: #{tpu_custom_call.1} parent=1 // loop_header_branch
      %113 = sbr.rel (%p111) target = $region8
    $region5: #{tpu_custom_call.1} parent=1 // loop_body
      %s115 = ssub.s32 %s110, 1
      %s116 = ssub.s32 %s110, 2
      %s117 = sadd.s32 %s110, 1
      %s118 = ssub.s32 %s110, %s117
      %p119 = scmp.eq.s32.totalorder %s118, 0
      %s121 = sadd.s32 %s120, 1
      %s122 = scalar_select %p119, %s120, %s121
      %p125 = pneg %p119
      %p126 = scmp.eq.s32.totalorder %s110, 1
      %p127 = por %p125, %p126
      %p128 = scmp.ne.s32.totalorder %s120, %s123
      %p129 = scmp.eq.s32.totalorder %s110, 0
      %p130 = por %p128, %p129
      %p131 = scmp.ne.s32.totalorder %s120, %s123
      %p132 = scmp.eq.s32.totalorder %s115, 1
      %p133 = por %p131, %p132
      %p134 = scmp.ne.s32.totalorder %s123, %s124
      %p135 = scmp.eq.s32.totalorder %s115, 0
      %p136 = por %p134, %p135
      %p137 = scmp.ne.s32.totalorder %s123, %s124
      %p138 = scmp.eq.s32.totalorder %s116, 1
      %p139 = por %p137, %p138
      %p141 = scmp.ne.s32.totalorder %s124, %s140
      %p142 = scmp.eq.s32.totalorder %s116, 0
      %p143 = por %p141, %p142
      %s145 = sadd.s32 %s144, 1
      %p148 = scmp.eq.s32.totalorder %s110, 1
      %p149 = scmp.ne.s32.totalorder %s144, %s146
      %p150 = scmp.eq.s32.totalorder %s110, 0
      %p151 = por %p149, %p150
      %p152 = scmp.ne.s32.totalorder %s144, %s146
      %p153 = scmp.eq.s32.totalorder %s115, 1
      %p154 = por %p152, %p153
      %p155 = scmp.ne.s32.totalorder %s146, %s147
      %p156 = scmp.eq.s32.totalorder %s115, 0
      %p157 = por %p155, %p156
      %p158 = scmp.ne.s32.totalorder %s146, %s147
      %p159 = scmp.eq.s32.totalorder %s116, 1
      %p160 = por %p158, %p159
      %p162 = scmp.ne.s32.totalorder %s147, %s161
      %p163 = scmp.eq.s32.totalorder %s116, 0
      %p164 = por %p162, %p163
      %s166 = sadd.s32 %s165, 1
      %p169 = scmp.eq.s32.totalorder %s110, 1
      %p170 = scmp.ne.s32.totalorder %s165, %s167
      %p171 = scmp.eq.s32.totalorder %s110, 0
      %p172 = por %p170, %p171
      %p173 = scmp.ne.s32.totalorder %s165, %s167
      %p174 = scmp.eq.s32.totalorder %s115, 1
      %p175 = por %p173, %p174
      %p176 = scmp.ne.s32.totalorder %s167, %s168
      %p177 = scmp.eq.s32.totalorder %s115, 0
      %p178 = por %p176, %p177
      %p179 = scmp.ne.s32.totalorder %s167, %s168
      %p180 = scmp.eq.s32.totalorder %s116, 1
      %p181 = por %p179, %p180
      %p183 = scmp.ne.s32.totalorder %s168, %s182
      %p184 = scmp.eq.s32.totalorder %s116, 0
      %p185 = por %p183, %p184
      %s187 = sadd.s32 %s186, 1
      %p190 = scmp.eq.s32.totalorder %s110, 1
      %p191 = scmp.ne.s32.totalorder %s186, %s188
      %p192 = scmp.eq.s32.totalorder %s110, 0
      %p193 = por %p191, %p192
      %p194 = scmp.ne.s32.totalorder %s186, %s188
      %p195 = scmp.eq.s32.totalorder %s115, 1
      %p196 = por %p194, %p195
      %p197 = scmp.ne.s32.totalorder %s188, %s189
      %p198 = scmp.eq.s32.totalorder %s115, 0
      %p199 = por %p197, %p198
      %p200 = scmp.ne.s32.totalorder %s188, %s189
      %p201 = scmp.eq.s32.totalorder %s116, 1
      %p202 = por %p200, %p201
      %p204 = scmp.ne.s32.totalorder %s189, %s203
      %p205 = scmp.eq.s32.totalorder %s116, 0
      %p206 = por %p204, %p205
      %s208 = sadd.s32 %s207, 1
      %p211 = scmp.eq.s32.totalorder %s110, 1
      %p212 = scmp.ne.s32.totalorder %s207, %s209
      %p213 = scmp.eq.s32.totalorder %s110, 0
      %p214 = por %p212, %p213
      %p215 = scmp.ne.s32.totalorder %s207, %s209
      %p216 = scmp.eq.s32.totalorder %s115, 1
      %p217 = por %p215, %p216
      %p218 = scmp.ne.s32.totalorder %s209, %s210
      %p219 = scmp.eq.s32.totalorder %s115, 0
      %p220 = por %p218, %p219
      %p221 = scmp.ne.s32.totalorder %s209, %s210
      %p222 = scmp.eq.s32.totalorder %s116, 1
      %p223 = por %p221, %p222
      %p225 = scmp.ne.s32.totalorder %s210, %s224
      %p226 = scmp.eq.s32.totalorder %s116, 0
      %p227 = por %p225, %p226
      %s229 = sadd.s32 %s228, 1
      %p232 = scmp.eq.s32.totalorder %s110, 1
      %p233 = scmp.ne.s32.totalorder %s228, %s230
      %p234 = scmp.eq.s32.totalorder %s110, 0
      %p235 = por %p233, %p234
      %p236 = scmp.ne.s32.totalorder %s228, %s230
      %p237 = scmp.eq.s32.totalorder %s115, 1
      %p238 = por %p236, %p237
      %p239 = scmp.ne.s32.totalorder %s230, %s231
      %p240 = scmp.eq.s32.totalorder %s115, 0
      %p241 = por %p239, %p240
      %p242 = scmp.ne.s32.totalorder %s230, %s231
      %p243 = scmp.eq.s32.totalorder %s116, 1
      %p244 = por %p242, %p243
      %p246 = scmp.ne.s32.totalorder %s231, %s245
      %p247 = scmp.eq.s32.totalorder %s116, 0
      %p248 = por %p246, %p247
      %s250 = sadd.s32 %s249, 1
      %p253 = scmp.eq.s32.totalorder %s110, 1
      %p254 = scmp.ne.s32.totalorder %s249, %s251
      %p255 = scmp.eq.s32.totalorder %s110, 0
      %p256 = por %p254, %p255
      %p257 = scmp.ne.s32.totalorder %s249, %s251
      %p258 = scmp.eq.s32.totalorder %s115, 1
      %p259 = por %p257, %p258
      %p260 = scmp.ne.s32.totalorder %s251, %s252
      %p261 = scmp.eq.s32.totalorder %s115, 0
      %p262 = por %p260, %p261
      %p263 = scmp.ne.s32.totalorder %s251, %s252
      %p264 = scmp.eq.s32.totalorder %s116, 1
      %p265 = por %p263, %p264
      %p267 = scmp.ne.s32.totalorder %s252, %s266
      %p268 = scmp.eq.s32.totalorder %s116, 0
      %p269 = por %p267, %p268
      %s271 = sadd.s32 %s270, 1
      %p274 = scmp.eq.s32.totalorder %s110, 1
      %p275 = scmp.ne.s32.totalorder %s270, %s272
      %p276 = scmp.eq.s32.totalorder %s110, 0
      %p277 = por %p275, %p276
      %p278 = scmp.ne.s32.totalorder %s270, %s272
      %p279 = scmp.eq.s32.totalorder %s115, 1
      %p280 = por %p278, %p279
      %p281 = scmp.ne.s32.totalorder %s272, %s273
      %p282 = scmp.eq.s32.totalorder %s115, 0
      %p283 = por %p281, %p282
      %p284 = scmp.ne.s32.totalorder %s272, %s273
      %p285 = scmp.eq.s32.totalorder %s116, 1
      %p286 = por %p284, %p285
      %p288 = scmp.ne.s32.totalorder %s273, %s287
      %p289 = scmp.eq.s32.totalorder %s116, 0
      %p290 = por %p288, %p289
      %s292 = sadd.s32 %s291, 1
      %p295 = scmp.eq.s32.totalorder %s110, 1
      %p296 = scmp.ne.s32.totalorder %s291, %s293
      %p297 = scmp.eq.s32.totalorder %s110, 0
      %p298 = por %p296, %p297
      %p299 = scmp.ne.s32.totalorder %s291, %s293
      %p300 = scmp.eq.s32.totalorder %s115, 1
      %p301 = por %p299, %p300
      %p302 = scmp.ne.s32.totalorder %s293, %s294
      %p303 = scmp.eq.s32.totalorder %s115, 0
      %p304 = por %p302, %p303
      %p305 = scmp.ne.s32.totalorder %s293, %s294
      %p306 = scmp.eq.s32.totalorder %s116, 1
      %p307 = por %p305, %p306
      %p309 = scmp.ne.s32.totalorder %s294, %s308
      %p310 = scmp.eq.s32.totalorder %s116, 0
      %p311 = por %p309, %p310
      %s313 = sadd.s32 %s312, 1
      %p316 = scmp.eq.s32.totalorder %s110, 1
      %p317 = scmp.ne.s32.totalorder %s312, %s314
      %p318 = scmp.eq.s32.totalorder %s110, 0
      %p319 = por %p317, %p318
      %p320 = scmp.ne.s32.totalorder %s312, %s314
      %p321 = scmp.eq.s32.totalorder %s115, 1
      %p322 = por %p320, %p321
      %p323 = scmp.ne.s32.totalorder %s314, %s315
      %p324 = scmp.eq.s32.totalorder %s115, 0
      %p325 = por %p323, %p324
      %p326 = scmp.ne.s32.totalorder %s314, %s315
      %p327 = scmp.eq.s32.totalorder %s116, 1
      %p328 = por %p326, %p327
      %p330 = scmp.ne.s32.totalorder %s315, %s329
      %p331 = scmp.eq.s32.totalorder %s116, 0
      %p332 = por %p330, %p331
      %s334 = sadd.s32 %s333, 1
      %p337 = scmp.eq.s32.totalorder %s110, 1
      %p338 = scmp.ne.s32.totalorder %s333, %s335
      %p339 = scmp.eq.s32.totalorder %s110, 0
      %p340 = por %p338, %p339
      %p341 = scmp.ne.s32.totalorder %s333, %s335
      %p342 = scmp.eq.s32.totalorder %s115, 1
      %p343 = por %p341, %p342
      %p344 = scmp.ne.s32.totalorder %s335, %s336
      %p345 = scmp.eq.s32.totalorder %s115, 0
      %p346 = por %p344, %p345
      %p347 = scmp.ne.s32.totalorder %s335, %s336
      %p348 = scmp.eq.s32.totalorder %s116, 1
      %p349 = por %p347, %p348
      %p351 = scmp.ne.s32.totalorder %s336, %s350
      %p352 = scmp.eq.s32.totalorder %s116, 0
      %p353 = por %p351, %p352
      %s355 = sadd.s32 %s354, 1
      %p358 = scmp.eq.s32.totalorder %s110, 1
      %p359 = scmp.ne.s32.totalorder %s354, %s356
      %p360 = scmp.eq.s32.totalorder %s110, 0
      %p361 = por %p359, %p360
      %p362 = scmp.ne.s32.totalorder %s354, %s356
      %p363 = scmp.eq.s32.totalorder %s115, 1
      %p364 = por %p362, %p363
      %p365 = scmp.ne.s32.totalorder %s356, %s357
      %p366 = scmp.eq.s32.totalorder %s115, 0
      %p367 = por %p365, %p366
      %p368 = scmp.ne.s32.totalorder %s356, %s357
      %p369 = scmp.eq.s32.totalorder %s116, 1
      %p370 = por %p368, %p369
      %p372 = scmp.ne.s32.totalorder %s357, %s371
      %p373 = scmp.eq.s32.totalorder %s116, 0
      %p374 = por %p372, %p373
      %s376 = sadd.s32 %s375, 1
      %p379 = scmp.eq.s32.totalorder %s110, 1
      %p380 = scmp.ne.s32.totalorder %s375, %s377
      %p381 = scmp.eq.s32.totalorder %s110, 0
      %p382 = por %p380, %p381
      %p383 = scmp.ne.s32.totalorder %s375, %s377
      %p384 = scmp.eq.s32.totalorder %s115, 1
      %p385 = por %p383, %p384
      %p386 = scmp.ne.s32.totalorder %s377, %s378
      %p387 = scmp.eq.s32.totalorder %s115, 0
      %p388 = por %p386, %p387
      %p389 = scmp.ne.s32.totalorder %s377, %s378
      %p390 = scmp.eq.s32.totalorder %s116, 1
      %p391 = por %p389, %p390
      %p393 = scmp.ne.s32.totalorder %s378, %s392
      %p394 = scmp.eq.s32.totalorder %s116, 0
      %p395 = por %p393, %p394
      %s397 = sadd.s32 %s396, 1
      %p400 = scmp.eq.s32.totalorder %s110, 1
      %p401 = scmp.ne.s32.totalorder %s396, %s398
      %p402 = scmp.eq.s32.totalorder %s110, 0
      %p403 = por %p401, %p402
      %p404 = scmp.ne.s32.totalorder %s396, %s398
      %p405 = scmp.eq.s32.totalorder %s115, 1
      %p406 = por %p404, %p405
      %p407 = scmp.ne.s32.totalorder %s398, %s399
      %p408 = scmp.eq.s32.totalorder %s115, 0
      %p409 = por %p407, %p408
      %p410 = scmp.ne.s32.totalorder %s398, %s399
      %p411 = scmp.eq.s32.totalorder %s116, 1
      %p412 = por %p410, %p411
      %p414 = scmp.ne.s32.totalorder %s399, %s413
      %p415 = scmp.eq.s32.totalorder %s116, 0
      %p416 = por %p414, %p415
      %s418 = sadd.s32 %s417, 1
      %p421 = scmp.eq.s32.totalorder %s110, 1
      %p422 = scmp.ne.s32.totalorder %s417, %s419
      %p423 = scmp.eq.s32.totalorder %s110, 0
      %p424 = por %p422, %p423
      %p425 = scmp.ne.s32.totalorder %s417, %s419
      %p426 = scmp.eq.s32.totalorder %s115, 1
      %p427 = por %p425, %p426
      %p428 = scmp.ne.s32.totalorder %s419, %s420
      %p429 = scmp.eq.s32.totalorder %s115, 0
      %p430 = por %p428, %p429
      %p431 = scmp.ne.s32.totalorder %s419, %s420
      %p432 = scmp.eq.s32.totalorder %s116, 1
      %p433 = por %p431, %p432
      %p435 = scmp.ne.s32.totalorder %s420, %s434
      %p436 = scmp.eq.s32.totalorder %s116, 0
      %p437 = por %p435, %p436
      %s439 = sadd.s32 %s438, 1
      %p442 = scmp.eq.s32.totalorder %s110, 1
      %p443 = scmp.ne.s32.totalorder %s438, %s440
      %p444 = scmp.eq.s32.totalorder %s110, 0
      %p445 = por %p443, %p444
      %p446 = scmp.ne.s32.totalorder %s438, %s440
      %p447 = scmp.eq.s32.totalorder %s115, 1
      %p448 = por %p446, %p447
      %p449 = scmp.ne.s32.totalorder %s440, %s441
      %p450 = scmp.eq.s32.totalorder %s115, 0
      %p451 = por %p449, %p450
      %p452 = scmp.ne.s32.totalorder %s440, %s441
      %p453 = scmp.eq.s32.totalorder %s116, 1
      %p454 = por %p452, %p453
      %p456 = scmp.ne.s32.totalorder %s441, %s455
      %p457 = scmp.eq.s32.totalorder %s116, 0
      %p458 = por %p456, %p457
      %s460 = sadd.s32 %s459, 1
      %p463 = scmp.eq.s32.totalorder %s110, 1
      %p464 = scmp.ne.s32.totalorder %s459, %s461
      %p465 = scmp.eq.s32.totalorder %s110, 0
      %p466 = por %p464, %p465
      %p467 = scmp.ne.s32.totalorder %s459, %s461
      %p468 = scmp.eq.s32.totalorder %s115, 1
      %p469 = por %p467, %p468
      %p470 = scmp.ne.s32.totalorder %s461, %s462
      %p471 = scmp.eq.s32.totalorder %s115, 0
      %p472 = por %p470, %p471
      %p473 = scmp.ne.s32.totalorder %s461, %s462
      %p474 = scmp.eq.s32.totalorder %s116, 1
      %p475 = por %p473, %p474
      %p477 = scmp.ne.s32.totalorder %s462, %s476
      %p478 = scmp.eq.s32.totalorder %s116, 0
      %p479 = por %p477, %p478
      %s481 = sadd.s32 %s480, 1
      %p484 = scmp.eq.s32.totalorder %s110, 1
      %p485 = scmp.ne.s32.totalorder %s480, %s482
      %p486 = scmp.eq.s32.totalorder %s110, 0
      %p487 = por %p485, %p486
      %p488 = scmp.ne.s32.totalorder %s480, %s482
      %p489 = scmp.eq.s32.totalorder %s115, 1
      %p490 = por %p488, %p489
      %p491 = scmp.ne.s32.totalorder %s482, %s483
      %p492 = scmp.eq.s32.totalorder %s115, 0
      %p493 = por %p491, %p492
      %p494 = scmp.ne.s32.totalorder %s482, %s483
      %p495 = scmp.eq.s32.totalorder %s116, 1
      %p496 = por %p494, %p495
      %p498 = scmp.ne.s32.totalorder %s483, %s497
      %p499 = scmp.eq.s32.totalorder %s116, 0
      %p500 = por %p498, %p499
      %s502 = sadd.s32 %s501, 1
      %p505 = scmp.eq.s32.totalorder %s110, 1
      %p506 = scmp.ne.s32.totalorder %s501, %s503
      %p507 = scmp.eq.s32.totalorder %s110, 0
      %p508 = por %p506, %p507
      %p509 = scmp.ne.s32.totalorder %s501, %s503
      %p510 = scmp.eq.s32.totalorder %s115, 1
      %p511 = por %p509, %p510
      %p512 = scmp.ne.s32.totalorder %s503, %s504
      %p513 = scmp.eq.s32.totalorder %s115, 0
      %p514 = por %p512, %p513
      %p515 = scmp.ne.s32.totalorder %s503, %s504
      %p516 = scmp.eq.s32.totalorder %s116, 1
      %p517 = por %p515, %p516
      %p519 = scmp.ne.s32.totalorder %s504, %s518
      %p520 = scmp.eq.s32.totalorder %s116, 0
      %p521 = por %p519, %p520
      %s523 = sadd.s32 %s522, 1
      %p526 = scmp.eq.s32.totalorder %s110, 1
      %p527 = scmp.ne.s32.totalorder %s522, %s524
      %p528 = scmp.eq.s32.totalorder %s110, 0
      %p529 = por %p527, %p528
      %p530 = scmp.ne.s32.totalorder %s522, %s524
      %p531 = scmp.eq.s32.totalorder %s115, 1
      %p532 = por %p530, %p531
      %p533 = scmp.ne.s32.totalorder %s524, %s525
      %p534 = scmp.eq.s32.totalorder %s115, 0
      %p535 = por %p533, %p534
      %p536 = scmp.ne.s32.totalorder %s524, %s525
      %p537 = scmp.eq.s32.totalorder %s116, 1
      %p538 = por %p536, %p537
      %p540 = scmp.ne.s32.totalorder %s525, %s539
      %p541 = scmp.eq.s32.totalorder %s116, 0
      %p542 = por %p540, %p541
      %s544 = sadd.s32 %s543, 1
      %p547 = scmp.eq.s32.totalorder %s110, 1
      %p548 = scmp.ne.s32.totalorder %s543, %s545
      %p549 = scmp.eq.s32.totalorder %s110, 0
      %p550 = por %p548, %p549
      %p551 = scmp.ne.s32.totalorder %s543, %s545
      %p552 = scmp.eq.s32.totalorder %s115, 1
      %p553 = por %p551, %p552
      %p554 = scmp.ne.s32.totalorder %s545, %s546
      %p555 = scmp.eq.s32.totalorder %s115, 0
      %p556 = por %p554, %p555
      %p557 = scmp.ne.s32.totalorder %s545, %s546
      %p558 = scmp.eq.s32.totalorder %s116, 1
      %p559 = por %p557, %p558
      %p561 = scmp.ne.s32.totalorder %s546, %s560
      %p562 = scmp.eq.s32.totalorder %s116, 0
      %p563 = por %p561, %p562
      %s565 = sadd.s32 %s564, 1
      %p568 = scmp.eq.s32.totalorder %s110, 1
      %p569 = scmp.ne.s32.totalorder %s564, %s566
      %p570 = scmp.eq.s32.totalorder %s110, 0
      %p571 = por %p569, %p570
      %p572 = scmp.ne.s32.totalorder %s564, %s566
      %p573 = scmp.eq.s32.totalorder %s115, 1
      %p574 = por %p572, %p573
      %p575 = scmp.ne.s32.totalorder %s566, %s567
      %p576 = scmp.eq.s32.totalorder %s115, 0
      %p577 = por %p575, %p576
      %p578 = scmp.ne.s32.totalorder %s566, %s567
      %p579 = scmp.eq.s32.totalorder %s116, 1
      %p580 = por %p578, %p579
      %p582 = scmp.ne.s32.totalorder %s567, %s581
      %p583 = scmp.eq.s32.totalorder %s116, 0
      %p584 = por %p582, %p583
      %s586 = sadd.s32 %s585, 1
      %p589 = scmp.eq.s32.totalorder %s110, 1
      %p590 = scmp.ne.s32.totalorder %s585, %s587
      %p591 = scmp.eq.s32.totalorder %s110, 0
      %p592 = por %p590, %p591
      %p593 = scmp.ne.s32.totalorder %s585, %s587
      %p594 = scmp.eq.s32.totalorder %s115, 1
      %p595 = por %p593, %p594
      %p596 = scmp.ne.s32.totalorder %s587, %s588
      %p597 = scmp.eq.s32.totalorder %s115, 0
      %p598 = por %p596, %p597
      %p599 = scmp.ne.s32.totalorder %s587, %s588
      %p600 = scmp.eq.s32.totalorder %s116, 1
      %p601 = por %p599, %p600
      %p603 = scmp.ne.s32.totalorder %s588, %s602
      %p604 = scmp.eq.s32.totalorder %s116, 0
      %p605 = por %p603, %p604
      %s607 = sadd.s32 %s606, 1
      %p610 = scmp.eq.s32.totalorder %s110, 1
      %p611 = scmp.ne.s32.totalorder %s606, %s608
      %p612 = scmp.eq.s32.totalorder %s110, 0
      %p613 = por %p611, %p612
      %p614 = scmp.ne.s32.totalorder %s606, %s608
      %p615 = scmp.eq.s32.totalorder %s115, 1
      %p616 = por %p614, %p615
      %p617 = scmp.ne.s32.totalorder %s608, %s609
      %p618 = scmp.eq.s32.totalorder %s115, 0
      %p619 = por %p617, %p618
      %p620 = scmp.ne.s32.totalorder %s608, %s609
      %p621 = scmp.eq.s32.totalorder %s116, 1
      %p622 = por %p620, %p621
      %p624 = scmp.ne.s32.totalorder %s609, %s623
      %p625 = scmp.eq.s32.totalorder %s116, 0
      %p626 = por %p624, %p625
      %s628 = sadd.s32 %s627, 1
      %p631 = scmp.eq.s32.totalorder %s110, 1
      %p632 = scmp.ne.s32.totalorder %s627, %s629
      %p633 = scmp.eq.s32.totalorder %s110, 0
      %p634 = por %p632, %p633
      %p635 = scmp.ne.s32.totalorder %s627, %s629
      %p636 = scmp.eq.s32.totalorder %s115, 1
      %p637 = por %p635, %p636
      %p638 = scmp.ne.s32.totalorder %s629, %s630
      %p639 = scmp.eq.s32.totalorder %s115, 0
      %p640 = por %p638, %p639
      %p641 = scmp.ne.s32.totalorder %s629, %s630
      %p642 = scmp.eq.s32.totalorder %s116, 1
      %p643 = por %p641, %p642
      %p645 = scmp.ne.s32.totalorder %s630, %s644
      %p646 = scmp.eq.s32.totalorder %s116, 0
      %p647 = por %p645, %p646
      %s649 = sadd.s32 %s648, 1
      %p652 = scmp.eq.s32.totalorder %s110, 1
      %p653 = scmp.ne.s32.totalorder %s648, %s650
      %p654 = scmp.eq.s32.totalorder %s110, 0
      %p655 = por %p653, %p654
      %p656 = scmp.ne.s32.totalorder %s648, %s650
      %p657 = scmp.eq.s32.totalorder %s115, 1
      %p658 = por %p656, %p657
      %p659 = scmp.ne.s32.totalorder %s650, %s651
      %p660 = scmp.eq.s32.totalorder %s115, 0
      %p661 = por %p659, %p660
      %p662 = scmp.ne.s32.totalorder %s650, %s651
      %p663 = scmp.eq.s32.totalorder %s116, 1
      %p664 = por %p662, %p663
      %p666 = scmp.ne.s32.totalorder %s651, %s665
      %p667 = scmp.eq.s32.totalorder %s116, 0
      %p668 = por %p666, %p667
      %s670 = sadd.s32 %s669, 1
      %p673 = scmp.eq.s32.totalorder %s110, 1
      %p674 = scmp.ne.s32.totalorder %s669, %s671
      %p675 = scmp.eq.s32.totalorder %s110, 0
      %p676 = por %p674, %p675
      %p677 = scmp.ne.s32.totalorder %s669, %s671
      %p678 = scmp.eq.s32.totalorder %s115, 1
      %p679 = por %p677, %p678
      %p680 = scmp.ne.s32.totalorder %s671, %s672
      %p681 = scmp.eq.s32.totalorder %s115, 0
      %p682 = por %p680, %p681
      %p683 = scmp.ne.s32.totalorder %s671, %s672
      %p684 = scmp.eq.s32.totalorder %s116, 1
      %p685 = por %p683, %p684
      %p687 = scmp.ne.s32.totalorder %s672, %s686
      %p688 = scmp.eq.s32.totalorder %s116, 0
      %p689 = por %p687, %p688
      %s691 = sadd.s32 %s690, 1
      %p694 = scmp.eq.s32.totalorder %s110, 1
      %p695 = scmp.ne.s32.totalorder %s690, %s692
      %p696 = scmp.eq.s32.totalorder %s110, 0
      %p697 = por %p695, %p696
      %p698 = scmp.ne.s32.totalorder %s690, %s692
      %p699 = scmp.eq.s32.totalorder %s115, 1
      %p700 = por %p698, %p699
      %p701 = scmp.ne.s32.totalorder %s692, %s693
      %p702 = scmp.eq.s32.totalorder %s115, 0
      %p703 = por %p701, %p702
      %p704 = scmp.ne.s32.totalorder %s692, %s693
      %p705 = scmp.eq.s32.totalorder %s116, 1
      %p706 = por %p704, %p705
      %p708 = scmp.ne.s32.totalorder %s693, %s707
      %p709 = scmp.eq.s32.totalorder %s116, 0
      %p710 = por %p708, %p709
      %s712 = sadd.s32 %s711, 1
      %p715 = scmp.eq.s32.totalorder %s110, 1
      %p716 = scmp.ne.s32.totalorder %s711, %s713
      %p717 = scmp.eq.s32.totalorder %s110, 0
      %p718 = por %p716, %p717
      %p719 = scmp.ne.s32.totalorder %s711, %s713
      %p720 = scmp.eq.s32.totalorder %s115, 1
      %p721 = por %p719, %p720
      %p722 = scmp.ne.s32.totalorder %s713, %s714
      %p723 = scmp.eq.s32.totalorder %s115, 0
      %p724 = por %p722, %p723
      %p725 = scmp.ne.s32.totalorder %s713, %s714
      %p726 = scmp.eq.s32.totalorder %s116, 1
      %p727 = por %p725, %p726
      %p729 = scmp.ne.s32.totalorder %s714, %s728
      %p730 = scmp.eq.s32.totalorder %s116, 0
      %p731 = por %p729, %p730
      %s733 = sadd.s32 %s732, 1
      %p736 = scmp.eq.s32.totalorder %s110, 1
      %p737 = scmp.ne.s32.totalorder %s732, %s734
      %p738 = scmp.eq.s32.totalorder %s110, 0
      %p739 = por %p737, %p738
      %p740 = scmp.ne.s32.totalorder %s732, %s734
      %p741 = scmp.eq.s32.totalorder %s115, 1
      %p742 = por %p740, %p741
      %p743 = scmp.ne.s32.totalorder %s734, %s735
      %p744 = scmp.eq.s32.totalorder %s115, 0
      %p745 = por %p743, %p744
      %p746 = scmp.ne.s32.totalorder %s734, %s735
      %p747 = scmp.eq.s32.totalorder %s116, 1
      %p748 = por %p746, %p747
      %p750 = scmp.ne.s32.totalorder %s735, %s749
      %p751 = scmp.eq.s32.totalorder %s116, 0
      %p752 = por %p750, %p751
      %s754 = sadd.s32 %s753, 1
      %p757 = scmp.eq.s32.totalorder %s110, 1
      %p758 = scmp.ne.s32.totalorder %s753, %s755
      %p759 = scmp.eq.s32.totalorder %s110, 0
      %p760 = por %p758, %p759
      %p761 = scmp.ne.s32.totalorder %s753, %s755
      %p762 = scmp.eq.s32.totalorder %s115, 1
      %p763 = por %p761, %p762
      %p764 = scmp.ne.s32.totalorder %s755, %s756
      %p765 = scmp.eq.s32.totalorder %s115, 0
      %p766 = por %p764, %p765
      %p767 = scmp.ne.s32.totalorder %s755, %s756
      %p768 = scmp.eq.s32.totalorder %s116, 1
      %p769 = por %p767, %p768
      %p771 = scmp.ne.s32.totalorder %s756, %s770
      %p772 = scmp.eq.s32.totalorder %s116, 0
      %p773 = por %p771, %p772
      %s775 = sadd.s32 %s774, 1
      %p778 = scmp.eq.s32.totalorder %s110, 1
      %p779 = scmp.ne.s32.totalorder %s774, %s776
      %p780 = scmp.eq.s32.totalorder %s110, 0
      %p781 = por %p779, %p780
      %p782 = scmp.ne.s32.totalorder %s774, %s776
      %p783 = scmp.eq.s32.totalorder %s115, 1
      %p784 = por %p782, %p783
      %p785 = scmp.ne.s32.totalorder %s776, %s777
      %p786 = scmp.eq.s32.totalorder %s115, 0
      %p787 = por %p785, %p786
      %p788 = scmp.ne.s32.totalorder %s776, %s777
      %p789 = scmp.eq.s32.totalorder %s116, 1
      %p790 = por %p788, %p789
      %p792 = scmp.ne.s32.totalorder %s777, %s791
      %p793 = scmp.eq.s32.totalorder %s116, 0
      %p794 = por %p792, %p793
      %s796 = sadd.s32 %s795, 1
      %p799 = scmp.eq.s32.totalorder %s110, 1
      %p800 = scmp.ne.s32.totalorder %s795, %s797
      %p801 = scmp.eq.s32.totalorder %s110, 0
      %p802 = por %p800, %p801
      %p803 = scmp.ne.s32.totalorder %s795, %s797
      %p804 = scmp.eq.s32.totalorder %s115, 1
      %p805 = por %p803, %p804
      %p806 = scmp.ne.s32.totalorder %s797, %s798
      %p807 = scmp.eq.s32.totalorder %s115, 0
      %p808 = por %p806, %p807
      %p809 = scmp.ne.s32.totalorder %s797, %s798
      %p810 = scmp.eq.s32.totalorder %s116, 1
      %p811 = por %p809, %p810
      %p813 = scmp.ne.s32.totalorder %s798, %s812
      %p814 = scmp.eq.s32.totalorder %s116, 0
      %p815 = por %p813, %p814
      %s817 = sadd.s32 %s816, 1
      %p820 = scmp.eq.s32.totalorder %s110, 1
      %p821 = scmp.ne.s32.totalorder %s816, %s818
      %p822 = scmp.eq.s32.totalorder %s110, 0
      %p823 = por %p821, %p822
      %p824 = scmp.ne.s32.totalorder %s816, %s818
      %p825 = scmp.eq.s32.totalorder %s115, 1
      %p826 = por %p824, %p825
      %p827 = scmp.ne.s32.totalorder %s818, %s819
      %p828 = scmp.eq.s32.totalorder %s115, 0
      %p829 = por %p827, %p828
      %p830 = scmp.ne.s32.totalorder %s818, %s819
      %p831 = scmp.eq.s32.totalorder %s116, 1
      %p832 = por %p830, %p831
      %p834 = scmp.ne.s32.totalorder %s819, %s833
      %p835 = scmp.eq.s32.totalorder %s116, 0
      %p836 = por %p834, %p835
      %s838 = sadd.s32 %s837, 1
      %p841 = scmp.eq.s32.totalorder %s110, 1
      %p842 = scmp.ne.s32.totalorder %s837, %s839
      %p843 = scmp.eq.s32.totalorder %s110, 0
      %p844 = por %p842, %p843
      %p845 = scmp.ne.s32.totalorder %s837, %s839
      %p846 = scmp.eq.s32.totalorder %s115, 1
      %p847 = por %p845, %p846
      %p848 = scmp.ne.s32.totalorder %s839, %s840
      %p849 = scmp.eq.s32.totalorder %s115, 0
      %p850 = por %p848, %p849
      %p851 = scmp.ne.s32.totalorder %s839, %s840
      %p852 = scmp.eq.s32.totalorder %s116, 1
      %p853 = por %p851, %p852
      %p855 = scmp.ne.s32.totalorder %s840, %s854
      %p856 = scmp.eq.s32.totalorder %s116, 0
      %p857 = por %p855, %p856
      %s859 = sadd.s32 %s858, 1
      %p862 = scmp.eq.s32.totalorder %s110, 1
      %p863 = scmp.ne.s32.totalorder %s858, %s860
      %p864 = scmp.eq.s32.totalorder %s110, 0
      %p865 = por %p863, %p864
      %p866 = scmp.ne.s32.totalorder %s858, %s860
      %p867 = scmp.eq.s32.totalorder %s115, 1
      %p868 = por %p866, %p867
      %p869 = scmp.ne.s32.totalorder %s860, %s861
      %p870 = scmp.eq.s32.totalorder %s115, 0
      %p871 = por %p869, %p870
      %p872 = scmp.ne.s32.totalorder %s860, %s861
      %p873 = scmp.eq.s32.totalorder %s116, 1
      %p874 = por %p872, %p873
      %p876 = scmp.ne.s32.totalorder %s861, %s875
      %p877 = scmp.eq.s32.totalorder %s116, 0
      %p878 = por %p876, %p877
      %s880 = sadd.s32 %s879, 1
      %p883 = scmp.eq.s32.totalorder %s110, 1
      %p884 = scmp.ne.s32.totalorder %s879, %s881
      %p885 = scmp.eq.s32.totalorder %s110, 0
      %p886 = por %p884, %p885
      %p887 = scmp.ne.s32.totalorder %s879, %s881
      %p888 = scmp.eq.s32.totalorder %s115, 1
      %p889 = por %p887, %p888
      %p890 = scmp.ne.s32.totalorder %s881, %s882
      %p891 = scmp.eq.s32.totalorder %s115, 0
      %p892 = por %p890, %p891
      %p893 = scmp.ne.s32.totalorder %s881, %s882
      %p894 = scmp.eq.s32.totalorder %s116, 1
      %p895 = por %p893, %p894
      %p897 = scmp.ne.s32.totalorder %s882, %s896
      %p898 = scmp.eq.s32.totalorder %s116, 0
      %p899 = por %p897, %p898
      %s901 = sadd.s32 %s900, 1
      %p904 = scmp.eq.s32.totalorder %s110, 1
      %p905 = scmp.ne.s32.totalorder %s900, %s902
      %p906 = scmp.eq.s32.totalorder %s110, 0
      %p907 = por %p905, %p906
      %p908 = scmp.ne.s32.totalorder %s900, %s902
      %p909 = scmp.eq.s32.totalorder %s115, 1
      %p910 = por %p908, %p909
      %p911 = scmp.ne.s32.totalorder %s902, %s903
      %p912 = scmp.eq.s32.totalorder %s115, 0
      %p913 = por %p911, %p912
      %p914 = scmp.ne.s32.totalorder %s902, %s903
      %p915 = scmp.eq.s32.totalorder %s116, 1
      %p916 = por %p914, %p915
      %p918 = scmp.ne.s32.totalorder %s903, %s917
      %p919 = scmp.eq.s32.totalorder %s116, 0
      %p920 = por %p918, %p919
      %s922 = sadd.s32 %s921, 1
      %p925 = scmp.eq.s32.totalorder %s110, 1
      %p926 = scmp.ne.s32.totalorder %s921, %s923
      %p927 = scmp.eq.s32.totalorder %s110, 0
      %p928 = por %p926, %p927
      %p929 = scmp.ne.s32.totalorder %s921, %s923
      %p930 = scmp.eq.s32.totalorder %s115, 1
      %p931 = por %p929, %p930
      %p932 = scmp.ne.s32.totalorder %s923, %s924
      %p933 = scmp.eq.s32.totalorder %s115, 0
      %p934 = por %p932, %p933
      %p935 = scmp.ne.s32.totalorder %s923, %s924
      %p936 = scmp.eq.s32.totalorder %s116, 1
      %p937 = por %p935, %p936
      %p939 = scmp.ne.s32.totalorder %s924, %s938
      %p940 = scmp.eq.s32.totalorder %s116, 0
      %p941 = por %p939, %p940
      %s943 = sadd.s32 %s942, 1
      %p946 = scmp.eq.s32.totalorder %s110, 1
      %p947 = scmp.ne.s32.totalorder %s942, %s944
      %p948 = scmp.eq.s32.totalorder %s110, 0
      %p949 = por %p947, %p948
      %p950 = scmp.ne.s32.totalorder %s942, %s944
      %p951 = scmp.eq.s32.totalorder %s115, 1
      %p952 = por %p950, %p951
      %p953 = scmp.ne.s32.totalorder %s944, %s945
      %p954 = scmp.eq.s32.totalorder %s115, 0
      %p955 = por %p953, %p954
      %p956 = scmp.ne.s32.totalorder %s944, %s945
      %p957 = scmp.eq.s32.totalorder %s116, 1
      %p958 = por %p956, %p957
      %p960 = scmp.ne.s32.totalorder %s945, %s959
      %p961 = scmp.eq.s32.totalorder %s116, 0
      %p962 = por %p960, %p961
      %s964 = sadd.s32 %s963, 1
      %p967 = scmp.eq.s32.totalorder %s110, 1
      %p968 = scmp.ne.s32.totalorder %s963, %s965
      %p969 = scmp.eq.s32.totalorder %s110, 0
      %p970 = por %p968, %p969
      %p971 = scmp.ne.s32.totalorder %s963, %s965
      %p972 = scmp.eq.s32.totalorder %s115, 1
      %p973 = por %p971, %p972
      %p974 = scmp.ne.s32.totalorder %s965, %s966
      %p975 = scmp.eq.s32.totalorder %s115, 0
      %p976 = por %p974, %p975
      %p977 = scmp.ne.s32.totalorder %s965, %s966
      %p978 = scmp.eq.s32.totalorder %s116, 1
      %p979 = por %p977, %p978
      %p981 = scmp.ne.s32.totalorder %s966, %s980
      %p982 = scmp.eq.s32.totalorder %s116, 0
      %p983 = por %p981, %p982
      %s985 = sadd.s32 %s984, 1
      %p988 = scmp.eq.s32.totalorder %s110, 1
      %p989 = scmp.ne.s32.totalorder %s984, %s986
      %p990 = scmp.eq.s32.totalorder %s110, 0
      %p991 = por %p989, %p990
      %p992 = scmp.ne.s32.totalorder %s984, %s986
      %p993 = scmp.eq.s32.totalorder %s115, 1
      %p994 = por %p992, %p993
      %p995 = scmp.ne.s32.totalorder %s986, %s987
      %p996 = scmp.eq.s32.totalorder %s115, 0
      %p997 = por %p995, %p996
      %p998 = scmp.ne.s32.totalorder %s986, %s987
      %p999 = scmp.eq.s32.totalorder %s116, 1
      %p1000 = por %p998, %p999
      %p1002 = scmp.ne.s32.totalorder %s987, %s1001
      %p1003 = scmp.eq.s32.totalorder %s116, 0
      %p1004 = por %p1002, %p1003
      %s1006 = sadd.s32 %s1005, 1
      %p1009 = scmp.eq.s32.totalorder %s110, 1
      %p1010 = scmp.ne.s32.totalorder %s1005, %s1007
      %p1011 = scmp.eq.s32.totalorder %s110, 0
      %p1012 = por %p1010, %p1011
      %p1013 = scmp.ne.s32.totalorder %s1005, %s1007
      %p1014 = scmp.eq.s32.totalorder %s115, 1
      %p1015 = por %p1013, %p1014
      %p1016 = scmp.ne.s32.totalorder %s1007, %s1008
      %p1017 = scmp.eq.s32.totalorder %s115, 0
      %p1018 = por %p1016, %p1017
      %p1019 = scmp.ne.s32.totalorder %s1007, %s1008
      %p1020 = scmp.eq.s32.totalorder %s116, 1
      %p1021 = por %p1019, %p1020
      %p1023 = scmp.ne.s32.totalorder %s1008, %s1022
      %p1024 = scmp.eq.s32.totalorder %s116, 0
      %p1025 = por %p1023, %p1024
      %s1027 = sadd.s32 %s1026, 1
      %p1030 = scmp.eq.s32.totalorder %s110, 1
      %p1031 = scmp.ne.s32.totalorder %s1026, %s1028
      %p1032 = scmp.eq.s32.totalorder %s110, 0
      %p1033 = por %p1031, %p1032
      %p1034 = scmp.ne.s32.totalorder %s1026, %s1028
      %p1035 = scmp.eq.s32.totalorder %s115, 1
      %p1036 = por %p1034, %p1035
      %p1037 = scmp.ne.s32.totalorder %s1028, %s1029
      %p1038 = scmp.eq.s32.totalorder %s115, 0
      %p1039 = por %p1037, %p1038
      %p1040 = scmp.ne.s32.totalorder %s1028, %s1029
      %p1041 = scmp.eq.s32.totalorder %s116, 1
      %p1042 = por %p1040, %p1041
      %p1044 = scmp.ne.s32.totalorder %s1029, %s1043
      %p1045 = scmp.eq.s32.totalorder %s116, 0
      %p1046 = por %p1044, %p1045
      %s1048 = sadd.s32 %s1047, 1
      %p1051 = scmp.eq.s32.totalorder %s110, 1
      %p1052 = scmp.ne.s32.totalorder %s1047, %s1049
      %p1053 = scmp.eq.s32.totalorder %s110, 0
      %p1054 = por %p1052, %p1053
      %p1055 = scmp.ne.s32.totalorder %s1047, %s1049
      %p1056 = scmp.eq.s32.totalorder %s115, 1
      %p1057 = por %p1055, %p1056
      %p1058 = scmp.ne.s32.totalorder %s1049, %s1050
      %p1059 = scmp.eq.s32.totalorder %s115, 0
      %p1060 = por %p1058, %p1059
      %p1061 = scmp.ne.s32.totalorder %s1049, %s1050
      %p1062 = scmp.eq.s32.totalorder %s116, 1
      %p1063 = por %p1061, %p1062
      %p1065 = scmp.ne.s32.totalorder %s1050, %s1064
      %p1066 = scmp.eq.s32.totalorder %s116, 0
      %p1067 = por %p1065, %p1066
      %s1068 = ssub.s32 %s110, %s117
      %p1069 = scmp.eq.s32.totalorder %s1068, 0
      %s1071 = sadd.s32 %s1070, 1
      %s1072 = scalar_select %p1069, %s1070, %s1071
      %p1075 = pneg %p1069
      %p1076 = scmp.eq.s32.totalorder %s110, 1
      %p1077 = por %p1075, %p1076
      %p1078 = scmp.ne.s32.totalorder %s1070, %s1073
      %p1079 = scmp.eq.s32.totalorder %s110, 0
      %p1080 = por %p1078, %p1079
      %p1081 = scmp.ne.s32.totalorder %s1070, %s1073
      %p1082 = scmp.eq.s32.totalorder %s115, 1
      %p1083 = por %p1081, %p1082
      %p1084 = scmp.ne.s32.totalorder %s1073, %s1074
      %p1085 = scmp.eq.s32.totalorder %s115, 0
      %p1086 = por %p1084, %p1085
      %p1087 = scmp.ne.s32.totalorder %s1073, %s1074
      %p1088 = scmp.eq.s32.totalorder %s116, 1
      %p1089 = por %p1087, %p1088
      %p1091 = scmp.ne.s32.totalorder %s1074, %s1090
      %p1092 = scmp.eq.s32.totalorder %s116, 0
      %p1093 = por %p1091, %p1092
      %p1094 = scmp.le.s32.totalorder 1, %s110
      %p1095 = scmp.lt.s32.totalorder %s110, 3
      %p1096 = pnand %p1094, %p1095
      %p1097 = pneg %p1096
      // Predicated region
      $region9: #{tpu_custom_call.1} parent=5 // pred_check
        _
      $region10: #{tpu_custom_call.1} parent=5 // pred_check_branch
        %1099 = sbr.rel (%p1096) target = $region12
      $region11: #{tpu_custom_call.1} parent=5 // pred_region
        %s1100 = ssub.s32 %s110, 1
        // Predicated region
        $region13: #{tpu_custom_call.1} parent=11 // pred_check
          %p1101 = pneg %p157
        $region14: #{tpu_custom_call.1} parent=11 // pred_check_branch
          %1103 = sbr.rel (%p1101) target = $region16
        $region15: #{tpu_custom_call.1} parent=11 // pred_region
          _
        $region16: #{tpu_custom_call.1} parent=11 // pred_fallthru
          _
        // Predicated region
        $region17: #{tpu_custom_call.1} parent=11 // pred_check
          %p1104 = pneg %p178
        $region18: #{tpu_custom_call.1} parent=11 // pred_check_branch
          %1106 = sbr.rel (%p1104) target = $region20
        $region19: #{tpu_custom_call.1} parent=11 // pred_region
          %1108 = vsyncadd [#allocation3], 0
          %s1110 = sshll.u32 %s5, 4
          %s1111 = int_to_ptr.hbm [resolvable:$true] %s1110
          %s1112 = sshll.u32 [#allocation2], 4
          %s1113 = int_to_ptr.vmem [resolvable:$true] %s1112
          %1115 = dma.hbm_to_vmem [thread:$0]  %s1111, 32, %s1113, [#allocation3]
        $region20: #{tpu_custom_call.1} parent=11 // pred_fallthru
          _
        // Predicated region
        $region21: #{tpu_custom_call.1} parent=11 // pred_check
          %p1116 = pneg %p199
        $region22: #{tpu_custom_call.1} parent=11 // pred_check_branch
          %1118 = sbr.rel (%p1116) target = $region24
        $region23: #{tpu_custom_call.1} parent=11 // pred_region
          %1120 = vsyncadd [#allocation5], 0
          %s1122 = sshll.u32 %s7, 4
          %s1123 = int_to_ptr.hbm [resolvable:$true] %s1122
          %s1124 = sshll.u32 [#allocation4], 4
          %s1125 = int_to_ptr.vmem [resolvable:$true] %s1124
          %1127 = dma.hbm_to_vmem [thread:$0]  %s1123, 32, %s1125, [#allocation5]
        $region24: #{tpu_custom_call.1} parent=11 // pred_fallthru
          _
        // Predicated region
        $region25: #{tpu_custom_call.1} parent=11 // pred_check
          %p1128 = pneg %p220
        $region26: #{tpu_custom_call.1} parent=11 // pred_check_branch
          %1130 = sbr.rel (%p1128) target = $region28
        $region27: #{tpu_custom_call.1} parent=11 // pred_region
          _
        $region28: #{tpu_custom_call.1} parent=11 // pred_fallthru
          _
        // Predicated region
        $region29: #{tpu_custom_call.1} parent=11 // pred_check
          %p1131 = pneg %p241
        $region30: #{tpu_custom_call.1} parent=11 // pred_check_branch
          %1133 = sbr.rel (%p1131) target = $region32
        $region31: #{tpu_custom_call.1} parent=11 // pred_region
          _
        $region32: #{tpu_custom_call.1} parent=11 // pred_fallthru
          _
        // Predicated region
        $region33: #{tpu_custom_call.1} parent=11 // pred_check
          %p1134 = pneg %p262
        $region34: #{tpu_custom_call.1} parent=11 // pred_check_branch
          %1136 = sbr.rel (%p1134) target = $region36
        $region35: #{tpu_custom_call.1} parent=11 // pred_region
          %1138 = vsyncadd [#allocation5], 0
          %s1140 = sshll.u32 %s13, 4
          %s1141 = int_to_ptr.hbm [resolvable:$true] %s1140
          %s1142 = sshll.u32 [#allocation6], 4
          %s1143 = int_to_ptr.vmem [resolvable:$true] %s1142
          %1145 = dma.hbm_to_vmem [thread:$0]  %s1141, 16, %s1143, [#allocation5]
        $region36: #{tpu_custom_call.1} parent=11 // pred_fallthru
          _
        // Predicated region
        $region37: #{tpu_custom_call.1} parent=11 // pred_check
          %p1146 = pneg %p283
        $region38: #{tpu_custom_call.1} parent=11 // pred_check_branch
          %1148 = sbr.rel (%p1146) target = $region40
        $region39: #{tpu_custom_call.1} parent=11 // pred_region
          %1150 = vsyncadd [#allocation8], 0
          %s1152 = sshll.u32 %s15, 4
          %s1153 = int_to_ptr.hbm [resolvable:$true] %s1152
          %s1154 = sshll.u32 [#allocation7], 4
          %s1155 = int_to_ptr.vmem [resolvable:$true] %s1154
          %1157 = dma.hbm_to_vmem [thread:$0]  %s1153, 16, %s1155, [#allocation8]
        $region40: #{tpu_custom_call.1} parent=11 // pred_fallthru
          _
        // Predicated region
        $region41: #{tpu_custom_call.1} parent=11 // pred_check
          %p1158 = pneg %p304
        $region42: #{tpu_custom_call.1} parent=11 // pred_check_branch
          %1160 = sbr.rel (%p1158) target = $region44
        $region43: #{tpu_custom_call.1} parent=11 // pred_region
          %1162 = vsyncadd [#allocation8], 0
          %s1164 = sshll.u32 %s17, 4
          %s1165 = int_to_ptr.hbm [resolvable:$true] %s1164
          %s1166 = sshll.u32 [#allocation9], 4
          %s1167 = int_to_ptr.vmem [resolvable:$true] %s1166
          %1169 = dma.hbm_to_vmem [thread:$0]  %s1165, 16, %s1167, [#allocation8]
        $region44: #{tpu_custom_call.1} parent=11 // pred_fallthru
          _
        // Predicated region
        $region45: #{tpu_custom_call.1} parent=11 // pred_check
          %p1170 = pneg %p325
        $region46: #{tpu_custom_call.1} parent=11 // pred_check_branch
          %1172 = sbr.rel (%p1170) target = $region48
        $region47: #{tpu_custom_call.1} parent=11 // pred_region
          _
        $region48: #{tpu_custom_call.1} parent=11 // pred_fallthru
          _
        // Predicated region
        $region49: #{tpu_custom_call.1} parent=11 // pred_check
          %p1173 = pneg %p346
        $region50: #{tpu_custom_call.1} parent=11 // pred_check_branch
          %1175 = sbr.rel (%p1173) target = $region52
        $region51: #{tpu_custom_call.1} parent=11 // pred_region
          %1177 = vsyncadd [#allocation11], 0
          %s1179 = sshll.u32 %s21, 4
          %s1180 = int_to_ptr.hbm [resolvable:$true] %s1179
          %s1181 = sshll.u32 [#allocation10], 4
          %s1182 = int_to_ptr.vmem [resolvable:$true] %s1181
          %1184 = dma.hbm_to_vmem [thread:$0]  %s1180, 16, %s1182, [#allocation11]
        $region52: #{tpu_custom_call.1} parent=11 // pred_fallthru
          _
        // Predicated region
        $region53: #{tpu_custom_call.1} parent=11 // pred_check
          %p1185 = pneg %p367
        $region54: #{tpu_custom_call.1} parent=11 // pred_check_branch
          %1187 = sbr.rel (%p1185) target = $region56
        $region55: #{tpu_custom_call.1} parent=11 // pred_region
          %1189 = vsyncadd [#allocation11], 0
          %s1191 = sshll.u32 %s23, 4
          %s1192 = int_to_ptr.hbm [resolvable:$true] %s1191
          %s1193 = sshll.u32 [#allocation12], 4
          %s1194 = int_to_ptr.vmem [resolvable:$true] %s1193
          %1196 = dma.hbm_to_vmem [thread:$0]  %s1192, 16, %s1194, [#allocation11]
        $region56: #{tpu_custom_call.1} parent=11 // pred_fallthru
          _
        // Predicated region
        $region57: #{tpu_custom_call.1} parent=11 // pred_check
          %p1197 = pneg %p388
        $region58: #{tpu_custom_call.1} parent=11 // pred_check_branch
          %1199 = sbr.rel (%p1197) target = $region60
        $region59: #{tpu_custom_call.1} parent=11 // pred_region
          %1201 = vsyncadd [#allocation14], 0
          %s1203 = sshll.u32 %s25, 4
          %s1204 = int_to_ptr.hbm [resolvable:$true] %s1203
          %s1205 = sshll.u32 [#allocation13], 4
          %s1206 = int_to_ptr.vmem [resolvable:$true] %s1205
          %1208 = dma.hbm_to_vmem [thread:$0]  %s1204, 16, %s1206, [#allocation14]
        $region60: #{tpu_custom_call.1} parent=11 // pred_fallthru
          _
        // Predicated region
        $region61: #{tpu_custom_call.1} parent=11 // pred_check
          %p1209 = pneg %p409
        $region62: #{tpu_custom_call.1} parent=11 // pred_check_branch
          %1211 = sbr.rel (%p1209) target = $region64
        $region63: #{tpu_custom_call.1} parent=11 // pred_region
          _
        $region64: #{tpu_custom_call.1} parent=11 // pred_fallthru
          _
        // Predicated region
        $region65: #{tpu_custom_call.1} parent=11 // pred_check
          %p1212 = pneg %p430
        $region66: #{tpu_custom_call.1} parent=11 // pred_check_branch
          %1214 = sbr.rel (%p1212) target = $region68
        $region67: #{tpu_custom_call.1} parent=11 // pred_region
          %1216 = vsyncadd [#allocation14], 0
          %s1218 = sshll.u32 %s29, 4
          %s1219 = int_to_ptr.hbm [resolvable:$true] %s1218
          %s1220 = sshll.u32 [#allocation15], 4
          %s1221 = int_to_ptr.vmem [resolvable:$true] %s1220
          %1223 = dma.hbm_to_vmem [thread:$0]  %s1219, 16, %s1221, [#allocation14]
        $region68: #{tpu_custom_call.1} parent=11 // pred_fallthru
          _
        // Predicated region
        $region69: #{tpu_custom_call.1} parent=11 // pred_check
          %p1224 = pneg %p451
        $region70: #{tpu_custom_call.1} parent=11 // pred_check_branch
          %1226 = sbr.rel (%p1224) target = $region72
        $region71: #{tpu_custom_call.1} parent=11 // pred_region
          %1228 = vsyncadd [#allocation17], 0
          %s1230 = sshll.u32 %s31, 4
          %s1231 = int_to_ptr.hbm [resolvable:$true] %s1230
          %s1232 = sshll.u32 [#allocation16], 4
          %s1233 = int_to_ptr.vmem [resolvable:$true] %s1232
          %1235 = dma.hbm_to_vmem [thread:$0]  %s1231, 16, %s1233, [#allocation17]
        $region72: #{tpu_custom_call.1} parent=11 // pred_fallthru
          _
        // Predicated region
        $region73: #{tpu_custom_call.1} parent=11 // pred_check
          %p1236 = pneg %p472
        $region74: #{tpu_custom_call.1} parent=11 // pred_check_branch
          %1238 = sbr.rel (%p1236) target = $region76
        $region75: #{tpu_custom_call.1} parent=11 // pred_region
          %1240 = vsyncadd [#allocation17], 0
          %s1242 = sshll.u32 %s33, 4
          %s1243 = int_to_ptr.hbm [resolvable:$true] %s1242
          %s1244 = sshll.u32 [#allocation18], 4
          %s1245 = int_to_ptr.vmem [resolvable:$true] %s1244
          %1247 = dma.hbm_to_vmem [thread:$0]  %s1243, 16, %s1245, [#allocation17]
        $region76: #{tpu_custom_call.1} parent=11 // pred_fallthru
          _
        // Predicated region
        $region77: #{tpu_custom_call.1} parent=11 // pred_check
          %p1248 = pneg %p493
        $region78: #{tpu_custom_call.1} parent=11 // pred_check_branch
          %1250 = sbr.rel (%p1248) target = $region80
        $region79: #{tpu_custom_call.1} parent=11 // pred_region
          _
        $region80: #{tpu_custom_call.1} parent=11 // pred_fallthru
          _
        // Predicated region
        $region81: #{tpu_custom_call.1} parent=11 // pred_check
          %p1251 = pneg %p514
        $region82: #{tpu_custom_call.1} parent=11 // pred_check_branch
          %1253 = sbr.rel (%p1251) target = $region84
        $region83: #{tpu_custom_call.1} parent=11 // pred_region
          %1255 = vsyncadd [#allocation20], 0
          %s1257 = sshll.u32 %s37, 4
          %s1258 = int_to_ptr.hbm [resolvable:$true] %s1257
          %s1259 = sshll.u32 [#allocation19], 4
          %s1260 = int_to_ptr.vmem [resolvable:$true] %s1259
          %1262 = dma.hbm_to_vmem [thread:$0]  %s1258, 16, %s1260, [#allocation20]
        $region84: #{tpu_custom_call.1} parent=11 // pred_fallthru
          _
        // Predicated region
        $region85: #{tpu_custom_call.1} parent=11 // pred_check
          %p1263 = pneg %p535
        $region86: #{tpu_custom_call.1} parent=11 // pred_check_branch
          %1265 = sbr.rel (%p1263) target = $region88
        $region87: #{tpu_custom_call.1} parent=11 // pred_region
          %1267 = vsyncadd [#allocation20], 0
          %s1269 = sshll.u32 %s39, 4
          %s1270 = int_to_ptr.hbm [resolvable:$true] %s1269
          %s1271 = sshll.u32 [#allocation21], 4
          %s1272 = int_to_ptr.vmem [resolvable:$true] %s1271
          %1274 = dma.hbm_to_vmem [thread:$0]  %s1270, 16, %s1272, [#allocation20]
        $region88: #{tpu_custom_call.1} parent=11 // pred_fallthru
          _
        // Predicated region
        $region89: #{tpu_custom_call.1} parent=11 // pred_check
          %p1275 = pneg %p556
        $region90: #{tpu_custom_call.1} parent=11 // pred_check_branch
          %1277 = sbr.rel (%p1275) target = $region92
        $region91: #{tpu_custom_call.1} parent=11 // pred_region
          %1279 = vsyncadd [#allocation23], 0
          %s1281 = sshll.u32 %s41, 4
          %s1282 = int_to_ptr.hbm [resolvable:$true] %s1281
          %s1283 = sshll.u32 [#allocation22], 4
          %s1284 = int_to_ptr.vmem [resolvable:$true] %s1283
          %1286 = dma.hbm_to_vmem [thread:$0]  %s1282, 16, %s1284, [#allocation23]
        $region92: #{tpu_custom_call.1} parent=11 // pred_fallthru
          _
        // Predicated region
        $region93: #{tpu_custom_call.1} parent=11 // pred_check
          %p1287 = pneg %p577
        $region94: #{tpu_custom_call.1} parent=11 // pred_check_branch
          %1289 = sbr.rel (%p1287) target = $region96
        $region95: #{tpu_custom_call.1} parent=11 // pred_region
          _
        $region96: #{tpu_custom_call.1} parent=11 // pred_fallthru
          _
        // Predicated region
        $region97: #{tpu_custom_call.1} parent=11 // pred_check
          %p1290 = pneg %p598
        $region98: #{tpu_custom_call.1} parent=11 // pred_check_branch
          %1292 = sbr.rel (%p1290) target = $region100
        $region99: #{tpu_custom_call.1} parent=11 // pred_region
          %1294 = vsyncadd [#allocation23], 0
          %s1296 = sshll.u32 %s45, 4
          %s1297 = int_to_ptr.hbm [resolvable:$true] %s1296
          %s1298 = sshll.u32 [#allocation24], 4
          %s1299 = int_to_ptr.vmem [resolvable:$true] %s1298
          %1301 = dma.hbm_to_vmem [thread:$0]  %s1297, 16, %s1299, [#allocation23]
        $region100: #{tpu_custom_call.1} parent=11 // pred_fallthru
          _
        // Predicated region
        $region101: #{tpu_custom_call.1} parent=11 // pred_check
          %p1302 = pneg %p619
        $region102: #{tpu_custom_call.1} parent=11 // pred_check_branch
          %1304 = sbr.rel (%p1302) target = $region104
        $region103: #{tpu_custom_call.1} parent=11 // pred_region
          %1306 = vsyncadd [#allocation26], 0
          %s1308 = sshll.u32 %s47, 4
          %s1309 = int_to_ptr.hbm [resolvable:$true] %s1308
          %s1310 = sshll.u32 [#allocation25], 4
          %s1311 = int_to_ptr.vmem [resolvable:$true] %s1310
          %1313 = dma.hbm_to_vmem [thread:$0]  %s1309, 64, %s1311, [#allocation26]
        $region104: #{tpu_custom_call.1} parent=11 // pred_fallthru
          _
        // Predicated region
        $region105: #{tpu_custom_call.1} parent=11 // pred_check
          %p1314 = pneg %p640
        $region106: #{tpu_custom_call.1} parent=11 // pred_check_branch
          %1316 = sbr.rel (%p1314) target = $region108
        $region107: #{tpu_custom_call.1} parent=11 // pred_region
          %1318 = vsyncadd [#allocation26], 0
          %s1320 = sshll.u32 %s49, 4
          %s1321 = int_to_ptr.hbm [resolvable:$true] %s1320
          %s1322 = sshll.u32 [#allocation27], 4
          %s1323 = int_to_ptr.vmem [resolvable:$true] %s1322
          %1325 = dma.hbm_to_vmem [thread:$0]  %s1321, 16, %s1323, [#allocation26]
        $region108: #{tpu_custom_call.1} parent=11 // pred_fallthru
          _
        // Predicated region
        $region109: #{tpu_custom_call.1} parent=11 // pred_check
          %p1326 = pneg %p661
        $region110: #{tpu_custom_call.1} parent=11 // pred_check_branch
          %1328 = sbr.rel (%p1326) target = $region112
        $region111: #{tpu_custom_call.1} parent=11 // pred_region
          %1330 = vsyncadd [#allocation29], 0
          %s1332 = sshll.u32 %s51, 4
          %s1333 = int_to_ptr.hbm [resolvable:$true] %s1332
          %s1334 = sshll.u32 [#allocation28], 4
          %s1335 = int_to_ptr.vmem [resolvable:$true] %s1334
          %1337 = dma.hbm_to_vmem [thread:$0]  %s1333, 16, %s1335, [#allocation29]
        $region112: #{tpu_custom_call.1} parent=11 // pred_fallthru
          _
        // Predicated region
        $region113: #{tpu_custom_call.1} parent=11 // pred_check
          %p1338 = pneg %p682
        $region114: #{tpu_custom_call.1} parent=11 // pred_check_branch
          %1340 = sbr.rel (%p1338) target = $region116
        $region115: #{tpu_custom_call.1} parent=11 // pred_region
          %1342 = vsyncadd [#allocation29], 0
          %s1344 = sshll.u32 %s53, 4
          %s1345 = int_to_ptr.hbm [resolvable:$true] %s1344
          %s1346 = sshll.u32 [#allocation30], 4
          %s1347 = int_to_ptr.vmem [resolvable:$true] %s1346
          %1349 = dma.hbm_to_vmem [thread:$0]  %s1345, 16, %s1347, [#allocation29]
        $region116: #{tpu_custom_call.1} parent=11 // pred_fallthru
          _
        // Predicated region
        $region117: #{tpu_custom_call.1} parent=11 // pred_check
          %p1350 = pneg %p703
        $region118: #{tpu_custom_call.1} parent=11 // pred_check_branch
          %1352 = sbr.rel (%p1350) target = $region120
        $region119: #{tpu_custom_call.1} parent=11 // pred_region
          _
        $region120: #{tpu_custom_call.1} parent=11 // pred_fallthru
          _
        // Predicated region
        $region121: #{tpu_custom_call.1} parent=11 // pred_check
          %p1353 = pneg %p724
        $region122: #{tpu_custom_call.1} parent=11 // pred_check_branch
          %1355 = sbr.rel (%p1353) target = $region124
        $region123: #{tpu_custom_call.1} parent=11 // pred_region
          %1357 = vsyncadd [#allocation32], 0
          %s1359 = sshll.u32 %s57, 4
          %s1360 = int_to_ptr.hbm [resolvable:$true] %s1359
          %s1361 = sshll.u32 [#allocation31], 4
          %s1362 = int_to_ptr.vmem [resolvable:$true] %s1361
          %1364 = dma.hbm_to_vmem [thread:$0]  %s1360, 16, %s1362, [#allocation32]
        $region124: #{tpu_custom_call.1} parent=11 // pred_fallthru
          _
        // Predicated region
        $region125: #{tpu_custom_call.1} parent=11 // pred_check
          %p1365 = pneg %p745
        $region126: #{tpu_custom_call.1} parent=11 // pred_check_branch
          %1367 = sbr.rel (%p1365) target = $region128
        $region127: #{tpu_custom_call.1} parent=11 // pred_region
          %1369 = vsyncadd [#allocation32], 0
          %s1371 = sshll.u32 %s59, 4
          %s1372 = int_to_ptr.hbm [resolvable:$true] %s1371
          %s1373 = sshll.u32 [#allocation33], 4
          %s1374 = int_to_ptr.vmem [resolvable:$true] %s1373
          %1376 = dma.hbm_to_vmem [thread:$0]  %s1372, 16, %s1374, [#allocation32]
        $region128: #{tpu_custom_call.1} parent=11 // pred_fallthru
          _
        // Predicated region
        $region129: #{tpu_custom_call.1} parent=11 // pred_check
          %p1377 = pneg %p766
        $region130: #{tpu_custom_call.1} parent=11 // pred_check_branch
          %1379 = sbr.rel (%p1377) target = $region132
        $region131: #{tpu_custom_call.1} parent=11 // pred_region
          %1381 = vsyncadd [#allocation35], 0
          %s1383 = sshll.u32 %s61, 4
          %s1384 = int_to_ptr.hbm [resolvable:$true] %s1383
          %s1385 = sshll.u32 [#allocation34], 4
          %s1386 = int_to_ptr.vmem [resolvable:$true] %s1385
          %1388 = dma.hbm_to_vmem [thread:$0]  %s1384, 16, %s1386, [#allocation35]
        $region132: #{tpu_custom_call.1} parent=11 // pred_fallthru
          _
        // Predicated region
        $region133: #{tpu_custom_call.1} parent=11 // pred_check
          %p1389 = pneg %p787
        $region134: #{tpu_custom_call.1} parent=11 // pred_check_branch
          %1391 = sbr.rel (%p1389) target = $region136
        $region135: #{tpu_custom_call.1} parent=11 // pred_region
          _
        $region136: #{tpu_custom_call.1} parent=11 // pred_fallthru
          _
        // Predicated region
        $region137: #{tpu_custom_call.1} parent=11 // pred_check
          %p1392 = pneg %p808
        $region138: #{tpu_custom_call.1} parent=11 // pred_check_branch
          %1394 = sbr.rel (%p1392) target = $region140
        $region139: #{tpu_custom_call.1} parent=11 // pred_region
          _
        $region140: #{tpu_custom_call.1} parent=11 // pred_fallthru
          _
        // Predicated region
        $region141: #{tpu_custom_call.1} parent=11 // pred_check
          %p1395 = pneg %p829
        $region142: #{tpu_custom_call.1} parent=11 // pred_check_branch
          %1397 = sbr.rel (%p1395) target = $region144
        $region143: #{tpu_custom_call.1} parent=11 // pred_region
          _
        $region144: #{tpu_custom_call.1} parent=11 // pred_fallthru
          _
        // Predicated region
        $region145: #{tpu_custom_call.1} parent=11 // pred_check
          %p1398 = pneg %p850
        $region146: #{tpu_custom_call.1} parent=11 // pred_check_branch
          %1400 = sbr.rel (%p1398) target = $region148
        $region147: #{tpu_custom_call.1} parent=11 // pred_region
          %1402 = vsyncadd [#allocation35], 0
          %s1404 = sshll.u32 %s69, 4
          %s1405 = int_to_ptr.hbm [resolvable:$true] %s1404
          %s1406 = sshll.u32 [#allocation36], 4
          %s1407 = int_to_ptr.vmem [resolvable:$true] %s1406
          %1409 = dma.hbm_to_vmem [thread:$0]  %s1405, 16, %s1407, [#allocation35]
        $region148: #{tpu_custom_call.1} parent=11 // pred_fallthru
          _
        // Predicated region
        $region149: #{tpu_custom_call.1} parent=11 // pred_check
          %p1410 = pneg %p871
        $region150: #{tpu_custom_call.1} parent=11 // pred_check_branch
          %1412 = sbr.rel (%p1410) target = $region152
        $region151: #{tpu_custom_call.1} parent=11 // pred_region
          %1414 = vsyncadd [#allocation38], 0
          %s1415 = sshll.u32 %s71, 4
          %s1416 = int_to_ptr.hbm [resolvable:$true] %s1415
          %s1417 = sshll.u32 [#allocation37], 4
          %s1418 = int_to_ptr.vmem [resolvable:$true] %s1417
          %1423 = dma.hbm_to_vmem [thread:$0]  %s1416, 512, %s1418, [#allocation38], 64, 64, 4
        $region152: #{tpu_custom_call.1} parent=11 // pred_fallthru
          _
        // Predicated region
        $region153: #{tpu_custom_call.1} parent=11 // pred_check
          %p1424 = pneg %p892
        $region154: #{tpu_custom_call.1} parent=11 // pred_check_branch
          %1426 = sbr.rel (%p1424) target = $region156
        $region155: #{tpu_custom_call.1} parent=11 // pred_region
          _
        $region156: #{tpu_custom_call.1} parent=11 // pred_fallthru
          _
        // Predicated region
        $region157: #{tpu_custom_call.1} parent=11 // pred_check
          %p1427 = pneg %p913
        $region158: #{tpu_custom_call.1} parent=11 // pred_check_branch
          %1429 = sbr.rel (%p1427) target = $region160
        $region159: #{tpu_custom_call.1} parent=11 // pred_region
          _
        $region160: #{tpu_custom_call.1} parent=11 // pred_fallthru
          _
        // Predicated region
        $region161: #{tpu_custom_call.1} parent=11 // pred_check
          %p1430 = pneg %p934
        $region162: #{tpu_custom_call.1} parent=11 // pred_check_branch
          %1432 = sbr.rel (%p1430) target = $region164
        $region163: #{tpu_custom_call.1} parent=11 // pred_region
          _
        $region164: #{tpu_custom_call.1} parent=11 // pred_fallthru
          _
        // Predicated region
        $region165: #{tpu_custom_call.1} parent=11 // pred_check
          %p1433 = pneg %p955
        $region166: #{tpu_custom_call.1} parent=11 // pred_check_branch
          %1435 = sbr.rel (%p1433) target = $region168
        $region167: #{tpu_custom_call.1} parent=11 // pred_region
          _
        $region168: #{tpu_custom_call.1} parent=11 // pred_fallthru
          _
        // Predicated region
        $region169: #{tpu_custom_call.1} parent=11 // pred_check
          %p1436 = pneg %p976
        $region170: #{tpu_custom_call.1} parent=11 // pred_check_branch
          %1438 = sbr.rel (%p1436) target = $region172
        $region171: #{tpu_custom_call.1} parent=11 // pred_region
          _
        $region172: #{tpu_custom_call.1} parent=11 // pred_fallthru
          _
        // Predicated region
        $region173: #{tpu_custom_call.1} parent=11 // pred_check
          %p1439 = pneg %p997
        $region174: #{tpu_custom_call.1} parent=11 // pred_check_branch
          %1441 = sbr.rel (%p1439) target = $region176
        $region175: #{tpu_custom_call.1} parent=11 // pred_region
          _
        $region176: #{tpu_custom_call.1} parent=11 // pred_fallthru
          _
        // Predicated region
        $region177: #{tpu_custom_call.1} parent=11 // pred_check
          %p1442 = pneg %p1018
        $region178: #{tpu_custom_call.1} parent=11 // pred_check_branch
          %1444 = sbr.rel (%p1442) target = $region180
        $region179: #{tpu_custom_call.1} parent=11 // pred_region
          _
        $region180: #{tpu_custom_call.1} parent=11 // pred_fallthru
          _
        // Predicated region
        $region181: #{tpu_custom_call.1} parent=11 // pred_check
          %p1445 = pneg %p1039
        $region182: #{tpu_custom_call.1} parent=11 // pred_check_branch
          %1447 = sbr.rel (%p1445) target = $region184
        $region183: #{tpu_custom_call.1} parent=11 // pred_region
          _
        $region184: #{tpu_custom_call.1} parent=11 // pred_fallthru
          _
        // Predicated region
        $region185: #{tpu_custom_call.1} parent=11 // pred_check
          %p1448 = pneg %p1060
        $region186: #{tpu_custom_call.1} parent=11 // pred_check_branch
          %1450 = sbr.rel (%p1448) target = $region188
        $region187: #{tpu_custom_call.1} parent=11 // pred_region
          _
        $region188: #{tpu_custom_call.1} parent=11 // pred_fallthru
          _
      $region12: #{tpu_custom_call.1} parent=5 // pred_fallthru
        _
      %p1451 = scmp.lt.s32.totalorder %s110, 2
      // Predicated region
      $region189: #{tpu_custom_call.1} parent=5 // pred_check
        %p1452 = pneg %p1451
      $region190: #{tpu_custom_call.1} parent=5 // pred_check_branch
        %1454 = sbr.rel (%p1452) target = $region192
      $region191: #{tpu_custom_call.1} parent=5 // pred_region
        // Predicated region
        $region193: #{tpu_custom_call.1} parent=191 // pred_check
          %p1455 = pneg %p130
        $region194: #{tpu_custom_call.1} parent=191 // pred_check_branch
          %1457 = sbr.rel (%p1455) target = $region196
        $region195: #{tpu_custom_call.1} parent=191 // pred_region
          %p1458 = scmp.lt.s32.totalorder %s110, 1
          %s1459 = scalar_select %p1458, %s110, 1
          %s1460 = smul.addr %s1459, 8
          %s1461 = scalar_lea.vmem %s1, %s1460
        $region196: #{tpu_custom_call.1} parent=191 // pred_fallthru
          _
      $region192: #{tpu_custom_call.1} parent=5 // pred_fallthru
        _
      %p1462 = scmp.le.s32.totalorder 1, %s110
      %p1463 = scmp.lt.s32.totalorder %s110, 3
      %p1464 = pnand %p1462, %p1463
      %p1465 = pneg %p1464
      // Predicated region
      $region197: #{tpu_custom_call.1} parent=5 // pred_check
        _
      $region198: #{tpu_custom_call.1} parent=5 // pred_check_branch
        %1467 = sbr.rel (%p1464) target = $region200
      $region199: #{tpu_custom_call.1} parent=5 // pred_region
        %s1468 = ssub.s32 %s110, 1
        // Predicated region
        $region201: #{tpu_custom_call.1} parent=199 // pred_check
          %p1469 = pneg %p178
        $region202: #{tpu_custom_call.1} parent=199 // pred_check_branch
          %1471 = sbr.rel (%p1469) target = $region204
        $region203: #{tpu_custom_call.1} parent=199 // pred_region
          %1473 = dma.done [#allocation3], 32
        $region204: #{tpu_custom_call.1} parent=199 // pred_fallthru
          _
        // Predicated region
        $region205: #{tpu_custom_call.1} parent=199 // pred_check
          %p1474 = pneg %p199
        $region206: #{tpu_custom_call.1} parent=199 // pred_check_branch
          %1476 = sbr.rel (%p1474) target = $region208
        $region207: #{tpu_custom_call.1} parent=199 // pred_region
          %1478 = dma.done [#allocation5], 32
        $region208: #{tpu_custom_call.1} parent=199 // pred_fallthru
          _
        // Predicated region
        $region209: #{tpu_custom_call.1} parent=199 // pred_check
          %p1479 = pneg %p262
        $region210: #{tpu_custom_call.1} parent=199 // pred_check_branch
          %1481 = sbr.rel (%p1479) target = $region212
        $region211: #{tpu_custom_call.1} parent=199 // pred_region
          %1483 = dma.done [#allocation5], 16
        $region212: #{tpu_custom_call.1} parent=199 // pred_fallthru
          _
        // Predicated region
        $region213: #{tpu_custom_call.1} parent=199 // pred_check
          %p1484 = pneg %p283
        $region214: #{tpu_custom_call.1} parent=199 // pred_check_branch
          %1486 = sbr.rel (%p1484) target = $region216
        $region215: #{tpu_custom_call.1} parent=199 // pred_region
          %1488 = dma.done [#allocation8], 16
        $region216: #{tpu_custom_call.1} parent=199 // pred_fallthru
          _
        // Predicated region
        $region217: #{tpu_custom_call.1} parent=199 // pred_check
          %p1489 = pneg %p304
        $region218: #{tpu_custom_call.1} parent=199 // pred_check_branch
          %1491 = sbr.rel (%p1489) target = $region220
        $region219: #{tpu_custom_call.1} parent=199 // pred_region
          %1493 = dma.done [#allocation8], 16
        $region220: #{tpu_custom_call.1} parent=199 // pred_fallthru
          _
        // Predicated region
        $region221: #{tpu_custom_call.1} parent=199 // pred_check
          %p1494 = pneg %p346
        $region222: #{tpu_custom_call.1} parent=199 // pred_check_branch
          %1496 = sbr.rel (%p1494) target = $region224
        $region223: #{tpu_custom_call.1} parent=199 // pred_region
          %1498 = dma.done [#allocation11], 16
        $region224: #{tpu_custom_call.1} parent=199 // pred_fallthru
          _
        // Predicated region
        $region225: #{tpu_custom_call.1} parent=199 // pred_check
          %p1499 = pneg %p367
        $region226: #{tpu_custom_call.1} parent=199 // pred_check_branch
          %1501 = sbr.rel (%p1499) target = $region228
        $region227: #{tpu_custom_call.1} parent=199 // pred_region
          %1503 = dma.done [#allocation11], 16
        $region228: #{tpu_custom_call.1} parent=199 // pred_fallthru
          _
        // Predicated region
        $region229: #{tpu_custom_call.1} parent=199 // pred_check
          %p1504 = pneg %p388
        $region230: #{tpu_custom_call.1} parent=199 // pred_check_branch
          %1506 = sbr.rel (%p1504) target = $region232
        $region231: #{tpu_custom_call.1} parent=199 // pred_region
          %1508 = dma.done [#allocation14], 16
        $region232: #{tpu_custom_call.1} parent=199 // pred_fallthru
          _
        // Predicated region
        $region233: #{tpu_custom_call.1} parent=199 // pred_check
          %p1509 = pneg %p430
        $region234: #{tpu_custom_call.1} parent=199 // pred_check_branch
          %1511 = sbr.rel (%p1509) target = $region236
        $region235: #{tpu_custom_call.1} parent=199 // pred_region
          %1513 = dma.done [#allocation14], 16
        $region236: #{tpu_custom_call.1} parent=199 // pred_fallthru
          _
        // Predicated region
        $region237: #{tpu_custom_call.1} parent=199 // pred_check
          %p1514 = pneg %p451
        $region238: #{tpu_custom_call.1} parent=199 // pred_check_branch
          %1516 = sbr.rel (%p1514) target = $region240
        $region239: #{tpu_custom_call.1} parent=199 // pred_region
          %1518 = dma.done [#allocation17], 16
        $region240: #{tpu_custom_call.1} parent=199 // pred_fallthru
          _
        // Predicated region
        $region241: #{tpu_custom_call.1} parent=199 // pred_check
          %p1519 = pneg %p472
        $region242: #{tpu_custom_call.1} parent=199 // pred_check_branch
          %1521 = sbr.rel (%p1519) target = $region244
        $region243: #{tpu_custom_call.1} parent=199 // pred_region
          %1523 = dma.done [#allocation17], 16
        $region244: #{tpu_custom_call.1} parent=199 // pred_fallthru
          _
        // Predicated region
        $region245: #{tpu_custom_call.1} parent=199 // pred_check
          %p1524 = pneg %p514
        $region246: #{tpu_custom_call.1} parent=199 // pred_check_branch
          %1526 = sbr.rel (%p1524) target = $region248
        $region247: #{tpu_custom_call.1} parent=199 // pred_region
          %1528 = dma.done [#allocation20], 16
        $region248: #{tpu_custom_call.1} parent=199 // pred_fallthru
          _
        // Predicated region
        $region249: #{tpu_custom_call.1} parent=199 // pred_check
          %p1529 = pneg %p535
        $region250: #{tpu_custom_call.1} parent=199 // pred_check_branch
          %1531 = sbr.rel (%p1529) target = $region252
        $region251: #{tpu_custom_call.1} parent=199 // pred_region
          %1533 = dma.done [#allocation20], 16
        $region252: #{tpu_custom_call.1} parent=199 // pred_fallthru
          _
        // Predicated region
        $region253: #{tpu_custom_call.1} parent=199 // pred_check
          %p1534 = pneg %p556
        $region254: #{tpu_custom_call.1} parent=199 // pred_check_branch
          %1536 = sbr.rel (%p1534) target = $region256
        $region255: #{tpu_custom_call.1} parent=199 // pred_region
          %1538 = dma.done [#allocation23], 16
        $region256: #{tpu_custom_call.1} parent=199 // pred_fallthru
          _
        // Predicated region
        $region257: #{tpu_custom_call.1} parent=199 // pred_check
          %p1539 = pneg %p598
        $region258: #{tpu_custom_call.1} parent=199 // pred_check_branch
          %1541 = sbr.rel (%p1539) target = $region260
        $region259: #{tpu_custom_call.1} parent=199 // pred_region
          %1543 = dma.done [#allocation23], 16
        $region260: #{tpu_custom_call.1} parent=199 // pred_fallthru
          _
        // Predicated region
        $region261: #{tpu_custom_call.1} parent=199 // pred_check
          %p1544 = pneg %p619
        $region262: #{tpu_custom_call.1} parent=199 // pred_check_branch
          %1546 = sbr.rel (%p1544) target = $region264
        $region263: #{tpu_custom_call.1} parent=199 // pred_region
          %1548 = dma.done [#allocation26], 64
        $region264: #{tpu_custom_call.1} parent=199 // pred_fallthru
          _
        // Predicated region
        $region265: #{tpu_custom_call.1} parent=199 // pred_check
          %p1549 = pneg %p640
        $region266: #{tpu_custom_call.1} parent=199 // pred_check_branch
          %1551 = sbr.rel (%p1549) target = $region268
        $region267: #{tpu_custom_call.1} parent=199 // pred_region
          %1553 = dma.done [#allocation26], 16
        $region268: #{tpu_custom_call.1} parent=199 // pred_fallthru
          _
        // Predicated region
        $region269: #{tpu_custom_call.1} parent=199 // pred_check
          %p1554 = pneg %p661
        $region270: #{tpu_custom_call.1} parent=199 // pred_check_branch
          %1556 = sbr.rel (%p1554) target = $region272
        $region271: #{tpu_custom_call.1} parent=199 // pred_region
          %1558 = dma.done [#allocation29], 16
        $region272: #{tpu_custom_call.1} parent=199 // pred_fallthru
          _
        // Predicated region
        $region273: #{tpu_custom_call.1} parent=199 // pred_check
          %p1559 = pneg %p682
        $region274: #{tpu_custom_call.1} parent=199 // pred_check_branch
          %1561 = sbr.rel (%p1559) target = $region276
        $region275: #{tpu_custom_call.1} parent=199 // pred_region
          %1563 = dma.done [#allocation29], 16
        $region276: #{tpu_custom_call.1} parent=199 // pred_fallthru
          _
        // Predicated region
        $region277: #{tpu_custom_call.1} parent=199 // pred_check
          %p1564 = pneg %p724
        $region278: #{tpu_custom_call.1} parent=199 // pred_check_branch
          %1566 = sbr.rel (%p1564) target = $region280
        $region279: #{tpu_custom_call.1} parent=199 // pred_region
          %1568 = dma.done [#allocation32], 16
        $region280: #{tpu_custom_call.1} parent=199 // pred_fallthru
          _
        // Predicated region
        $region281: #{tpu_custom_call.1} parent=199 // pred_check
          %p1569 = pneg %p745
        $region282: #{tpu_custom_call.1} parent=199 // pred_check_branch
          %1571 = sbr.rel (%p1569) target = $region284
        $region283: #{tpu_custom_call.1} parent=199 // pred_region
          %1573 = dma.done [#allocation32], 16
        $region284: #{tpu_custom_call.1} parent=199 // pred_fallthru
          _
        // Predicated region
        $region285: #{tpu_custom_call.1} parent=199 // pred_check
          %p1574 = pneg %p766
        $region286: #{tpu_custom_call.1} parent=199 // pred_check_branch
          %1576 = sbr.rel (%p1574) target = $region288
        $region287: #{tpu_custom_call.1} parent=199 // pred_region
          %1578 = dma.done [#allocation35], 16
        $region288: #{tpu_custom_call.1} parent=199 // pred_fallthru
          _
        // Predicated region
        $region289: #{tpu_custom_call.1} parent=199 // pred_check
          %p1579 = pneg %p850
        $region290: #{tpu_custom_call.1} parent=199 // pred_check_branch
          %1581 = sbr.rel (%p1579) target = $region292
        $region291: #{tpu_custom_call.1} parent=199 // pred_region
          %1583 = dma.done [#allocation35], 16
        $region292: #{tpu_custom_call.1} parent=199 // pred_fallthru
          _
        // Predicated region
        $region293: #{tpu_custom_call.1} parent=199 // pred_check
          %p1584 = pneg %p871
        $region294: #{tpu_custom_call.1} parent=199 // pred_check_branch
          %1586 = sbr.rel (%p1584) target = $region296
        $region295: #{tpu_custom_call.1} parent=199 // pred_region
          %1588 = dma.done [#allocation38], 512
        $region296: #{tpu_custom_call.1} parent=199 // pred_fallthru
          _
        %p1589 = scmp.lt.s32.totalorder %s115, 1
        %s1590 = scalar_select %p1589, %s115, 1
        %s1591 = smul.addr %s1590, 8
        %s1592 = scalar_lea.vmem %s1, %s1591
        %p1593 = pneg %p136
        %p1594 = pneg %p133
        %p1595 = pneg %p157
        %p1596 = pneg %p154
        %p1597 = pneg %p178
        %p1598 = pneg %p175
        %p1599 = pneg %p199
        %p1600 = pneg %p196
        %p1601 = pneg %p220
        %p1602 = pneg %p217
        %p1603 = pneg %p241
        %p1604 = pneg %p238
        %p1605 = pneg %p262
        %p1606 = pneg %p259
        %p1607 = pneg %p283
        %p1608 = pneg %p280
        %p1609 = pneg %p304
        %p1610 = pneg %p301
        %p1611 = pneg %p325
        %p1612 = pneg %p322
        %p1613 = pneg %p346
        %p1614 = pneg %p343
        %p1615 = pneg %p367
        %p1616 = pneg %p364
        %p1617 = pneg %p388
        %p1618 = pneg %p385
        %p1619 = pneg %p409
        %p1620 = pneg %p406
        %p1621 = pneg %p430
        %p1622 = pneg %p427
        %p1623 = pneg %p451
        %p1624 = pneg %p448
        %p1625 = pneg %p472
        %p1626 = pneg %p469
        %p1627 = pneg %p493
        %p1628 = pneg %p490
        %p1629 = pneg %p514
        %p1630 = pneg %p511
        %p1631 = pneg %p535
        %p1632 = pneg %p532
        %p1633 = pneg %p556
        %p1634 = pneg %p553
        %p1635 = pneg %p577
        %p1636 = pneg %p574
        %p1637 = pneg %p598
        %p1638 = pneg %p595
        %p1639 = pneg %p619
        %p1640 = pneg %p616
        %p1641 = pneg %p640
        %p1642 = pneg %p637
        %p1643 = pneg %p661
        %p1644 = pneg %p658
        %p1645 = pneg %p682
        %p1646 = pneg %p679
        %p1647 = pneg %p703
        %p1648 = pneg %p700
        %p1649 = pneg %p724
        %p1650 = pneg %p721
        %p1651 = pneg %p745
        %p1652 = pneg %p742
        %p1653 = pneg %p766
        %p1654 = pneg %p763
        %p1655 = pneg %p787
        %p1656 = pneg %p784
        %p1657 = pneg %p808
        %p1658 = pneg %p805
        %p1659 = pneg %p829
        %p1660 = pneg %p826
        %p1661 = pneg %p850
        %p1662 = pneg %p847
        %p1663 = pneg %p871
        %p1664 = pneg %p868
        %p1665 = pneg %p892
        %p1666 = pneg %p889
        %p1667 = pneg %p913
        %p1668 = pneg %p910
        %p1669 = pneg %p934
        %p1670 = pneg %p931
        %p1671 = pneg %p955
        %p1672 = pneg %p952
        %p1673 = pneg %p976
        %p1674 = pneg %p973
        %p1675 = pneg %p997
        %p1676 = pneg %p994
        %p1677 = pneg %p1018
        %p1678 = pneg %p1015
        %p1679 = pneg %p1039
        %p1680 = pneg %p1036
        %p1681 = pneg %p1060
        %p1682 = pneg %p1057
        %p1683 = pneg %p1086
        %p1684 = pneg %p1083
        %p1685 = scmp.lt.s32.totalorder %s115, 1
        %s1686 = scalar_select %p1685, %s115, 1
        %s1687 = smul.addr %s1686, 8
        %s1688 = scalar_lea.vmem %s91, %s1687
        %p1689 = scmp.lt.s32.totalorder %s115, 1
        %s1690 = scalar_select %p1689, %s115, 1
        %s1691 = smul.addr %s1690, 8
        %s1692 = scalar_lea.vmem %s1, %s1691
        %p1693 = scmp.lt.s32.totalorder %s115, 1
        %s1694 = scalar_select %p1693, %s115, 1
        %s1695 = smul.addr %s1694, 8
        %s1696 = scalar_lea.vmem %s91, %s1695
        %v1698 = vld [vmem:[%s1692] sm:$0xff]
        %v1699 = vpack.c.bf16 %v1698, %v1698
        %v1700 = vld [vmem:[%s3] sm:$0xf]
        %v1701 = vld [vmem:[#allocation2] sm:$0x3]
        %v1703 = vperm.slane %v1701, 0
        %v1704 = vperm.slane %v1701, 1
        %1708 = vst [vmem:[#allocation1] ss:$4 sm:$0xff] %v1700
        %v1709 = vld.sshfl [vmem:[#allocation1] sm:$0xff pattern:$0x73625140]
        %v1710 = vld.sshfl [vmem:[#allocation1 + $0x8] sm:$0xff pattern:$0x73625140]
        %vm1711 = vcmask 23552
        %v1713 = vsel %vm1711, %v1699, 0
        %vm1715 = vcmask 1040384
        %vm1716 = vcmask 1041408
        %v1717 = vsel %vm1715, 4294967295, 65535
        %v1718 = vsel %vm1716, %v1717, 0
        %v1719 = vand.u32 %v1709, %v1718
        %v1721 = vand.u32 %v1710, %v1718
        %1723 = vmatpush.bf16.msra.mxu0 0
        %1724 = vmatpush.bf16.msra.mxu0 0
        %1725 = vmatpush.bf16.msra.mxu0 0
        %1726 = vmatpush.bf16.msra.mxu0 0
        %1727 = vmatpush.bf16.msra.mxu0 0
        %1728 = vmatpush.bf16.msra.mxu0 0
        %1729 = vmatpush.bf16.msra.mxu0 0
        %1730 = vmatpush.bf16.msra.mxu0 %v1719
        %1731 = vmatmul.bf16.gmra.mxu0 %v1713
        %v1732 = vpop.f32.mrf.mxu0
        %v1733 = vadd.f32 %v1703, %v1732
        %v1734 = vpop.f32.mrf.mxu0
        %1735 = vdwg.mxu0
        %1736 = vmatpush.bf16.msra.mxu0 0
        %1737 = vmatpush.bf16.msra.mxu0 0
        %1738 = vmatpush.bf16.msra.mxu0 0
        %1739 = vmatpush.bf16.msra.mxu0 0
        %1740 = vmatpush.bf16.msra.mxu0 0
        %1741 = vmatpush.bf16.msra.mxu0 0
        %1742 = vmatpush.bf16.msra.mxu0 0
        %1743 = vmatpush.bf16.msra.mxu0 %v1721
        %1744 = vmatmul.bf16.gmra.mxu0 %v1713
        %v1745 = vpop.f32.mrf.mxu0
        %v1746 = vadd.f32 %v1704, %v1745
        %v1747 = vpop.f32.mrf.mxu0
        %1748 = vdwg.mxu0
        %v1749 = vmax.f32 %v1733, 0.0
        %v1750 = vmax.f32 %v1746, 0.0
        %1751 = vmatpush.msra.mxu0 1.0
        %1752 = vmatpush.msra.mxu0 1.0
        %1753 = vmatpush.msra.mxu0 1.0
        %1754 = vmatpush.msra.mxu0 1.0
        %1755 = vmatpush.msra.mxu0 1.0
        %1756 = vmatpush.msra.mxu0 1.0
        %1757 = vmatpush.msra.mxu0 1.0
        %1758 = vmatpush.msra.mxu0 1.0
        %1759 = vmatpush.msra.mxu0 1.0
        %1760 = vmatpush.msra.mxu0 1.0
        %1761 = vmatpush.msra.mxu0 1.0
        %1762 = vmatpush.msra.mxu0 1.0
        %1763 = vmatpush.msra.mxu0 1.0
        %1764 = vmatpush.msra.mxu0 1.0
        %1765 = vmatpush.msra.mxu0 1.0
        %1766 = vmatpush.msra.mxu0 1.0
        %1767 = vmatmul.f32.gmra.mxu0 %v1749
        %v1768 = vpop.f32.mrf.mxu0
        %v1769 = vadd.f32 0.0, %v1768
        %1770 = vdwg.mxu0
        %1771 = vmatpush.msra.mxu0 1.0
        %1772 = vmatpush.msra.mxu0 1.0
        %1773 = vmatpush.msra.mxu0 1.0
        %1774 = vmatpush.msra.mxu0 1.0
        %1775 = vmatpush.msra.mxu0 1.0
        %1776 = vmatpush.msra.mxu0 1.0
        %1777 = vmatpush.msra.mxu0 1.0
        %1778 = vmatpush.msra.mxu0 1.0
        %1779 = vmatpush.msra.mxu0 1.0
        %1780 = vmatpush.msra.mxu0 1.0
        %1781 = vmatpush.msra.mxu0 1.0
        %1782 = vmatpush.msra.mxu0 1.0
        %1783 = vmatpush.msra.mxu0 1.0
        %1784 = vmatpush.msra.mxu0 1.0
        %1785 = vmatpush.msra.mxu0 1.0
        %1786 = vmatpush.msra.mxu0 1.0
        %1787 = vmatmul.f32.gmra.mxu0 %v1750
        %v1788 = vpop.f32.mrf.mxu0
        %v1789 = vadd.f32 %v1769, %v1788
        %1790 = vdwg.mxu0
        %v1791 = vmul.f32 %v1749, %v1749
        %v1792 = vmul.f32 %v1750, %v1750
        %1793 = vmatpush.msra.mxu0 1.0
        %1794 = vmatpush.msra.mxu0 1.0
        %1795 = vmatpush.msra.mxu0 1.0
        %1796 = vmatpush.msra.mxu0 1.0
        %1797 = vmatpush.msra.mxu0 1.0
        %1798 = vmatpush.msra.mxu0 1.0
        %1799 = vmatpush.msra.mxu0 1.0
        %1800 = vmatpush.msra.mxu0 1.0
        %1801 = vmatpush.msra.mxu0 1.0
        %1802 = vmatpush.msra.mxu0 1.0
        %1803 = vmatpush.msra.mxu0 1.0
        %1804 = vmatpush.msra.mxu0 1.0
        %1805 = vmatpush.msra.mxu0 1.0
        %1806 = vmatpush.msra.mxu0 1.0
        %1807 = vmatpush.msra.mxu0 1.0
        %1808 = vmatpush.msra.mxu0 1.0
        %1809 = vmatmul.f32.gmra.mxu0 %v1791
        %v1810 = vpop.f32.mrf.mxu0
        %v1811 = vadd.f32 0.0, %v1810
        %1812 = vdwg.mxu0
        %1813 = vmatpush.msra.mxu0 1.0
        %1814 = vmatpush.msra.mxu0 1.0
        %1815 = vmatpush.msra.mxu0 1.0
        %1816 = vmatpush.msra.mxu0 1.0
        %1817 = vmatpush.msra.mxu0 1.0
        %1818 = vmatpush.msra.mxu0 1.0
        %1819 = vmatpush.msra.mxu0 1.0
        %1820 = vmatpush.msra.mxu0 1.0
        %1821 = vmatpush.msra.mxu0 1.0
        %1822 = vmatpush.msra.mxu0 1.0
        %1823 = vmatpush.msra.mxu0 1.0
        %1824 = vmatpush.msra.mxu0 1.0
        %1825 = vmatpush.msra.mxu0 1.0
        %1826 = vmatpush.msra.mxu0 1.0
        %1827 = vmatpush.msra.mxu0 1.0
        %1828 = vmatpush.msra.mxu0 1.0
        %1829 = vmatmul.f32.gmra.mxu0 %v1792
        %v1830 = vpop.f32.mrf.mxu0
        %v1831 = vadd.f32 %v1811, %v1830
        %1832 = vdwg.mxu0
        %v1833 = vmul.f32 %v1789, 0.00390625
        %v1834 = vmul.f32 %v1831, 0.00390625
        %v1835 = vmul.f32 %v1833, %v1833
        %v1836 = vsub.f32 %v1834, %v1835
        %v1837 = vmax.f32 %v1836, 0.0
        %v1838 = vadd.f32 %v1837, 1e-05
        %v1839 = vrsqrt.pop %v1838
        %v1840 = vmul.f32 %v1839, %v1838
        %v1841 = vmul.f32 %v1840, %v1839
        %v1842 = vmul.f32 0.5, %v1841
        %v1843 = vsub.f32 1.5, %v1842
        %v1844 = vmul.f32 %v1839, %v1843
        %vm1845 = vweird.f32 %v1838
        %vm1846 = vweird.f32 %v1839
        %vm1847 = vmor %vm1845, %vm1846
        %v1848 = vsel %vm1847, %v1839, %v1844
        %1850 = vset.pattern.permute.xlu0 0
        %1851 = vperm.xlu0 %1850, %v1833
        %v1852 = vpop.permute.xlu0 %1851
        %v1854 = vsub.f32 %v1749, %v1852
        %v1855 = vsub.f32 %v1750, %v1852
        %v1856 = vld [vmem:[#allocation4] sm:$0x3]
        %1858 = vset.pattern.permute.xlu0 0
        %1859 = vperm.xlu0 %1858, %v1848
        %v1860 = vpop.permute.xlu0 %1859
        %v1863 = vperm.slane %v1856, 0
        %v1864 = vperm.slane %v1856, 1
        %v1867 = vmul.f32 %v1860, %v1863
        %v1868 = vmul.f32 %v1860, %v1864
        %v1869 = vmul.f32 %v1854, %v1867
        %v1870 = vmul.f32 %v1855, %v1868
        %v1871 = vld [vmem:[%s9] sm:$0x3]
        %v1873 = vperm.slane %v1871, 0
        %v1874 = vperm.slane %v1871, 1
        %v1877 = vadd.f32 %v1869, %v1873
        %v1878 = vadd.f32 %v1870, %v1874
        %v1879 = vpack.c.bf16 %v1877, %v1877
        %v1880 = vpack.c.bf16 %v1878, %v1878
        %v1881 = vld [vmem:[%s11] sm:$0xf]
        %v1882 = vld [vmem:[%s11 + $0x4] sm:$0xf]
        %v1883 = vld [vmem:[%s11 + $0x8] sm:$0xf]
        %v1884 = vld [vmem:[%s11 + $0xc] sm:$0xf]
        %v1885 = vld [vmem:[%s11 + $0x10] sm:$0xf]
        %v1886 = vld [vmem:[%s11 + $0x14] sm:$0xf]
        %v1887 = vld [vmem:[%s11 + $0x18] sm:$0xf]
        %v1888 = vld [vmem:[%s11 + $0x1c] sm:$0xf]
        %v1889 = vld [vmem:[%s11 + $0x20] sm:$0xf]
        %v1890 = vld [vmem:[%s11 + $0x24] sm:$0xf]
        %v1891 = vld [vmem:[%s11 + $0x28] sm:$0xf]
        %v1892 = vld [vmem:[%s11 + $0x2c] sm:$0xf]
        %v1893 = vld [vmem:[%s11 + $0x30] sm:$0xf]
        %v1894 = vld [vmem:[%s11 + $0x34] sm:$0xf]
        %v1895 = vld [vmem:[%s11 + $0x38] sm:$0xf]
        %v1896 = vld [vmem:[%s11 + $0x3c] sm:$0xf]
        %v1897 = vld [vmem:[%s11 + $0x40] sm:$0xf]
        %v1898 = vld [vmem:[%s11 + $0x44] sm:$0xf]
        %v1899 = vld [vmem:[%s11 + $0x48] sm:$0xf]
        %v1900 = vld [vmem:[%s11 + $0x4c] sm:$0xf]
        %v1901 = vld [vmem:[%s11 + $0x50] sm:$0xf]
        %v1902 = vld [vmem:[%s11 + $0x54] sm:$0xf]
        %v1903 = vld [vmem:[%s11 + $0x58] sm:$0xf]
        %v1904 = vld [vmem:[%s11 + $0x5c] sm:$0xf]
        %v1905 = vld [vmem:[%s11 + $0x60] sm:$0xf]
        %v1906 = vld [vmem:[%s11 + $0x64] sm:$0xf]
        %v1907 = vld [vmem:[%s11 + $0x68] sm:$0xf]
        %v1908 = vld [vmem:[%s11 + $0x6c] sm:$0xf]
        %v1909 = vld [vmem:[%s11 + $0x70] sm:$0xf]
        %v1910 = vld [vmem:[%s11 + $0x74] sm:$0xf]
        %v1911 = vld [vmem:[%s11 + $0x78] sm:$0xf]
        %v1912 = vld [vmem:[%s11 + $0x7c] sm:$0xf]
        %v1913 = vld [vmem:[#allocation6] sm:$0x1]
        %v1915 = vperm.slane %v1913, 0
        %v1949 = vunpack.c.l.b16 %v1881
        %v1950 = vunpack.c.l.b16 %v1882
        %v1951 = vunpack.c.l.b16 %v1883
        %v1952 = vunpack.c.l.b16 %v1884
        %v1953 = vunpack.c.l.b16 %v1885
        %v1954 = vunpack.c.l.b16 %v1886
        %v1955 = vunpack.c.l.b16 %v1887
        %v1956 = vunpack.c.l.b16 %v1888
        %v1957 = vunpack.c.l.b16 %v1889
        %v1958 = vunpack.c.l.b16 %v1890
        %v1959 = vunpack.c.l.b16 %v1891
        %v1960 = vunpack.c.l.b16 %v1892
        %v1961 = vunpack.c.l.b16 %v1893
        %v1962 = vunpack.c.l.b16 %v1894
        %v1963 = vunpack.c.l.b16 %v1895
        %v1964 = vunpack.c.l.b16 %v1896
        %v1965 = vunpack.c.l.b16 %v1897
        %v1966 = vunpack.c.l.b16 %v1898
        %v1967 = vunpack.c.l.b16 %v1899
        %v1968 = vunpack.c.l.b16 %v1900
        %v1969 = vunpack.c.l.b16 %v1901
        %v1970 = vunpack.c.l.b16 %v1902
        %v1971 = vunpack.c.l.b16 %v1903
        %v1972 = vunpack.c.l.b16 %v1904
        %v1973 = vunpack.c.l.b16 %v1905
        %v1974 = vunpack.c.l.b16 %v1906
        %v1975 = vunpack.c.l.b16 %v1907
        %v1976 = vunpack.c.l.b16 %v1908
        %v1977 = vunpack.c.l.b16 %v1909
        %v1978 = vunpack.c.l.b16 %v1910
        %v1979 = vunpack.c.l.b16 %v1911
        %v1980 = vunpack.c.l.b16 %v1912
        %v1981 = vpack.c.b16 %v1950, %v1949
        %v1982 = vpack.c.b16 %v1952, %v1951
        %v1983 = vpack.c.b16 %v1954, %v1953
        %v1984 = vpack.c.b16 %v1956, %v1955
        %v1985 = vpack.c.b16 %v1958, %v1957
        %v1986 = vpack.c.b16 %v1960, %v1959
        %v1987 = vpack.c.b16 %v1962, %v1961
        %v1988 = vpack.c.b16 %v1964, %v1963
        %v1989 = vpack.c.b16 %v1966, %v1965
        %v1990 = vpack.c.b16 %v1968, %v1967
        %v1991 = vpack.c.b16 %v1970, %v1969
        %v1992 = vpack.c.b16 %v1972, %v1971
        %v1993 = vpack.c.b16 %v1974, %v1973
        %v1994 = vpack.c.b16 %v1976, %v1975
        %v1995 = vpack.c.b16 %v1978, %v1977
        %v1996 = vpack.c.b16 %v1980, %v1979
        %2013 = vmatpush.bf16.msra.mxu0 %v1988
        %2014 = vmatpush.bf16.msra.mxu0 %v1987
        %2015 = vmatpush.bf16.msra.mxu0 %v1986
        %2016 = vmatpush.bf16.msra.mxu0 %v1985
        %2017 = vmatpush.bf16.msra.mxu0 %v1984
        %2018 = vmatpush.bf16.msra.mxu0 %v1983
        %2019 = vmatpush.bf16.msra.mxu0 %v1982
        %2020 = vmatpush.bf16.msra.mxu0 %v1981
        %2021 = vmatmul.bf16.gmra.mxu0 %v1879
        %v2022 = vpop.f32.mrf.mxu0
        %v2023 = vadd.f32 %v1915, %v2022
        %v2024 = vpop.f32.mrf.mxu0
        %2025 = vdwg.mxu0
        %2026 = vmatpush.bf16.msra.mxu0 %v1996
        %2027 = vmatpush.bf16.msra.mxu0 %v1995
        %2028 = vmatpush.bf16.msra.mxu0 %v1994
        %2029 = vmatpush.bf16.msra.mxu0 %v1993
        %2030 = vmatpush.bf16.msra.mxu0 %v1992
        %2031 = vmatpush.bf16.msra.mxu0 %v1991
        %2032 = vmatpush.bf16.msra.mxu0 %v1990
        %2033 = vmatpush.bf16.msra.mxu0 %v1989
        %2034 = vmatmul.bf16.gmra.mxu0 %v1880
        %v2035 = vpop.f32.mrf.mxu0
        %v2036 = vadd.f32 %v2023, %v2035
        %v2037 = vpop.f32.mrf.mxu0
        %2038 = vdwg.mxu0
        %v2039 = vmax.f32 %v2036, 0.0
        %2040 = vmatpush.msra.mxu0 1.0
        %2041 = vmatpush.msra.mxu0 1.0
        %2042 = vmatpush.msra.mxu0 1.0
        %2043 = vmatpush.msra.mxu0 1.0
        %2044 = vmatpush.msra.mxu0 1.0
        %2045 = vmatpush.msra.mxu0 1.0
        %2046 = vmatpush.msra.mxu0 1.0
        %2047 = vmatpush.msra.mxu0 1.0
        %2048 = vmatpush.msra.mxu0 1.0
        %2049 = vmatpush.msra.mxu0 1.0
        %2050 = vmatpush.msra.mxu0 1.0
        %2051 = vmatpush.msra.mxu0 1.0
        %2052 = vmatpush.msra.mxu0 1.0
        %2053 = vmatpush.msra.mxu0 1.0
        %2054 = vmatpush.msra.mxu0 1.0
        %2055 = vmatpush.msra.mxu0 1.0
        %2056 = vmatmul.f32.gmra.mxu0 %v2039
        %v2057 = vpop.f32.mrf.mxu0
        %v2058 = vadd.f32 0.0, %v2057
        %2059 = vdwg.mxu0
        %v2060 = vmul.f32 %v2039, %v2039
        %2061 = vmatpush.msra.mxu0 1.0
        %2062 = vmatpush.msra.mxu0 1.0
        %2063 = vmatpush.msra.mxu0 1.0
        %2064 = vmatpush.msra.mxu0 1.0
        %2065 = vmatpush.msra.mxu0 1.0
        %2066 = vmatpush.msra.mxu0 1.0
        %2067 = vmatpush.msra.mxu0 1.0
        %2068 = vmatpush.msra.mxu0 1.0
        %2069 = vmatpush.msra.mxu0 1.0
        %2070 = vmatpush.msra.mxu0 1.0
        %2071 = vmatpush.msra.mxu0 1.0
        %2072 = vmatpush.msra.mxu0 1.0
        %2073 = vmatpush.msra.mxu0 1.0
        %2074 = vmatpush.msra.mxu0 1.0
        %2075 = vmatpush.msra.mxu0 1.0
        %2076 = vmatpush.msra.mxu0 1.0
        %2077 = vmatmul.f32.gmra.mxu0 %v2060
        %v2078 = vpop.f32.mrf.mxu0
        %v2079 = vadd.f32 0.0, %v2078
        %2080 = vdwg.mxu0
        %v2081 = vmul.f32 %v2058, 0.0078125
        %v2082 = vmul.f32 %v2079, 0.0078125
        %v2083 = vmul.f32 %v2081, %v2081
        %v2084 = vsub.f32 %v2082, %v2083
        %v2085 = vmax.f32 %v2084, 0.0
        %v2086 = vadd.f32 %v2085, 1e-05
        %v2087 = vrsqrt.pop %v2086
        %v2088 = vmul.f32 %v2087, %v2086
        %v2089 = vmul.f32 %v2088, %v2087
        %v2090 = vmul.f32 0.5, %v2089
        %v2091 = vsub.f32 1.5, %v2090
        %v2092 = vmul.f32 %v2087, %v2091
        %vm2093 = vweird.f32 %v2086
        %vm2094 = vweird.f32 %v2087
        %vm2095 = vmor %vm2093, %vm2094
        %v2096 = vsel %vm2095, %v2087, %v2092
        %2098 = vset.pattern.permute.xlu0 0
        %2099 = vperm.xlu0 %2098, %v2081
        %v2100 = vpop.permute.xlu0 %2099
        %v2102 = vsub.f32 %v2039, %v2100
        %v2103 = vld [vmem:[#allocation7] sm:$0x1]
        %2105 = vset.pattern.permute.xlu0 0
        %2106 = vperm.xlu0 %2105, %v2096
        %v2107 = vpop.permute.xlu0 %2106
        %v2110 = vperm.slane %v2103, 0
        %v2112 = vmul.f32 %v2107, %v2110
        %v2113 = vmul.f32 %v2102, %v2112
        %v2114 = vld [vmem:[#allocation9] sm:$0x1]
        %v2116 = vperm.slane %v2114, 0
        %v2118 = vadd.f32 %v2113, %v2116
        %v2119 = vpack.c.bf16 %v2118, %v2118
        %v2120 = vld [vmem:[%s19] sm:$0xf]
        %v2121 = vld [vmem:[%s19 + $0x4] sm:$0xf]
        %v2122 = vld [vmem:[%s19 + $0x8] sm:$0xf]
        %v2123 = vld [vmem:[%s19 + $0xc] sm:$0xf]
        %v2124 = vld [vmem:[%s19 + $0x10] sm:$0xf]
        %v2125 = vld [vmem:[%s19 + $0x14] sm:$0xf]
        %v2126 = vld [vmem:[%s19 + $0x18] sm:$0xf]
        %v2127 = vld [vmem:[%s19 + $0x1c] sm:$0xf]
        %v2128 = vld [vmem:[%s19 + $0x20] sm:$0xf]
        %v2129 = vld [vmem:[%s19 + $0x24] sm:$0xf]
        %v2130 = vld [vmem:[%s19 + $0x28] sm:$0xf]
        %v2131 = vld [vmem:[%s19 + $0x2c] sm:$0xf]
        %v2132 = vld [vmem:[%s19 + $0x30] sm:$0xf]
        %v2133 = vld [vmem:[%s19 + $0x34] sm:$0xf]
        %v2134 = vld [vmem:[%s19 + $0x38] sm:$0xf]
        %v2135 = vld [vmem:[%s19 + $0x3c] sm:$0xf]
        %v2136 = vld [vmem:[#allocation10] sm:$0x1]
        %v2138 = vperm.slane %v2136, 0
        %v2156 = vunpack.c.l.b16 %v2120
        %v2157 = vunpack.c.l.b16 %v2121
        %v2158 = vunpack.c.l.b16 %v2122
        %v2159 = vunpack.c.l.b16 %v2123
        %v2160 = vunpack.c.l.b16 %v2124
        %v2161 = vunpack.c.l.b16 %v2125
        %v2162 = vunpack.c.l.b16 %v2126
        %v2163 = vunpack.c.l.b16 %v2127
        %v2164 = vunpack.c.l.b16 %v2128
        %v2165 = vunpack.c.l.b16 %v2129
        %v2166 = vunpack.c.l.b16 %v2130
        %v2167 = vunpack.c.l.b16 %v2131
        %v2168 = vunpack.c.l.b16 %v2132
        %v2169 = vunpack.c.l.b16 %v2133
        %v2170 = vunpack.c.l.b16 %v2134
        %v2171 = vunpack.c.l.b16 %v2135
        %v2172 = vpack.c.b16 %v2157, %v2156
        %v2173 = vpack.c.b16 %v2159, %v2158
        %v2174 = vpack.c.b16 %v2161, %v2160
        %v2175 = vpack.c.b16 %v2163, %v2162
        %v2176 = vpack.c.b16 %v2165, %v2164
        %v2177 = vpack.c.b16 %v2167, %v2166
        %v2178 = vpack.c.b16 %v2169, %v2168
        %v2179 = vpack.c.b16 %v2171, %v2170
        %2188 = vmatpush.bf16.msra.mxu0 %v2179
        %2189 = vmatpush.bf16.msra.mxu0 %v2178
        %2190 = vmatpush.bf16.msra.mxu0 %v2177
        %2191 = vmatpush.bf16.msra.mxu0 %v2176
        %2192 = vmatpush.bf16.msra.mxu0 %v2175
        %2193 = vmatpush.bf16.msra.mxu0 %v2174
        %2194 = vmatpush.bf16.msra.mxu0 %v2173
        %2195 = vmatpush.bf16.msra.mxu0 %v2172
        %2196 = vmatmul.bf16.gmra.mxu0 %v2119
        %v2197 = vpop.f32.mrf.mxu0
        %v2198 = vadd.f32 %v2138, %v2197
        %v2199 = vpop.f32.mrf.mxu0
        %2200 = vdwg.mxu0
        %v2201 = vmax.f32 %v2198, 0.0
        %vm2202 = vcmask 523264
        %v2204 = vsel %vm2202, %v2201, 0
        %2206 = vmatpush.msra.mxu0 0.0
        %2207 = vmatpush.msra.mxu0 0.0
        %2208 = vmatpush.msra.mxu0 0.0
        %2209 = vmatpush.msra.mxu0 0.0
        %2210 = vmatpush.msra.mxu0 0.0
        %2211 = vmatpush.msra.mxu0 0.0
        %2212 = vmatpush.msra.mxu0 0.0
        %2213 = vmatpush.msra.mxu0 0.0
        %2214 = vmatpush.msra.mxu0 1.0
        %2215 = vmatpush.msra.mxu0 1.0
        %2216 = vmatpush.msra.mxu0 1.0
        %2217 = vmatpush.msra.mxu0 1.0
        %2218 = vmatpush.msra.mxu0 1.0
        %2219 = vmatpush.msra.mxu0 1.0
        %2220 = vmatpush.msra.mxu0 1.0
        %2221 = vmatpush.msra.mxu0 1.0
        %2222 = vmatmul.f32.gmra.mxu0 %v2204
        %v2223 = vpop.f32.mrf.mxu0
        %v2224 = vadd.f32 0.0, %v2223
        %2225 = vdwg.mxu0
        %v2226 = vmul.f32 %v2201, %v2201
        %v2228 = vsel %vm2202, %v2226, 0
        %2230 = vmatpush.msra.mxu0 0.0
        %2231 = vmatpush.msra.mxu0 0.0
        %2232 = vmatpush.msra.mxu0 0.0
        %2233 = vmatpush.msra.mxu0 0.0
        %2234 = vmatpush.msra.mxu0 0.0
        %2235 = vmatpush.msra.mxu0 0.0
        %2236 = vmatpush.msra.mxu0 0.0
        %2237 = vmatpush.msra.mxu0 0.0
        %2238 = vmatpush.msra.mxu0 1.0
        %2239 = vmatpush.msra.mxu0 1.0
        %2240 = vmatpush.msra.mxu0 1.0
        %2241 = vmatpush.msra.mxu0 1.0
        %2242 = vmatpush.msra.mxu0 1.0
        %2243 = vmatpush.msra.mxu0 1.0
        %2244 = vmatpush.msra.mxu0 1.0
        %2245 = vmatpush.msra.mxu0 1.0
        %2246 = vmatmul.f32.gmra.mxu0 %v2228
        %v2247 = vpop.f32.mrf.mxu0
        %v2248 = vadd.f32 0.0, %v2247
        %2249 = vdwg.mxu0
        %v2250 = vmul.f32 %v2224, 0.015625
        %v2251 = vmul.f32 %v2248, 0.015625
        %v2252 = vmul.f32 %v2250, %v2250
        %v2253 = vsub.f32 %v2251, %v2252
        %v2254 = vmax.f32 %v2253, 0.0
        %v2255 = vadd.f32 %v2254, 1e-05
        %v2256 = vrsqrt.pop %v2255
        %v2257 = vmul.f32 %v2256, %v2255
        %v2258 = vmul.f32 %v2257, %v2256
        %v2259 = vmul.f32 0.5, %v2258
        %v2260 = vsub.f32 1.5, %v2259
        %v2261 = vmul.f32 %v2256, %v2260
        %vm2262 = vweird.f32 %v2255
        %vm2263 = vweird.f32 %v2256
        %vm2264 = vmor %vm2262, %vm2263
        %v2265 = vsel %vm2264, %v2256, %v2261
        %2267 = vset.pattern.permute.xlu0 0
        %2268 = vperm.xlu0 %2267, %v2250
        %v2269 = vpop.permute.xlu0 %2268
        %v2271 = vsub.f32 %v2201, %v2269
        %v2272 = vld [vmem:[#allocation12] sm:$0x1]
        %2274 = vset.pattern.permute.xlu0 0
        %2275 = vperm.xlu0 %2274, %v2265
        %v2276 = vpop.permute.xlu0 %2275
        %v2279 = vperm.slane %v2272, 0
        %v2281 = vmul.f32 %v2276, %v2279
        %v2282 = vmul.f32 %v2271, %v2281
        %v2283 = vld [vmem:[#allocation13] sm:$0x1]
        %v2285 = vperm.slane %v2283, 0
        %v2287 = vadd.f32 %v2282, %v2285
        %v2288 = vpack.c.bf16 %v2287, %v2287
        %v2289 = vld [vmem:[%s27] sm:$0xf]
        %v2290 = vld [vmem:[%s27 + $0x4] sm:$0xf]
        %v2291 = vld [vmem:[%s27 + $0x8] sm:$0xf]
        %v2292 = vld [vmem:[%s27 + $0xc] sm:$0xf]
        %v2293 = vld [vmem:[%s27 + $0x10] sm:$0xf]
        %v2294 = vld [vmem:[%s27 + $0x14] sm:$0xf]
        %v2295 = vld [vmem:[%s27 + $0x18] sm:$0xf]
        %v2296 = vld [vmem:[%s27 + $0x1c] sm:$0xf]
        %v2297 = vld [vmem:[#allocation15] sm:$0x1]
        %v2299 = vperm.slane %v2297, 0
        %v2309 = vunpack.c.l.b16 %v2289
        %v2310 = vunpack.c.l.b16 %v2290
        %v2311 = vunpack.c.l.b16 %v2291
        %v2312 = vunpack.c.l.b16 %v2292
        %v2313 = vunpack.c.l.b16 %v2293
        %v2314 = vunpack.c.l.b16 %v2294
        %v2315 = vunpack.c.l.b16 %v2295
        %v2316 = vunpack.c.l.b16 %v2296
        %v2317 = vpack.c.b16 %v2310, %v2309
        %v2318 = vpack.c.b16 %v2312, %v2311
        %v2319 = vpack.c.b16 %v2314, %v2313
        %v2320 = vpack.c.b16 %v2316, %v2315
        %v2326 = vsel %vm2202, %v2288, 0
        %2328 = vmatpush.bf16.msra.mxu0 0
        %2329 = vmatpush.bf16.msra.mxu0 0
        %2330 = vmatpush.bf16.msra.mxu0 0
        %2331 = vmatpush.bf16.msra.mxu0 0
        %2332 = vmatpush.bf16.msra.mxu0 %v2320
        %2333 = vmatpush.bf16.msra.mxu0 %v2319
        %2334 = vmatpush.bf16.msra.mxu0 %v2318
        %2335 = vmatpush.bf16.msra.mxu0 %v2317
        %2336 = vmatmul.bf16.gmra.mxu0 %v2326
        %v2337 = vpop.f32.mrf.mxu0
        %v2338 = vadd.f32 %v2299, %v2337
        %v2339 = vpop.f32.mrf.mxu0
        %2340 = vdwg.mxu0
        %v2341 = vmax.f32 %v2338, 0.0
        %vm2342 = vcmask 261120
        %v2344 = vsel %vm2342, %v2341, 0
        %2346 = vmatpush.msra.mxu0 0.0
        %2347 = vmatpush.msra.mxu0 0.0
        %2348 = vmatpush.msra.mxu0 0.0
        %2349 = vmatpush.msra.mxu0 0.0
        %2350 = vmatpush.msra.mxu0 0.0
        %2351 = vmatpush.msra.mxu0 0.0
        %2352 = vmatpush.msra.mxu0 0.0
        %2353 = vmatpush.msra.mxu0 0.0
        %2354 = vmatpush.msra.mxu0 0.0
        %2355 = vmatpush.msra.mxu0 0.0
        %2356 = vmatpush.msra.mxu0 0.0
        %2357 = vmatpush.msra.mxu0 0.0
        %2358 = vmatpush.msra.mxu0 1.0
        %2359 = vmatpush.msra.mxu0 1.0
        %2360 = vmatpush.msra.mxu0 1.0
        %2361 = vmatpush.msra.mxu0 1.0
        %2362 = vmatmul.f32.gmra.mxu0 %v2344
        %v2363 = vpop.f32.mrf.mxu0
        %v2364 = vadd.f32 0.0, %v2363
        %2365 = vdwg.mxu0
        %v2366 = vmul.f32 %v2341, %v2341
        %v2368 = vsel %vm2342, %v2366, 0
        %2370 = vmatpush.msra.mxu0 0.0
        %2371 = vmatpush.msra.mxu0 0.0
        %2372 = vmatpush.msra.mxu0 0.0
        %2373 = vmatpush.msra.mxu0 0.0
        %2374 = vmatpush.msra.mxu0 0.0
        %2375 = vmatpush.msra.mxu0 0.0
        %2376 = vmatpush.msra.mxu0 0.0
        %2377 = vmatpush.msra.mxu0 0.0
        %2378 = vmatpush.msra.mxu0 0.0
        %2379 = vmatpush.msra.mxu0 0.0
        %2380 = vmatpush.msra.mxu0 0.0
        %2381 = vmatpush.msra.mxu0 0.0
        %2382 = vmatpush.msra.mxu0 1.0
        %2383 = vmatpush.msra.mxu0 1.0
        %2384 = vmatpush.msra.mxu0 1.0
        %2385 = vmatpush.msra.mxu0 1.0
        %2386 = vmatmul.f32.gmra.mxu0 %v2368
        %v2387 = vpop.f32.mrf.mxu0
        %v2388 = vadd.f32 0.0, %v2387
        %2389 = vdwg.mxu0
        %v2390 = vmul.f32 %v2364, 0.03125
        %v2391 = vmul.f32 %v2388, 0.03125
        %v2392 = vmul.f32 %v2390, %v2390
        %v2393 = vsub.f32 %v2391, %v2392
        %v2394 = vmax.f32 %v2393, 0.0
        %v2395 = vadd.f32 %v2394, 1e-05
        %v2396 = vrsqrt.pop %v2395
        %v2397 = vmul.f32 %v2396, %v2395
        %v2398 = vmul.f32 %v2397, %v2396
        %v2399 = vmul.f32 0.5, %v2398
        %v2400 = vsub.f32 1.5, %v2399
        %v2401 = vmul.f32 %v2396, %v2400
        %vm2402 = vweird.f32 %v2395
        %vm2403 = vweird.f32 %v2396
        %vm2404 = vmor %vm2402, %vm2403
        %v2405 = vsel %vm2404, %v2396, %v2401
        %2407 = vset.pattern.permute.xlu0 0
        %2408 = vperm.xlu0 %2407, %v2390
        %v2409 = vpop.permute.xlu0 %2408
        %v2411 = vsub.f32 %v2341, %v2409
        %v2412 = vld [vmem:[#allocation16] sm:$0x1]
        %2414 = vset.pattern.permute.xlu0 0
        %2415 = vperm.xlu0 %2414, %v2405
        %v2416 = vpop.permute.xlu0 %2415
        %v2419 = vperm.slane %v2412, 0
        %v2421 = vmul.f32 %v2416, %v2419
        %v2422 = vmul.f32 %v2411, %v2421
        %v2423 = vld [vmem:[#allocation18] sm:$0x1]
        %v2425 = vperm.slane %v2423, 0
        %v2427 = vadd.f32 %v2422, %v2425
        %v2428 = vpack.c.bf16 %v2427, %v2427
        %v2429 = vld [vmem:[%s35] sm:$0xf]
        %v2430 = vld [vmem:[%s35 + $0x4] sm:$0xf]
        %v2431 = vld [vmem:[%s35 + $0x8] sm:$0xf]
        %v2432 = vld [vmem:[%s35 + $0xc] sm:$0xf]
        %v2433 = vld [vmem:[#allocation19] sm:$0x1]
        %v2435 = vperm.slane %v2433, 0
        %v2441 = vunpack.c.l.b16 %v2429
        %v2442 = vunpack.c.l.b16 %v2430
        %v2443 = vunpack.c.l.b16 %v2431
        %v2444 = vunpack.c.l.b16 %v2432
        %v2445 = vpack.c.b16 %v2442, %v2441
        %v2446 = vpack.c.b16 %v2444, %v2443
        %v2450 = vsel %vm2342, %v2428, 0
        %2452 = vmatpush.bf16.msra.mxu0 0
        %2453 = vmatpush.bf16.msra.mxu0 0
        %2454 = vmatpush.bf16.msra.mxu0 0
        %2455 = vmatpush.bf16.msra.mxu0 0
        %2456 = vmatpush.bf16.msra.mxu0 0
        %2457 = vmatpush.bf16.msra.mxu0 0
        %2458 = vmatpush.bf16.msra.mxu0 %v2446
        %2459 = vmatpush.bf16.msra.mxu0 %v2445
        %2460 = vmatmul.bf16.gmra.mxu0 %v2450
        %v2461 = vpop.f32.mrf.mxu0
        %v2462 = vadd.f32 %v2435, %v2461
        %v2463 = vpop.f32.mrf.mxu0
        %2464 = vdwg.mxu0
        %v2465 = vmax.f32 %v2462, 0.0
        %vm2466 = vcmask 130048
        %v2468 = vsel %vm2466, %v2465, 0
        %2470 = vmatpush.msra.mxu0 0.0
        %2471 = vmatpush.msra.mxu0 0.0
        %2472 = vmatpush.msra.mxu0 0.0
        %2473 = vmatpush.msra.mxu0 0.0
        %2474 = vmatpush.msra.mxu0 0.0
        %2475 = vmatpush.msra.mxu0 0.0
        %2476 = vmatpush.msra.mxu0 0.0
        %2477 = vmatpush.msra.mxu0 0.0
        %2478 = vmatpush.msra.mxu0 0.0
        %2479 = vmatpush.msra.mxu0 0.0
        %2480 = vmatpush.msra.mxu0 0.0
        %2481 = vmatpush.msra.mxu0 0.0
        %2482 = vmatpush.msra.mxu0 0.0
        %2483 = vmatpush.msra.mxu0 0.0
        %2484 = vmatpush.msra.mxu0 1.0
        %2485 = vmatpush.msra.mxu0 1.0
        %2486 = vmatmul.f32.gmra.mxu0 %v2468
        %v2487 = vpop.f32.mrf.mxu0
        %v2488 = vadd.f32 0.0, %v2487
        %2489 = vdwg.mxu0
        %v2490 = vmul.f32 %v2465, %v2465
        %v2492 = vsel %vm2466, %v2490, 0
        %2494 = vmatpush.msra.mxu0 0.0
        %2495 = vmatpush.msra.mxu0 0.0
        %2496 = vmatpush.msra.mxu0 0.0
        %2497 = vmatpush.msra.mxu0 0.0
        %2498 = vmatpush.msra.mxu0 0.0
        %2499 = vmatpush.msra.mxu0 0.0
        %2500 = vmatpush.msra.mxu0 0.0
        %2501 = vmatpush.msra.mxu0 0.0
        %2502 = vmatpush.msra.mxu0 0.0
        %2503 = vmatpush.msra.mxu0 0.0
        %2504 = vmatpush.msra.mxu0 0.0
        %2505 = vmatpush.msra.mxu0 0.0
        %2506 = vmatpush.msra.mxu0 0.0
        %2507 = vmatpush.msra.mxu0 0.0
        %2508 = vmatpush.msra.mxu0 1.0
        %2509 = vmatpush.msra.mxu0 1.0
        %2510 = vmatmul.f32.gmra.mxu0 %v2492
        %v2511 = vpop.f32.mrf.mxu0
        %v2512 = vadd.f32 0.0, %v2511
        %2513 = vdwg.mxu0
        %v2514 = vmul.f32 %v2488, 0.0625
        %v2515 = vmul.f32 %v2512, 0.0625
        %v2516 = vmul.f32 %v2514, %v2514
        %v2517 = vsub.f32 %v2515, %v2516
        %v2518 = vmax.f32 %v2517, 0.0
        %v2519 = vadd.f32 %v2518, 1e-05
        %v2520 = vrsqrt.pop %v2519
        %v2521 = vmul.f32 %v2520, %v2519
        %v2522 = vmul.f32 %v2521, %v2520
        %v2523 = vmul.f32 0.5, %v2522
        %v2524 = vsub.f32 1.5, %v2523
        %v2525 = vmul.f32 %v2520, %v2524
        %vm2526 = vweird.f32 %v2519
        %vm2527 = vweird.f32 %v2520
        %vm2528 = vmor %vm2526, %vm2527
        %v2529 = vsel %vm2528, %v2520, %v2525
        %2531 = vset.pattern.permute.xlu0 0
        %2532 = vperm.xlu0 %2531, %v2514
        %v2533 = vpop.permute.xlu0 %2532
        %v2535 = vsub.f32 %v2465, %v2533
        %v2536 = vld [vmem:[#allocation21] sm:$0x1]
        %2538 = vset.pattern.permute.xlu0 0
        %2539 = vperm.xlu0 %2538, %v2529
        %v2540 = vpop.permute.xlu0 %2539
        %v2543 = vperm.slane %v2536, 0
        %v2545 = vmul.f32 %v2540, %v2543
        %v2546 = vmul.f32 %v2535, %v2545
        %v2547 = vld [vmem:[#allocation22] sm:$0x1]
        %v2549 = vperm.slane %v2547, 0
        %v2551 = vadd.f32 %v2546, %v2549
        %v2552 = vpack.c.bf16 %v2551, %v2551
        %v2553 = vld [vmem:[%s43] sm:$0xf]
        %v2554 = vld [vmem:[%s43 + $0x4] sm:$0xf]
        %v2555 = vld [vmem:[#allocation24] sm:$0x1]
        %v2557 = vperm.slane %v2555, 0
        %v2561 = vunpack.c.l.b16 %v2553
        %v2562 = vunpack.c.l.b16 %v2554
        %v2563 = vpack.c.b16 %v2562, %v2561
        %v2566 = vsel %vm2466, %v2552, 0
        %2568 = vmatpush.bf16.msra.mxu0 0
        %2569 = vmatpush.bf16.msra.mxu0 0
        %2570 = vmatpush.bf16.msra.mxu0 0
        %2571 = vmatpush.bf16.msra.mxu0 0
        %2572 = vmatpush.bf16.msra.mxu0 0
        %2573 = vmatpush.bf16.msra.mxu0 0
        %2574 = vmatpush.bf16.msra.mxu0 0
        %2575 = vmatpush.bf16.msra.mxu0 %v2563
        %2576 = vmatmul.bf16.gmra.mxu0 %v2566
        %v2577 = vpop.f32.mrf.mxu0
        %v2578 = vadd.f32 %v2557, %v2577
        %v2579 = vpop.f32.mrf.mxu0
        %2580 = vdwg.mxu0
        %v2581 = vpack.c.bf16 %v2578, %v2578
        %v2582 = vld [vmem:[#allocation25] sm:$0xf]
        %v2583 = vld [vmem:[#allocation27] sm:$0x1]
        %v2585 = vperm.slane %v2583, 0
        %vm2587 = vcmask 64512
        %v2589 = vsel %vm2587, %v2581, 0
        %vm2591 = vcmask 1043456
        %v2593 = vsel %vm2591, %v2582, 0
        %2595 = vmatpush.bf16.msra.mxu0 0
        %2596 = vmatpush.bf16.msra.mxu0 0
        %2597 = vmatpush.bf16.msra.mxu0 0
        %2598 = vmatpush.bf16.msra.mxu0 0
        %2599 = vmatpush.bf16.msra.mxu0 0
        %2600 = vmatpush.bf16.msra.mxu0 0
        %2601 = vmatpush.bf16.msra.mxu0 0
        %2602 = vmatpush.bf16.msra.mxu0 %v2593
        %2603 = vmatmul.bf16.gmra.mxu0 %v2589
        %v2604 = vpop.f32.mrf.mxu0
        %v2605 = vadd.f32 %v2585, %v2604
        %v2606 = vpop.f32.mrf.mxu0
        %2607 = vdwg.mxu0
        %v2608 = vmax.f32 %v2605, 0.0
        %v2610 = vsel %vm2466, %v2608, 0
        %2612 = vmatpush.msra.mxu0 0.0
        %2613 = vmatpush.msra.mxu0 0.0
        %2614 = vmatpush.msra.mxu0 0.0
        %2615 = vmatpush.msra.mxu0 0.0
        %2616 = vmatpush.msra.mxu0 0.0
        %2617 = vmatpush.msra.mxu0 0.0
        %2618 = vmatpush.msra.mxu0 0.0
        %2619 = vmatpush.msra.mxu0 0.0
        %2620 = vmatpush.msra.mxu0 0.0
        %2621 = vmatpush.msra.mxu0 0.0
        %2622 = vmatpush.msra.mxu0 0.0
        %2623 = vmatpush.msra.mxu0 0.0
        %2624 = vmatpush.msra.mxu0 0.0
        %2625 = vmatpush.msra.mxu0 0.0
        %2626 = vmatpush.msra.mxu0 1.0
        %2627 = vmatpush.msra.mxu0 1.0
        %2628 = vmatmul.f32.gmra.mxu0 %v2610
        %v2629 = vpop.f32.mrf.mxu0
        %v2630 = vadd.f32 0.0, %v2629
        %2631 = vdwg.mxu0
        %v2632 = vmul.f32 %v2608, %v2608
        %v2634 = vsel %vm2466, %v2632, 0
        %2636 = vmatpush.msra.mxu0 0.0
        %2637 = vmatpush.msra.mxu0 0.0
        %2638 = vmatpush.msra.mxu0 0.0
        %2639 = vmatpush.msra.mxu0 0.0
        %2640 = vmatpush.msra.mxu0 0.0
        %2641 = vmatpush.msra.mxu0 0.0
        %2642 = vmatpush.msra.mxu0 0.0
        %2643 = vmatpush.msra.mxu0 0.0
        %2644 = vmatpush.msra.mxu0 0.0
        %2645 = vmatpush.msra.mxu0 0.0
        %2646 = vmatpush.msra.mxu0 0.0
        %2647 = vmatpush.msra.mxu0 0.0
        %2648 = vmatpush.msra.mxu0 0.0
        %2649 = vmatpush.msra.mxu0 0.0
        %2650 = vmatpush.msra.mxu0 1.0
        %2651 = vmatpush.msra.mxu0 1.0
        %2652 = vmatmul.f32.gmra.mxu0 %v2634
        %v2653 = vpop.f32.mrf.mxu0
        %v2654 = vadd.f32 0.0, %v2653
        %2655 = vdwg.mxu0
        %v2656 = vmul.f32 %v2630, 0.0625
        %v2657 = vmul.f32 %v2654, 0.0625
        %v2658 = vmul.f32 %v2656, %v2656
        %v2659 = vsub.f32 %v2657, %v2658
        %v2660 = vmax.f32 %v2659, 0.0
        %v2661 = vadd.f32 %v2660, 1e-05
        %v2662 = vrsqrt.pop %v2661
        %v2663 = vmul.f32 %v2662, %v2661
        %v2664 = vmul.f32 %v2663, %v2662
        %v2665 = vmul.f32 0.5, %v2664
        %v2666 = vsub.f32 1.5, %v2665
        %v2667 = vmul.f32 %v2662, %v2666
        %vm2668 = vweird.f32 %v2661
        %vm2669 = vweird.f32 %v2662
        %vm2670 = vmor %vm2668, %vm2669
        %v2671 = vsel %vm2670, %v2662, %v2667
        %2673 = vset.pattern.permute.xlu0 0
        %2674 = vperm.xlu0 %2673, %v2656
        %v2675 = vpop.permute.xlu0 %2674
        %v2677 = vsub.f32 %v2608, %v2675
        %v2678 = vld [vmem:[#allocation28] sm:$0x1]
        %2680 = vset.pattern.permute.xlu0 0
        %2681 = vperm.xlu0 %2680, %v2671
        %v2682 = vpop.permute.xlu0 %2681
        %v2685 = vperm.slane %v2678, 0
        %v2687 = vmul.f32 %v2682, %v2685
        %v2688 = vmul.f32 %v2677, %v2687
        %v2689 = vld [vmem:[#allocation30] sm:$0x1]
        %v2691 = vperm.slane %v2689, 0
        %v2693 = vadd.f32 %v2688, %v2691
        %v2694 = vpack.c.bf16 %v2693, %v2693
        %v2695 = vld [vmem:[%s55] sm:$0xf]
        %v2696 = vld [vmem:[%s55 + $0x4] sm:$0xf]
        %v2697 = vld [vmem:[#allocation31] sm:$0x1]
        %v2699 = vperm.slane %v2697, 0
        %v2703 = vunpack.c.l.b16 %v2695
        %v2704 = vunpack.c.l.b16 %v2696
        %v2705 = vpack.c.b16 %v2704, %v2703
        %v2708 = vsel %vm2466, %v2694, 0
        %2710 = vmatpush.bf16.msra.mxu0 0
        %2711 = vmatpush.bf16.msra.mxu0 0
        %2712 = vmatpush.bf16.msra.mxu0 0
        %2713 = vmatpush.bf16.msra.mxu0 0
        %2714 = vmatpush.bf16.msra.mxu0 0
        %2715 = vmatpush.bf16.msra.mxu0 0
        %2716 = vmatpush.bf16.msra.mxu0 0
        %2717 = vmatpush.bf16.msra.mxu0 %v2705
        %2718 = vmatmul.bf16.gmra.mxu0 %v2708
        %v2719 = vpop.f32.mrf.mxu0
        %v2720 = vadd.f32 %v2699, %v2719
        %v2721 = vpop.f32.mrf.mxu0
        %2722 = vdwg.mxu0
        %v2723 = vmax.f32 %v2720, 0.0
        %v2725 = vsel %vm2342, %v2723, 0
        %2727 = vmatpush.msra.mxu0 0.0
        %2728 = vmatpush.msra.mxu0 0.0
        %2729 = vmatpush.msra.mxu0 0.0
        %2730 = vmatpush.msra.mxu0 0.0
        %2731 = vmatpush.msra.mxu0 0.0
        %2732 = vmatpush.msra.mxu0 0.0
        %2733 = vmatpush.msra.mxu0 0.0
        %2734 = vmatpush.msra.mxu0 0.0
        %2735 = vmatpush.msra.mxu0 0.0
        %2736 = vmatpush.msra.mxu0 0.0
        %2737 = vmatpush.msra.mxu0 0.0
        %2738 = vmatpush.msra.mxu0 0.0
        %2739 = vmatpush.msra.mxu0 1.0
        %2740 = vmatpush.msra.mxu0 1.0
        %2741 = vmatpush.msra.mxu0 1.0
        %2742 = vmatpush.msra.mxu0 1.0
        %2743 = vmatmul.f32.gmra.mxu0 %v2725
        %v2744 = vpop.f32.mrf.mxu0
        %v2745 = vadd.f32 0.0, %v2744
        %2746 = vdwg.mxu0
        %v2747 = vmul.f32 %v2723, %v2723
        %v2749 = vsel %vm2342, %v2747, 0
        %2751 = vmatpush.msra.mxu0 0.0
        %2752 = vmatpush.msra.mxu0 0.0
        %2753 = vmatpush.msra.mxu0 0.0
        %2754 = vmatpush.msra.mxu0 0.0
        %2755 = vmatpush.msra.mxu0 0.0
        %2756 = vmatpush.msra.mxu0 0.0
        %2757 = vmatpush.msra.mxu0 0.0
        %2758 = vmatpush.msra.mxu0 0.0
        %2759 = vmatpush.msra.mxu0 0.0
        %2760 = vmatpush.msra.mxu0 0.0
        %2761 = vmatpush.msra.mxu0 0.0
        %2762 = vmatpush.msra.mxu0 0.0
        %2763 = vmatpush.msra.mxu0 1.0
        %2764 = vmatpush.msra.mxu0 1.0
        %2765 = vmatpush.msra.mxu0 1.0
        %2766 = vmatpush.msra.mxu0 1.0
        %2767 = vmatmul.f32.gmra.mxu0 %v2749
        %v2768 = vpop.f32.mrf.mxu0
        %v2769 = vadd.f32 0.0, %v2768
        %2770 = vdwg.mxu0
        %v2771 = vmul.f32 %v2745, 0.03125
        %v2772 = vmul.f32 %v2769, 0.03125
        %v2773 = vmul.f32 %v2771, %v2771
        %v2774 = vsub.f32 %v2772, %v2773
        %v2775 = vmax.f32 %v2774, 0.0
        %v2776 = vadd.f32 %v2775, 1e-05
        %v2777 = vrsqrt.pop %v2776
        %v2778 = vmul.f32 %v2777, %v2776
        %v2779 = vmul.f32 %v2778, %v2777
        %v2780 = vmul.f32 0.5, %v2779
        %v2781 = vsub.f32 1.5, %v2780
        %v2782 = vmul.f32 %v2777, %v2781
        %vm2783 = vweird.f32 %v2776
        %vm2784 = vweird.f32 %v2777
        %vm2785 = vmor %vm2783, %vm2784
        %v2786 = vsel %vm2785, %v2777, %v2782
        %2788 = vset.pattern.permute.xlu0 0
        %2789 = vperm.xlu0 %2788, %v2771
        %v2790 = vpop.permute.xlu0 %2789
        %v2792 = vsub.f32 %v2723, %v2790
        %v2793 = vld [vmem:[#allocation33] sm:$0x1]
        %2795 = vset.pattern.permute.xlu0 0
        %2796 = vperm.xlu0 %2795, %v2786
        %v2797 = vpop.permute.xlu0 %2796
        %v2800 = vperm.slane %v2793, 0
        %v2802 = vmul.f32 %v2797, %v2800
        %v2803 = vmul.f32 %v2792, %v2802
        %v2804 = vld [vmem:[#allocation34] sm:$0x1]
        %v2806 = vperm.slane %v2804, 0
        %v2808 = vadd.f32 %v2803, %v2806
        %v2809 = vpack.c.bf16 %v2808, %v2808
        %v2810 = vld [vmem:[%s63] sm:$0xf]
        %v2811 = vld [vmem:[%s63 + $0x4] sm:$0xf]
        %v2812 = vld [vmem:[%s63 + $0x8] sm:$0xf]
        %v2813 = vld [vmem:[%s63 + $0xc] sm:$0xf]
        %v2814 = vld [vmem:[%s65] sm:$0x1]
        %v2816 = vperm.slane %v2814, 0
        %v2822 = vunpack.c.l.b16 %v2810
        %v2823 = vunpack.c.l.b16 %v2811
        %v2824 = vunpack.c.l.b16 %v2812
        %v2825 = vunpack.c.l.b16 %v2813
        %v2826 = vpack.c.b16 %v2823, %v2822
        %v2827 = vpack.c.b16 %v2825, %v2824
        %v2831 = vsel %vm2342, %v2809, 0
        %2833 = vmatpush.bf16.msra.mxu0 0
        %2834 = vmatpush.bf16.msra.mxu0 0
        %2835 = vmatpush.bf16.msra.mxu0 0
        %2836 = vmatpush.bf16.msra.mxu0 0
        %2837 = vmatpush.bf16.msra.mxu0 0
        %2838 = vmatpush.bf16.msra.mxu0 0
        %2839 = vmatpush.bf16.msra.mxu0 %v2827
        %2840 = vmatpush.bf16.msra.mxu0 %v2826
        %2841 = vmatmul.bf16.gmra.mxu0 %v2831
        %v2842 = vpop.f32.mrf.mxu0
        %v2843 = vadd.f32 %v2816, %v2842
        %v2844 = vpop.f32.mrf.mxu0
        %2845 = vdwg.mxu0
        %v2846 = vmax.f32 %v2843, 0.0
        %v2848 = vsel %vm2202, %v2846, 0
        %2850 = vmatpush.msra.mxu0 0.0
        %2851 = vmatpush.msra.mxu0 0.0
        %2852 = vmatpush.msra.mxu0 0.0
        %2853 = vmatpush.msra.mxu0 0.0
        %2854 = vmatpush.msra.mxu0 0.0
        %2855 = vmatpush.msra.mxu0 0.0
        %2856 = vmatpush.msra.mxu0 0.0
        %2857 = vmatpush.msra.mxu0 0.0
        %2858 = vmatpush.msra.mxu0 1.0
        %2859 = vmatpush.msra.mxu0 1.0
        %2860 = vmatpush.msra.mxu0 1.0
        %2861 = vmatpush.msra.mxu0 1.0
        %2862 = vmatpush.msra.mxu0 1.0
        %2863 = vmatpush.msra.mxu0 1.0
        %2864 = vmatpush.msra.mxu0 1.0
        %2865 = vmatpush.msra.mxu0 1.0
        %2866 = vmatmul.f32.gmra.mxu0 %v2848
        %v2867 = vpop.f32.mrf.mxu0
        %v2868 = vadd.f32 0.0, %v2867
        %2869 = vdwg.mxu0
        %v2870 = vmul.f32 %v2846, %v2846
        %v2872 = vsel %vm2202, %v2870, 0
        %2874 = vmatpush.msra.mxu0 0.0
        %2875 = vmatpush.msra.mxu0 0.0
        %2876 = vmatpush.msra.mxu0 0.0
        %2877 = vmatpush.msra.mxu0 0.0
        %2878 = vmatpush.msra.mxu0 0.0
        %2879 = vmatpush.msra.mxu0 0.0
        %2880 = vmatpush.msra.mxu0 0.0
        %2881 = vmatpush.msra.mxu0 0.0
        %2882 = vmatpush.msra.mxu0 1.0
        %2883 = vmatpush.msra.mxu0 1.0
        %2884 = vmatpush.msra.mxu0 1.0
        %2885 = vmatpush.msra.mxu0 1.0
        %2886 = vmatpush.msra.mxu0 1.0
        %2887 = vmatpush.msra.mxu0 1.0
        %2888 = vmatpush.msra.mxu0 1.0
        %2889 = vmatpush.msra.mxu0 1.0
        %2890 = vmatmul.f32.gmra.mxu0 %v2872
        %v2891 = vpop.f32.mrf.mxu0
        %v2892 = vadd.f32 0.0, %v2891
        %2893 = vdwg.mxu0
        %v2894 = vmul.f32 %v2868, 0.015625
        %v2895 = vmul.f32 %v2892, 0.015625
        %v2896 = vmul.f32 %v2894, %v2894
        %v2897 = vsub.f32 %v2895, %v2896
        %v2898 = vmax.f32 %v2897, 0.0
        %v2899 = vadd.f32 %v2898, 1e-05
        %v2900 = vrsqrt.pop %v2899
        %v2901 = vmul.f32 %v2900, %v2899
        %v2902 = vmul.f32 %v2901, %v2900
        %v2903 = vmul.f32 0.5, %v2902
        %v2904 = vsub.f32 1.5, %v2903
        %v2905 = vmul.f32 %v2900, %v2904
        %vm2906 = vweird.f32 %v2899
        %vm2907 = vweird.f32 %v2900
        %vm2908 = vmor %vm2906, %vm2907
        %v2909 = vsel %vm2908, %v2900, %v2905
        %2911 = vset.pattern.permute.xlu0 0
        %2912 = vperm.xlu0 %2911, %v2894
        %v2913 = vpop.permute.xlu0 %2912
        %v2915 = vsub.f32 %v2846, %v2913
        %v2916 = vld [vmem:[%s67] sm:$0x1]
        %2918 = vset.pattern.permute.xlu0 0
        %2919 = vperm.xlu0 %2918, %v2909
        %v2920 = vpop.permute.xlu0 %2919
        %v2923 = vperm.slane %v2916, 0
        %v2925 = vmul.f32 %v2920, %v2923
        %v2926 = vmul.f32 %v2915, %v2925
        %v2927 = vld [vmem:[#allocation36] sm:$0x1]
        %v2929 = vperm.slane %v2927, 0
        %v2931 = vadd.f32 %v2926, %v2929
        %v2932 = vpack.c.bf16 %v2931, %v2931
        %v2933 = vld [vmem:[#allocation37] sm:$0xf]
        %v2934 = vld [vmem:[#allocation37 + $0x4] sm:$0xf]
        %v2935 = vld [vmem:[#allocation37 + $0x8] sm:$0xf]
        %v2936 = vld [vmem:[#allocation37 + $0xc] sm:$0xf]
        %v2937 = vld [vmem:[#allocation37 + $0x10] sm:$0xf]
        %v2938 = vld [vmem:[#allocation37 + $0x14] sm:$0xf]
        %v2939 = vld [vmem:[#allocation37 + $0x18] sm:$0xf]
        %v2940 = vld [vmem:[#allocation37 + $0x1c] sm:$0xf]
        %v2941 = vld [vmem:[%s73] sm:$0x1]
        %v2943 = vperm.slane %v2941, 0
        %v2953 = vunpack.c.l.b16 %v2933
        %v2954 = vunpack.c.l.b16 %v2934
        %v2955 = vunpack.c.l.b16 %v2935
        %v2956 = vunpack.c.l.b16 %v2936
        %v2957 = vunpack.c.l.b16 %v2937
        %v2958 = vunpack.c.l.b16 %v2938
        %v2959 = vunpack.c.l.b16 %v2939
        %v2960 = vunpack.c.l.b16 %v2940
        %v2961 = vpack.c.b16 %v2954, %v2953
        %v2962 = vpack.c.b16 %v2956, %v2955
        %v2963 = vpack.c.b16 %v2958, %v2957
        %v2964 = vpack.c.b16 %v2960, %v2959
        %v2970 = vsel %vm2202, %v2932, 0
        %2972 = vmatpush.bf16.msra.mxu0 0
        %2973 = vmatpush.bf16.msra.mxu0 0
        %2974 = vmatpush.bf16.msra.mxu0 0
        %2975 = vmatpush.bf16.msra.mxu0 0
        %2976 = vmatpush.bf16.msra.mxu0 %v2964
        %2977 = vmatpush.bf16.msra.mxu0 %v2963
        %2978 = vmatpush.bf16.msra.mxu0 %v2962
        %2979 = vmatpush.bf16.msra.mxu0 %v2961
        %2980 = vmatmul.bf16.gmra.mxu0 %v2970
        %v2981 = vpop.f32.mrf.mxu0
        %v2982 = vadd.f32 %v2943, %v2981
        %v2983 = vpop.f32.mrf.mxu0
        %2984 = vdwg.mxu0
        %v2985 = vmax.f32 %v2982, 0.0
        %2986 = vmatpush.msra.mxu0 1.0
        %2987 = vmatpush.msra.mxu0 1.0
        %2988 = vmatpush.msra.mxu0 1.0
        %2989 = vmatpush.msra.mxu0 1.0
        %2990 = vmatpush.msra.mxu0 1.0
        %2991 = vmatpush.msra.mxu0 1.0
        %2992 = vmatpush.msra.mxu0 1.0
        %2993 = vmatpush.msra.mxu0 1.0
        %2994 = vmatpush.msra.mxu0 1.0
        %2995 = vmatpush.msra.mxu0 1.0
        %2996 = vmatpush.msra.mxu0 1.0
        %2997 = vmatpush.msra.mxu0 1.0
        %2998 = vmatpush.msra.mxu0 1.0
        %2999 = vmatpush.msra.mxu0 1.0
        %3000 = vmatpush.msra.mxu0 1.0
        %3001 = vmatpush.msra.mxu0 1.0
        %3002 = vmatmul.f32.gmra.mxu0 %v2985
        %v3003 = vpop.f32.mrf.mxu0
        %v3004 = vadd.f32 0.0, %v3003
        %3005 = vdwg.mxu0
        %v3006 = vmul.f32 %v2985, %v2985
        %3007 = vmatpush.msra.mxu0 1.0
        %3008 = vmatpush.msra.mxu0 1.0
        %3009 = vmatpush.msra.mxu0 1.0
        %3010 = vmatpush.msra.mxu0 1.0
        %3011 = vmatpush.msra.mxu0 1.0
        %3012 = vmatpush.msra.mxu0 1.0
        %3013 = vmatpush.msra.mxu0 1.0
        %3014 = vmatpush.msra.mxu0 1.0
        %3015 = vmatpush.msra.mxu0 1.0
        %3016 = vmatpush.msra.mxu0 1.0
        %3017 = vmatpush.msra.mxu0 1.0
        %3018 = vmatpush.msra.mxu0 1.0
        %3019 = vmatpush.msra.mxu0 1.0
        %3020 = vmatpush.msra.mxu0 1.0
        %3021 = vmatpush.msra.mxu0 1.0
        %3022 = vmatpush.msra.mxu0 1.0
        %3023 = vmatmul.f32.gmra.mxu0 %v3006
        %v3024 = vpop.f32.mrf.mxu0
        %v3025 = vadd.f32 0.0, %v3024
        %3026 = vdwg.mxu0
        %v3027 = vmul.f32 %v3004, 0.0078125
        %v3028 = vmul.f32 %v3025, 0.0078125
        %v3029 = vmul.f32 %v3027, %v3027
        %v3030 = vsub.f32 %v3028, %v3029
        %v3031 = vmax.f32 %v3030, 0.0
        %v3032 = vadd.f32 %v3031, 1e-05
        %v3033 = vrsqrt.pop %v3032
        %v3034 = vmul.f32 %v3033, %v3032
        %v3035 = vmul.f32 %v3034, %v3033
        %v3036 = vmul.f32 0.5, %v3035
        %v3037 = vsub.f32 1.5, %v3036
        %v3038 = vmul.f32 %v3033, %v3037
        %vm3039 = vweird.f32 %v3032
        %vm3040 = vweird.f32 %v3033
        %vm3041 = vmor %vm3039, %vm3040
        %v3042 = vsel %vm3041, %v3033, %v3038
        %3044 = vset.pattern.permute.xlu0 0
        %3045 = vperm.xlu0 %3044, %v3027
        %v3046 = vpop.permute.xlu0 %3045
        %v3048 = vsub.f32 %v2985, %v3046
        %v3049 = vld [vmem:[%s75] sm:$0x1]
        %3051 = vset.pattern.permute.xlu0 0
        %3052 = vperm.xlu0 %3051, %v3042
        %v3053 = vpop.permute.xlu0 %3052
        %v3056 = vperm.slane %v3049, 0
        %v3058 = vmul.f32 %v3053, %v3056
        %v3059 = vmul.f32 %v3048, %v3058
        %v3060 = vld [vmem:[%s77] sm:$0x1]
        %v3062 = vperm.slane %v3060, 0
        %v3064 = vadd.f32 %v3059, %v3062
        %v3065 = vpack.c.bf16 %v3064, %v3064
        %v3066 = vld [vmem:[%s79] sm:$0xff]
        %v3067 = vld [vmem:[%s79 + $0x8] sm:$0xff]
        %v3068 = vld [vmem:[%s79 + $0x10] sm:$0xff]
        %v3069 = vld [vmem:[%s79 + $0x18] sm:$0xff]
        %v3070 = vld [vmem:[%s79 + $0x20] sm:$0xff]
        %v3071 = vld [vmem:[%s79 + $0x28] sm:$0xff]
        %v3072 = vld [vmem:[%s79 + $0x30] sm:$0xff]
        %v3073 = vld [vmem:[%s79 + $0x38] sm:$0xff]
        %v3074 = vld [vmem:[%s79 + $0x40] sm:$0xff]
        %v3075 = vld [vmem:[%s79 + $0x48] sm:$0xff]
        %v3076 = vld [vmem:[%s79 + $0x50] sm:$0xff]
        %v3077 = vld [vmem:[%s79 + $0x58] sm:$0xff]
        %v3078 = vld [vmem:[%s79 + $0x60] sm:$0xff]
        %v3079 = vld [vmem:[%s79 + $0x68] sm:$0xff]
        %v3080 = vld [vmem:[%s79 + $0x70] sm:$0xff]
        %v3081 = vld [vmem:[%s79 + $0x78] sm:$0xff]
        %v3082 = vld [vmem:[%s81] sm:$0x3]
        %v3084 = vperm.slane %v3082, 0
        %v3085 = vperm.slane %v3082, 1
        %v3104 = vunpack.c.l.b16 %v3066
        %v3105 = vunpack.c.h.b16 %v3066
        %v3106 = vunpack.c.l.b16 %v3067
        %v3107 = vunpack.c.h.b16 %v3067
        %v3108 = vunpack.c.l.b16 %v3068
        %v3109 = vunpack.c.h.b16 %v3068
        %v3110 = vunpack.c.l.b16 %v3069
        %v3111 = vunpack.c.h.b16 %v3069
        %v3112 = vunpack.c.l.b16 %v3070
        %v3113 = vunpack.c.h.b16 %v3070
        %v3114 = vunpack.c.l.b16 %v3071
        %v3115 = vunpack.c.h.b16 %v3071
        %v3116 = vunpack.c.l.b16 %v3072
        %v3117 = vunpack.c.h.b16 %v3072
        %v3118 = vunpack.c.l.b16 %v3073
        %v3119 = vunpack.c.h.b16 %v3073
        %v3120 = vunpack.c.l.b16 %v3074
        %v3121 = vunpack.c.h.b16 %v3074
        %v3122 = vunpack.c.l.b16 %v3075
        %v3123 = vunpack.c.h.b16 %v3075
        %v3124 = vunpack.c.l.b16 %v3076
        %v3125 = vunpack.c.h.b16 %v3076
        %v3126 = vunpack.c.l.b16 %v3077
        %v3127 = vunpack.c.h.b16 %v3077
        %v3128 = vunpack.c.l.b16 %v3078
        %v3129 = vunpack.c.h.b16 %v3078
        %v3130 = vunpack.c.l.b16 %v3079
        %v3131 = vunpack.c.h.b16 %v3079
        %v3132 = vunpack.c.l.b16 %v3080
        %v3133 = vunpack.c.h.b16 %v3080
        %v3134 = vunpack.c.l.b16 %v3081
        %v3135 = vunpack.c.h.b16 %v3081
        %v3136 = vpack.c.b16 %v3106, %v3104
        %v3137 = vpack.c.b16 %v3107, %v3105
        %v3138 = vpack.c.b16 %v3110, %v3108
        %v3139 = vpack.c.b16 %v3111, %v3109
        %v3140 = vpack.c.b16 %v3114, %v3112
        %v3141 = vpack.c.b16 %v3115, %v3113
        %v3142 = vpack.c.b16 %v3118, %v3116
        %v3143 = vpack.c.b16 %v3119, %v3117
        %v3144 = vpack.c.b16 %v3122, %v3120
        %v3145 = vpack.c.b16 %v3123, %v3121
        %v3146 = vpack.c.b16 %v3126, %v3124
        %v3147 = vpack.c.b16 %v3127, %v3125
        %v3148 = vpack.c.b16 %v3130, %v3128
        %v3149 = vpack.c.b16 %v3131, %v3129
        %v3150 = vpack.c.b16 %v3134, %v3132
        %v3151 = vpack.c.b16 %v3135, %v3133
        %3168 = vmatpush.bf16.msra.mxu0 %v3150
        %3169 = vmatpush.bf16.msra.mxu0 %v3148
        %3170 = vmatpush.bf16.msra.mxu0 %v3146
        %3171 = vmatpush.bf16.msra.mxu0 %v3144
        %3172 = vmatpush.bf16.msra.mxu0 %v3142
        %3173 = vmatpush.bf16.msra.mxu0 %v3140
        %3174 = vmatpush.bf16.msra.mxu0 %v3138
        %3175 = vmatpush.bf16.msra.mxu0 %v3136
        %3176 = vmatmul.bf16.gmra.mxu0 %v3065
        %v3177 = vpop.f32.mrf.mxu0
        %v3178 = vadd.f32 %v3084, %v3177
        %v3179 = vpop.f32.mrf.mxu0
        %3180 = vdwg.mxu0
        %3181 = vmatpush.bf16.msra.mxu0 %v3151
        %3182 = vmatpush.bf16.msra.mxu0 %v3149
        %3183 = vmatpush.bf16.msra.mxu0 %v3147
        %3184 = vmatpush.bf16.msra.mxu0 %v3145
        %3185 = vmatpush.bf16.msra.mxu0 %v3143
        %3186 = vmatpush.bf16.msra.mxu0 %v3141
        %3187 = vmatpush.bf16.msra.mxu0 %v3139
        %3188 = vmatpush.bf16.msra.mxu0 %v3137
        %3189 = vmatmul.bf16.gmra.mxu0 %v3065
        %v3190 = vpop.f32.mrf.mxu0
        %v3191 = vadd.f32 %v3085, %v3190
        %v3192 = vpop.f32.mrf.mxu0
        %3193 = vdwg.mxu0
        %v3194 = vmax.f32 %v3178, 0.0
        %v3195 = vmax.f32 %v3191, 0.0
        %3196 = vmatpush.msra.mxu0 1.0
        %3197 = vmatpush.msra.mxu0 1.0
        %3198 = vmatpush.msra.mxu0 1.0
        %3199 = vmatpush.msra.mxu0 1.0
        %3200 = vmatpush.msra.mxu0 1.0
        %3201 = vmatpush.msra.mxu0 1.0
        %3202 = vmatpush.msra.mxu0 1.0
        %3203 = vmatpush.msra.mxu0 1.0
        %3204 = vmatpush.msra.mxu0 1.0
        %3205 = vmatpush.msra.mxu0 1.0
        %3206 = vmatpush.msra.mxu0 1.0
        %3207 = vmatpush.msra.mxu0 1.0
        %3208 = vmatpush.msra.mxu0 1.0
        %3209 = vmatpush.msra.mxu0 1.0
        %3210 = vmatpush.msra.mxu0 1.0
        %3211 = vmatpush.msra.mxu0 1.0
        %3212 = vmatmul.f32.gmra.mxu0 %v3194
        %v3213 = vpop.f32.mrf.mxu0
        %v3214 = vadd.f32 0.0, %v3213
        %3215 = vdwg.mxu0
        %3216 = vmatpush.msra.mxu0 1.0
        %3217 = vmatpush.msra.mxu0 1.0
        %3218 = vmatpush.msra.mxu0 1.0
        %3219 = vmatpush.msra.mxu0 1.0
        %3220 = vmatpush.msra.mxu0 1.0
        %3221 = vmatpush.msra.mxu0 1.0
        %3222 = vmatpush.msra.mxu0 1.0
        %3223 = vmatpush.msra.mxu0 1.0
        %3224 = vmatpush.msra.mxu0 1.0
        %3225 = vmatpush.msra.mxu0 1.0
        %3226 = vmatpush.msra.mxu0 1.0
        %3227 = vmatpush.msra.mxu0 1.0
        %3228 = vmatpush.msra.mxu0 1.0
        %3229 = vmatpush.msra.mxu0 1.0
        %3230 = vmatpush.msra.mxu0 1.0
        %3231 = vmatpush.msra.mxu0 1.0
        %3232 = vmatmul.f32.gmra.mxu0 %v3195
        %v3233 = vpop.f32.mrf.mxu0
        %v3234 = vadd.f32 %v3214, %v3233
        %3235 = vdwg.mxu0
        %v3236 = vmul.f32 %v3194, %v3194
        %v3237 = vmul.f32 %v3195, %v3195
        %3238 = vmatpush.msra.mxu0 1.0
        %3239 = vmatpush.msra.mxu0 1.0
        %3240 = vmatpush.msra.mxu0 1.0
        %3241 = vmatpush.msra.mxu0 1.0
        %3242 = vmatpush.msra.mxu0 1.0
        %3243 = vmatpush.msra.mxu0 1.0
        %3244 = vmatpush.msra.mxu0 1.0
        %3245 = vmatpush.msra.mxu0 1.0
        %3246 = vmatpush.msra.mxu0 1.0
        %3247 = vmatpush.msra.mxu0 1.0
        %3248 = vmatpush.msra.mxu0 1.0
        %3249 = vmatpush.msra.mxu0 1.0
        %3250 = vmatpush.msra.mxu0 1.0
        %3251 = vmatpush.msra.mxu0 1.0
        %3252 = vmatpush.msra.mxu0 1.0
        %3253 = vmatpush.msra.mxu0 1.0
        %3254 = vmatmul.f32.gmra.mxu0 %v3236
        %v3255 = vpop.f32.mrf.mxu0
        %v3256 = vadd.f32 0.0, %v3255
        %3257 = vdwg.mxu0
        %3258 = vmatpush.msra.mxu0 1.0
        %3259 = vmatpush.msra.mxu0 1.0
        %3260 = vmatpush.msra.mxu0 1.0
        %3261 = vmatpush.msra.mxu0 1.0
        %3262 = vmatpush.msra.mxu0 1.0
        %3263 = vmatpush.msra.mxu0 1.0
        %3264 = vmatpush.msra.mxu0 1.0
        %3265 = vmatpush.msra.mxu0 1.0
        %3266 = vmatpush.msra.mxu0 1.0
        %3267 = vmatpush.msra.mxu0 1.0
        %3268 = vmatpush.msra.mxu0 1.0
        %3269 = vmatpush.msra.mxu0 1.0
        %3270 = vmatpush.msra.mxu0 1.0
        %3271 = vmatpush.msra.mxu0 1.0
        %3272 = vmatpush.msra.mxu0 1.0
        %3273 = vmatpush.msra.mxu0 1.0
        %3274 = vmatmul.f32.gmra.mxu0 %v3237
        %v3275 = vpop.f32.mrf.mxu0
        %v3276 = vadd.f32 %v3256, %v3275
        %3277 = vdwg.mxu0
        %v3278 = vmul.f32 %v3234, 0.00390625
        %v3279 = vmul.f32 %v3276, 0.00390625
        %v3280 = vmul.f32 %v3278, %v3278
        %v3281 = vsub.f32 %v3279, %v3280
        %v3282 = vmax.f32 %v3281, 0.0
        %v3283 = vadd.f32 %v3282, 1e-05
        %v3284 = vrsqrt.pop %v3283
        %v3285 = vmul.f32 %v3284, %v3283
        %v3286 = vmul.f32 %v3285, %v3284
        %v3287 = vmul.f32 0.5, %v3286
        %v3288 = vsub.f32 1.5, %v3287
        %v3289 = vmul.f32 %v3284, %v3288
        %vm3290 = vweird.f32 %v3283
        %vm3291 = vweird.f32 %v3284
        %vm3292 = vmor %vm3290, %vm3291
        %v3293 = vsel %vm3292, %v3284, %v3289
        %3295 = vset.pattern.permute.xlu0 0
        %3296 = vperm.xlu0 %3295, %v3278
        %v3297 = vpop.permute.xlu0 %3296
        %v3299 = vsub.f32 %v3194, %v3297
        %v3300 = vsub.f32 %v3195, %v3297
        %v3301 = vld [vmem:[%s83] sm:$0x3]
        %3303 = vset.pattern.permute.xlu0 0
        %3304 = vperm.xlu0 %3303, %v3293
        %v3305 = vpop.permute.xlu0 %3304
        %v3308 = vperm.slane %v3301, 0
        %v3309 = vperm.slane %v3301, 1
        %v3312 = vmul.f32 %v3305, %v3308
        %v3313 = vmul.f32 %v3305, %v3309
        %v3314 = vmul.f32 %v3299, %v3312
        %v3315 = vmul.f32 %v3300, %v3313
        %v3316 = vld [vmem:[%s85] sm:$0x3]
        %v3318 = vperm.slane %v3316, 0
        %v3319 = vperm.slane %v3316, 1
        %v3322 = vadd.f32 %v3314, %v3318
        %v3323 = vadd.f32 %v3315, %v3319
        %v3324 = vpack.c.bf16 %v3322, %v3322
        %v3325 = vpack.c.bf16 %v3323, %v3323
        %v3326 = vld [vmem:[%s87] sm:$0xf]
        %v3327 = vld [vmem:[%s87 + $0x4] sm:$0xf]
        %v3328 = vld [vmem:[%s87 + $0x8] sm:$0xf]
        %v3329 = vld [vmem:[%s87 + $0xc] sm:$0xf]
        %v3330 = vld [vmem:[%s87 + $0x10] sm:$0xf]
        %v3331 = vld [vmem:[%s87 + $0x14] sm:$0xf]
        %v3332 = vld [vmem:[%s87 + $0x18] sm:$0xf]
        %v3333 = vld [vmem:[%s87 + $0x1c] sm:$0xf]
        %v3334 = vld [vmem:[%s87 + $0x20] sm:$0xf]
        %v3335 = vld [vmem:[%s87 + $0x24] sm:$0xf]
        %v3336 = vld [vmem:[%s87 + $0x28] sm:$0xf]
        %v3337 = vld [vmem:[%s87 + $0x2c] sm:$0xf]
        %v3338 = vld [vmem:[%s87 + $0x30] sm:$0xf]
        %v3339 = vld [vmem:[%s87 + $0x34] sm:$0xf]
        %v3340 = vld [vmem:[%s87 + $0x38] sm:$0xf]
        %v3341 = vld [vmem:[%s87 + $0x3c] sm:$0xf]
        %v3342 = vld [vmem:[%s87 + $0x40] sm:$0xf]
        %v3343 = vld [vmem:[%s87 + $0x44] sm:$0xf]
        %v3344 = vld [vmem:[%s87 + $0x48] sm:$0xf]
        %v3345 = vld [vmem:[%s87 + $0x4c] sm:$0xf]
        %v3346 = vld [vmem:[%s87 + $0x50] sm:$0xf]
        %v3347 = vld [vmem:[%s87 + $0x54] sm:$0xf]
        %v3348 = vld [vmem:[%s87 + $0x58] sm:$0xf]
        %v3349 = vld [vmem:[%s87 + $0x5c] sm:$0xf]
        %v3350 = vld [vmem:[%s87 + $0x60] sm:$0xf]
        %v3351 = vld [vmem:[%s87 + $0x64] sm:$0xf]
        %v3352 = vld [vmem:[%s87 + $0x68] sm:$0xf]
        %v3353 = vld [vmem:[%s87 + $0x6c] sm:$0xf]
        %v3354 = vld [vmem:[%s87 + $0x70] sm:$0xf]
        %v3355 = vld [vmem:[%s87 + $0x74] sm:$0xf]
        %v3356 = vld [vmem:[%s87 + $0x78] sm:$0xf]
        %v3357 = vld [vmem:[%s87 + $0x7c] sm:$0xf]
        %v3358 = vld [vmem:[%s89] sm:$0x1]
        %v3360 = vperm.slane %v3358, 0
        %v3394 = vunpack.c.l.b16 %v3326
        %v3395 = vunpack.c.l.b16 %v3327
        %v3396 = vunpack.c.l.b16 %v3328
        %v3397 = vunpack.c.l.b16 %v3329
        %v3398 = vunpack.c.l.b16 %v3330
        %v3399 = vunpack.c.l.b16 %v3331
        %v3400 = vunpack.c.l.b16 %v3332
        %v3401 = vunpack.c.l.b16 %v3333
        %v3402 = vunpack.c.l.b16 %v3334
        %v3403 = vunpack.c.l.b16 %v3335
        %v3404 = vunpack.c.l.b16 %v3336
        %v3405 = vunpack.c.l.b16 %v3337
        %v3406 = vunpack.c.l.b16 %v3338
        %v3407 = vunpack.c.l.b16 %v3339
        %v3408 = vunpack.c.l.b16 %v3340
        %v3409 = vunpack.c.l.b16 %v3341
        %v3410 = vunpack.c.l.b16 %v3342
        %v3411 = vunpack.c.l.b16 %v3343
        %v3412 = vunpack.c.l.b16 %v3344
        %v3413 = vunpack.c.l.b16 %v3345
        %v3414 = vunpack.c.l.b16 %v3346
        %v3415 = vunpack.c.l.b16 %v3347
        %v3416 = vunpack.c.l.b16 %v3348
        %v3417 = vunpack.c.l.b16 %v3349
        %v3418 = vunpack.c.l.b16 %v3350
        %v3419 = vunpack.c.l.b16 %v3351
        %v3420 = vunpack.c.l.b16 %v3352
        %v3421 = vunpack.c.l.b16 %v3353
        %v3422 = vunpack.c.l.b16 %v3354
        %v3423 = vunpack.c.l.b16 %v3355
        %v3424 = vunpack.c.l.b16 %v3356
        %v3425 = vunpack.c.l.b16 %v3357
        %v3426 = vpack.c.b16 %v3395, %v3394
        %v3427 = vpack.c.b16 %v3397, %v3396
        %v3428 = vpack.c.b16 %v3399, %v3398
        %v3429 = vpack.c.b16 %v3401, %v3400
        %v3430 = vpack.c.b16 %v3403, %v3402
        %v3431 = vpack.c.b16 %v3405, %v3404
        %v3432 = vpack.c.b16 %v3407, %v3406
        %v3433 = vpack.c.b16 %v3409, %v3408
        %v3434 = vpack.c.b16 %v3411, %v3410
        %v3435 = vpack.c.b16 %v3413, %v3412
        %v3436 = vpack.c.b16 %v3415, %v3414
        %v3437 = vpack.c.b16 %v3417, %v3416
        %v3438 = vpack.c.b16 %v3419, %v3418
        %v3439 = vpack.c.b16 %v3421, %v3420
        %v3440 = vpack.c.b16 %v3423, %v3422
        %v3441 = vpack.c.b16 %v3425, %v3424
        %3458 = vmatpush.bf16.msra.mxu0 %v3433
        %3459 = vmatpush.bf16.msra.mxu0 %v3432
        %3460 = vmatpush.bf16.msra.mxu0 %v3431
        %3461 = vmatpush.bf16.msra.mxu0 %v3430
        %3462 = vmatpush.bf16.msra.mxu0 %v3429
        %3463 = vmatpush.bf16.msra.mxu0 %v3428
        %3464 = vmatpush.bf16.msra.mxu0 %v3427
        %3465 = vmatpush.bf16.msra.mxu0 %v3426
        %3466 = vmatmul.bf16.gmra.mxu0 %v3324
        %v3467 = vpop.f32.mrf.mxu0
        %v3468 = vadd.f32 %v3360, %v3467
        %v3469 = vpop.f32.mrf.mxu0
        %3470 = vdwg.mxu0
        %3471 = vmatpush.bf16.msra.mxu0 %v3441
        %3472 = vmatpush.bf16.msra.mxu0 %v3440
        %3473 = vmatpush.bf16.msra.mxu0 %v3439
        %3474 = vmatpush.bf16.msra.mxu0 %v3438
        %3475 = vmatpush.bf16.msra.mxu0 %v3437
        %3476 = vmatpush.bf16.msra.mxu0 %v3436
        %3477 = vmatpush.bf16.msra.mxu0 %v3435
        %3478 = vmatpush.bf16.msra.mxu0 %v3434
        %3479 = vmatmul.bf16.gmra.mxu0 %v3325
        %v3480 = vpop.f32.mrf.mxu0
        %v3481 = vadd.f32 %v3468, %v3480
        %v3482 = vpop.f32.mrf.mxu0
        %3483 = vdwg.mxu0
        %3484 = vst.msk [vmem:[%s1696] sm:$0xff] %vm1711, %v3481
        %p3485 = scmp.lt.s32.totalorder %s115, 1
        %s3486 = scalar_select %p3485, %s115, 1
        %s3487 = smul.addr %s3486, 8
        %s3488 = scalar_lea.vmem %s91, %s3487
        // Predicated region
        $region297: #{tpu_custom_call.1} parent=199 // pred_check
          %p3489 = pneg %p1083
        $region298: #{tpu_custom_call.1} parent=199 // pred_check_branch
          %3491 = sbr.rel (%p3489) target = $region300
        $region299: #{tpu_custom_call.1} parent=199 // pred_region
          _
        $region300: #{tpu_custom_call.1} parent=199 // pred_fallthru
          _
      $region200: #{tpu_custom_call.1} parent=5 // pred_fallthru
        _
      %p3492 = scmp.le.s32.totalorder 2, %s110
      // Predicated region
      $region301: #{tpu_custom_call.1} parent=5 // pred_check
        %p3493 = pneg %p3492
      $region302: #{tpu_custom_call.1} parent=5 // pred_check_branch
        %3495 = sbr.rel (%p3493) target = $region304
      $region303: #{tpu_custom_call.1} parent=5 // pred_region
        %s3496 = ssub.s32 %s110, 2
        // Predicated region
        $region305: #{tpu_custom_call.1} parent=303 // pred_check
          %p3497 = pneg %p1089
        $region306: #{tpu_custom_call.1} parent=303 // pred_check_branch
          %3499 = sbr.rel (%p3497) target = $region308
        $region307: #{tpu_custom_call.1} parent=303 // pred_region
          %p3500 = scmp.lt.s32.totalorder %s116, 1
          %s3501 = scalar_select %p3500, %s116, 1
          %s3502 = smul.addr %s3501, 8
          %s3503 = scalar_lea.vmem %s91, %s3502
        $region308: #{tpu_custom_call.1} parent=303 // pred_fallthru
          _
      $region304: #{tpu_custom_call.1} parent=5 // pred_fallthru
        _
    $region6: #{tpu_custom_call.1} parent=1 // loop_footer
      %s114 = sadd.s32 1, %s110
    $region7: #{tpu_custom_call.1} parent=1 // loop_footer_branch
      %109 = sbr.rel target = $region3
    $region8: #{tpu_custom_call.1} parent=1 // loop_exit
      _
    %3504 = vsyncpa [#allocation3], 1
    %s3505 = scalar_lea.sflag [#allocation3], 1
    %3506 = vsyncpa %s3505, 1
    %3507 = vsyncpa [#allocation5], 1
    %3508 = vsyncpa [#allocation8], 1
    %3509 = vsyncpa [#allocation11], 1
    %3510 = vsyncpa [#allocation14], 1
    %3511 = vsyncpa [#allocation17], 1
    %3512 = vsyncpa [#allocation20], 1
    %3513 = vsyncpa [#allocation23], 1
    %3514 = vsyncpa [#allocation26], 1
    %3515 = vsyncpa [#allocation29], 1
    %3516 = vsyncpa [#allocation32], 1
    %3517 = vsyncpa [#allocation35], 1
    %3518 = vsyncpa [#allocation38], 1

</llo_original>
